<compile_context>
chip_gen: v7x
topology: tpu7x:2x2x1
jax: 0.10.0
libtpu: 0.0.40
codegen_flags: <defaults>
</compile_context>

<pallas_src>
import jax
import jax.numpy as jnp
from jax.experimental import pallas as pl
from jax.experimental.pallas import tpu as pltpu

MXU_INPUT_DTYPE = jnp.bfloat16   # flip to jnp.float32 for bit-parity with the f32 reference


def _mm(a, b):
    """MXU matmul, operands cast at the MXU boundary, f32 accumulation."""
    return jnp.dot(a.astype(MXU_INPUT_DTYPE), b.astype(MXU_INPUT_DTYPE),
                   preferred_element_type=jnp.float32)


def _vmem():
    return pl.BlockSpec(memory_space=pltpu.MemorySpace.VMEM)


# ----------------------------------------------------------------------------
# Single fused kernel: BiLSTM -> intra-attention -> sentence matching -> MLP head
# ----------------------------------------------------------------------------
def fused_nli_kernel(lengths_ref, emb_ref,
                     wih_ref, b_ref, whh_ref,
                     wy_w_ref, wy_b_ref, wh_w_ref, wh_b_ref, w_w_ref, w_b_ref,
                     fc1_w_ref, fc1_b_ref, fc2_w_ref, fc2_b_ref,
                     fc3_w_ref, fc3_b_ref, ln_g_ref, ln_b_ref,
                     out_ref):
    BB, T, E = emb_ref.shape                 # BB = 2B (premise ++ hypothesis on batch axis)
    D = whh_ref.shape[0]                     # 2H
    G = whh_ref.shape[1]                     # 8H  (fwd 4H | bwd 4H), gate order (i,f,o,g)
    H = D // 2
    H4 = 4 * H
    B = BB // 2

    # ========================= BiLSTM encoder =========================
    # Hoisted input projection: ONE (BB*T, E) x (E, 8H) MXU matmul covers both directions.
    x2d = emb_ref[...].reshape(BB * T, E)
    gx = (_mm(x2d, wih_ref[...]) + b_ref[...]).reshape(BB, T, G)

    # Block-diagonal recurrent weight -> ONE (BB, 2H) x (2H, 8H) MXU push per timestep
    # drives both directions.  Cast to the MXU dtype once, outside the unrolled loop.
    whh_bd = whh_ref[...].astype(MXU_INPUT_DTYPE)

    # pack_padded_sequence semantics: steps with t >= length are skipped (state frozen) and
    # their outputs are zero (pad_packed_sequence zero padding).
    valid = jax.lax.broadcasted_iota(jnp.int32, (BB, T), 1) < lengths_ref[...]   # (BB, T) bool

    def lstm_cell(pre, c):
        # gate order (i, f, o, g): one sigmoid over 3H lanes + one tanh over H lanes.
        s = jax.nn.sigmoid(pre[:, 0:3 * H])
        g = jnp.tanh(pre[:, 3 * H:4 * H])
        c_new = s[:, H:2 * H] * c + s[:, 0:H] * g
        h_new = s[:, 2 * H:3 * H] * jnp.tanh(c_new)
        return h_new, c_new

    zero_h = jnp.zeros((BB, H), jnp.float32)
    h_f, c_f, h_b, c_b = zero_h, zero_h, zero_h, zero_h
    ys_f = [None] * T
    ys_b = [None] * T
    # Fully-unrolled fused fwd/bwd recurrence (T is small & static); states stay in vregs,
    # no per-timestep masked stores.
    for t in range(T):
        tb = T - 1 - t
        h_cat = jnp.concatenate([h_f, h_b], axis=1)                 # (BB, 2H)
        gh = _mm(h_cat, whh_bd)                                     # (BB, 8H): single MXU push
        hf_new, cf_new = lstm_cell(gx[:, t, 0:H4] + gh[:, 0:H4], c_f)
        hb_new, cb_new = lstm_cell(gx[:, tb, H4:G] + gh[:, H4:G], c_b)
        m_f = valid[:, t:t + 1]
        m_b = valid[:, tb:tb + 1]
        h_f = jnp.where(m_f, hf_new, h_f)
        c_f = jnp.where(m_f, cf_new, c_f)
        h_b = jnp.where(m_b, hb_new, h_b)
        c_b = jnp.where(m_b, cb_new, c_b)
        ys_f[t] = jnp.where(m_f, h_f, 0.0)                          # zero at padded positions
        ys_b[tb] = jnp.where(m_b, h_b, 0.0)

    # One dense, lane-aligned assembly of the encoder output (stays VMEM/vreg resident).
    y = jnp.stack([jnp.concatenate([ys_f[t], ys_b[t]], axis=1) for t in range(T)],
                  axis=1)                                            # (BB, T, 2H)

    # ========================= Intra-attention (whole stacked batch) =========================
    wy_part = (_mm(y.reshape(BB * T, D), wy_w_ref[...]) + wy_b_ref[...]).reshape(BB, T, D)
    mean_vec = jnp.mean(y, axis=1)                                   # (BB, D); /T incl. zero pad rows (torch)
    wh_part = (_mm(mean_vec, wh_w_ref[...]) + wh_b_ref[...])[:, None, :]
    m_att = jnp.tanh(wy_part + wh_part)                              # (BB, T, D)

    # Scores as a lane-dense (BB, T) map; softmax over T on the lane axis.
    scores = jnp.sum(m_att * w_w_ref[...], axis=-1) + w_b_ref[...]   # (BB, T)
    scores = scores - jnp.max(scores, axis=-1, keepdims=True)
    e = jnp.exp(scores)
    alpha = e / jnp.sum(e, axis=-1, keepdims=True)
    # Weighted sentence vector = M^T @ alpha (the module pools M, the tanh projection).
    weighted = jnp.sum(alpha[:, :, None] * m_att, axis=1)            # (BB, D)

    # ========================= Sentence matching + classifier head =========================
    p_vec = weighted[0:B, :]                                         # premise half
    h_vec = weighted[B:BB, :]                                        # hypothesis half
    feats = jnp.concatenate([p_vec, p_vec * h_vec, p_vec - h_vec, h_vec], axis=1)   # (B, 8H)

    ln_g = ln_g_ref[...]
    ln_b = ln_b_ref[...]

    def layernorm(h):
        mu = jnp.mean(h, axis=-1, keepdims=True)
        var = jnp.mean(jnp.square(h - mu), axis=-1, keepdims=True)
        return (h - mu) * jax.lax.rsqrt(var + 1e-5) * ln_g + ln_b

    h1 = layernorm(jnp.tanh(_mm(feats, fc1_w_ref[...]) + fc1_b_ref[...]))   # dropout: identity (eval)
    h2 = layernorm(jnp.tanh(_mm(h1, fc2_w_ref[...]) + fc2_b_ref[...]))
    out_ref[...] = _mm(h2, fc3_w_ref[...]) + fc3_b_ref[...]


# ----------------------------------------------------------------------------
# Full forward (embedding gather + the single fused kernel)
# ----------------------------------------------------------------------------
def inner_attention_forward(prem_batch, hyp_batch, prem_length, hyp_length, params):
    B, T = prem_batch.shape
    # Premise + hypothesis stacked on the batch axis -> everything runs in ONE fused kernel.
    tokens = jnp.concatenate([prem_batch, hyp_batch], axis=0)                  # (2B, T)
    lengths = jnp.concatenate([prem_length, hyp_length], axis=0)
    lengths = lengths.astype(jnp.int32).reshape(2 * B, 1)
    # TODO(synk): fold the embedding gather into the kernel (scalar-prefetch token ids +
    # per-row DMA gather) once the vocab no longer fits VMEM; a single XLA gather is fine here.
    emb = jnp.take(params['embedding'], tokens, axis=0)                        # (2B, T, E)

    # TODO(synk): torch pads each encoder output only to that batch's max length; here the
    # full T is used — identical whenever max(length) == T (as in the example below).
    # TODO(synk): for realistic NLI sizes (B~64+, T~40+, E/H~300) add a batch-blocked grid
    # over the 2B axis (marked "parallel" for the v7x 2-TensorCore split) instead of the
    # gridless whole-batch VMEM residency used at these small shapes.
    return pl.pallas_call(
        fused_nli_kernel,
        out_shape=jax.ShapeDtypeStruct((B, 3), jnp.float32),
        in_specs=[_vmem()] * 19,
        out_specs=_vmem(),
        compiler_params=pltpu.CompilerParams(vmem_limit_bytes=48 * 1024 * 1024),
    )(lengths, emb,
      params['wih_cat'], params['b_cat'], params['whh_bd'],
      params['wy_w'], params['wy_b'], params['wh_w'], params['wh_b'],
      params['w_w'], params['w_b'],
      params['fc1_w'], params['fc1_b'], params['fc2_w'], params['fc2_b'],
      params['fc3_w'], params['fc3_b'], params['ln_g'], params['ln_b'])


# ----------------------------------------------------------------------------
# Parameter init (PyTorch-equivalent shapes, stored pre-transposed) + one-time packing
# ----------------------------------------------------------------------------
def init_params(key, vocab, E, H):
    ks = jax.random.split(key, 20)
    u = lambda k, shape, s: jax.random.uniform(k, shape, jnp.float32, -s, s)

    def xavier(k, fan_in, fan_out):
        a = (6.0 / (fan_in + fan_out)) ** 0.5
        return jax.random.uniform(k, (fan_in, fan_out), jnp.float32, -a, a)

    ls = 1.0 / (H ** 0.5)
    return dict(
        embedding=jax.random.normal(ks[0], (vocab, E), jnp.float32),
        # BiLSTM (num_layers=1), PyTorch gate order (i,f,g,o); bias = b_ih + b_hh.
        # Stored transposed: wih (E,4H), whh (H,4H).
        wih_f=u(ks[1], (E, 4 * H), ls),
        whh_f=u(ks[2], (H, 4 * H), ls),
        b_f=u(ks[3], (1, 4 * H), ls) + u(ks[4], (1, 4 * H), ls),
        wih_b=u(ks[5], (E, 4 * H), ls),
        whh_b=u(ks[6], (H, 4 * H), ls),
        b_b=u(ks[7], (1, 4 * H), ls) + u(ks[8], (1, 4 * H), ls),
        # attention linears (transposed: (in, out)); w_w kept as a (1, 2H) row.
        wy_w=xavier(ks[9], 2 * H, 2 * H),
        wy_b=u(ks[10], (1, 2 * H), 1.0 / (2 * H) ** 0.5),
        wh_w=xavier(ks[11], 2 * H, 2 * H),
        wh_b=u(ks[12], (1, 2 * H), 1.0 / (2 * H) ** 0.5),
        w_w=u(ks[13], (1, 2 * H), (6.0 / (2 * H + 1)) ** 0.5),
        w_b=u(ks[14], (1, 1), 1.0 / (2 * H) ** 0.5),
        # classifier head (transposed: (in, out))
        fc1_w=xavier(ks[15], 8 * H, 300),
        fc1_b=u(ks[16], (1, 300), 1.0 / (8 * H) ** 0.5),
        fc2_w=xavier(ks[17], 300, 300),
        fc2_b=u(ks[18], (1, 300), 1.0 / 300 ** 0.5),
        fc3_w=xavier(ks[19], 300, 3),
        fc3_b=jnp.zeros((1, 3), jnp.float32),
        # LayerNorm(300), shared between the two applications
        ln_g=jnp.ones((1, 300), jnp.float32),
        ln_b=jnp.zeros((1, 300), jnp.float32),
    )


def pack_params(p, H):
    """One-time offline packing: gate columns (i,f,g,o)->(i,f,o,g), fwd/bwd input projection
    concatenated to a single (E, 8H) matrix, recurrent weights packed block-diagonally so both
    directions share one MXU push per timestep."""
    def perm(w):   # (..., 4H): (i,f,g,o) -> (i,f,o,g)
        return jnp.concatenate([w[..., 0:2 * H], w[..., 3 * H:4 * H], w[..., 2 * H:3 * H]], axis=-1)

    z = jnp.zeros((H, 4 * H), jnp.float32)
    packed = dict(p)
    packed['wih_cat'] = jnp.concatenate([perm(p['wih_f']), perm(p['wih_b'])], axis=1)   # (E, 8H)
    packed['b_cat'] = jnp.concatenate([perm(p['b_f']), perm(p['b_b'])], axis=1)         # (1, 8H)
    packed['whh_bd'] = jnp.concatenate(
        [jnp.concatenate([perm(p['whh_f']), z], axis=1),
         jnp.concatenate([z, perm(p['whh_b'])], axis=1)], axis=0)                       # (2H, 8H)
    for k in ('wih_f', 'wih_b', 'whh_f', 'whh_b', 'b_f', 'b_b'):
        del packed[k]
    return packed


if __name__ == "__main__":
    B, T, E, H, VOCAB = 2, 8, 32, 32, 50
    key = jax.random.PRNGKey(0)
    pkey, dk1, dk2 = jax.random.split(key, 3)

    params = pack_params(init_params(pkey, VOCAB, E, H), H)

    prem_batch = jax.random.randint(dk1, (B, T), 0, VOCAB)
    hyp_batch = jax.random.randint(dk2, (B, T), 0, VOCAB)
    # Variable lengths exercise the pack_padded_sequence masking (batch max == T).
    prem_length = jnp.array([T, T - 3], dtype=jnp.int32)
    hyp_length = jnp.array([T - 1, T], dtype=jnp.int32)

    fwd = jax.jit(inner_attention_forward)
    out = fwd(prem_batch, hyp_batch, prem_length, hyp_length, params)
    jax.block_until_ready(out)
    assert out.shape == (B, 3) and out.dtype == jnp.float32
    print("KERNEL_OK")
</pallas_src>

<mosaic_0001>
module attributes {stable_mosaic.version = 11 : i64} {
  func.func @fused_nli_kernel(%arg0: memref<4x1xi32, #tpu.memory_space<vmem>>, %arg1: memref<4x8x32xf32, #tpu.memory_space<vmem>>, %arg2: memref<32x256xf32, #tpu.memory_space<vmem>>, %arg3: memref<1x256xf32, #tpu.memory_space<vmem>>, %arg4: memref<64x256xf32, #tpu.memory_space<vmem>>, %arg5: memref<64x64xf32, #tpu.memory_space<vmem>>, %arg6: memref<1x64xf32, #tpu.memory_space<vmem>>, %arg7: memref<64x64xf32, #tpu.memory_space<vmem>>, %arg8: memref<1x64xf32, #tpu.memory_space<vmem>>, %arg9: memref<1x64xf32, #tpu.memory_space<vmem>>, %arg10: memref<1x1xf32, #tpu.memory_space<vmem>>, %arg11: memref<256x300xf32, #tpu.memory_space<vmem>>, %arg12: memref<1x300xf32, #tpu.memory_space<vmem>>, %arg13: memref<300x300xf32, #tpu.memory_space<vmem>>, %arg14: memref<1x300xf32, #tpu.memory_space<vmem>>, %arg15: memref<300x3xf32, #tpu.memory_space<vmem>>, %arg16: memref<1x3xf32, #tpu.memory_space<vmem>>, %arg17: memref<1x300xf32, #tpu.memory_space<vmem>>, %arg18: memref<1x300xf32, #tpu.memory_space<vmem>>, %arg19: memref<2x3xf32, #tpu.memory_space<vmem>>) attributes {dimension_semantics = [], scalar_prefetch = 0 : i64, scratch_operands = 0 : i64, tpu.core_type = #tpu.core_type<tc>} {
    %c0 = arith.constant 0 : index
    %c0_0 = arith.constant 0 : index
    %c0_1 = arith.constant 0 : index
    %0 = vector.load %arg1[%c0, %c0_0, %c0_1] : memref<4x8x32xf32, #tpu.memory_space<vmem>>, vector<4x8x32xf32>
    %1 = vector.shape_cast %0 : vector<4x8x32xf32> to vector<32x32xf32>
    %c0_2 = arith.constant 0 : index
    %c0_3 = arith.constant 0 : index
    %2 = vector.load %arg2[%c0_2, %c0_3] : memref<32x256xf32, #tpu.memory_space<vmem>>, vector<32x256xf32>
    %3 = arith.truncf %1 : vector<32x32xf32> to vector<32x32xbf16>
    %4 = arith.truncf %2 : vector<32x256xf32> to vector<32x256xbf16>
    %cst = arith.constant dense<0.000000e+00> : vector<32x256xf32>
    %5 = tpu.matmul %3, %4, %cst {dimension_numbers = #tpu.dot_dimension_numbers<[1], [0], [0], [1], [0, 0, 1, 1], [], []>} : vector<32x32xbf16>, vector<32x256xbf16>, vector<32x256xf32> -> vector<32x256xf32>
    %c0_4 = arith.constant 0 : index
    %c0_5 = arith.constant 0 : index
    %6 = vector.load %arg3[%c0_4, %c0_5] : memref<1x256xf32, #tpu.memory_space<vmem>>, vector<1x256xf32>
    %7 = vector.broadcast %6 : vector<1x256xf32> to vector<32x256xf32>
    %8 = arith.addf %5, %7 : vector<32x256xf32>
    %9 = vector.shape_cast %8 : vector<32x256xf32> to vector<4x8x256xf32>
    %c0_6 = arith.constant 0 : index
    %c0_7 = arith.constant 0 : index
    %10 = vector.load %arg4[%c0_6, %c0_7] : memref<64x256xf32, #tpu.memory_space<vmem>>, vector<64x256xf32>
    %11 = arith.truncf %10 : vector<64x256xf32> to vector<64x256xbf16>
    %12 = tpu.iota {dimensions = array<i32: 1>} : vector<4x8xi32>
    %c0_8 = arith.constant 0 : index
    %c0_9 = arith.constant 0 : index
    %13 = vector.load %arg0[%c0_8, %c0_9] : memref<4x1xi32, #tpu.memory_space<vmem>>, vector<4x1xi32>
    %14 = vector.broadcast %13 : vector<4x1xi32> to vector<4x8xi32>
    %15 = arith.cmpi slt, %12, %14 : vector<4x8xi32>
    %cst_10 = arith.constant 0.000000e+00 : f32
    %16 = vector.broadcast %cst_10 : f32 to vector<4x32xf32>
    %17 = tpu.concatenate %16, %16 in 1 : vector<4x32xf32>, vector<4x32xf32> -> vector<4x64xf32>
    %18 = arith.truncf %17 : vector<4x64xf32> to vector<4x64xbf16>
    %cst_11 = arith.constant dense<0.000000e+00> : vector<4x256xf32>
    %19 = tpu.matmul %18, %11, %cst_11 {dimension_numbers = #tpu.dot_dimension_numbers<[1], [0], [0], [1], [0, 0, 1, 1], [], []>} : vector<4x64xbf16>, vector<64x256xbf16>, vector<4x256xf32> -> vector<4x256xf32>
    %20 = vector.extract_strided_slice %9 {offsets = [0, 0, 0], sizes = [4, 1, 128], strides = [1, 1, 1]} : vector<4x8x256xf32> to vector<4x1x128xf32>
    %21 = vector.shape_cast %20 : vector<4x1x128xf32> to vector<4x128xf32>
    %22 = vector.extract_strided_slice %19 {offsets = [0, 0], sizes = [4, 128], strides = [1, 1]} : vector<4x256xf32> to vector<4x128xf32>
    %23 = arith.addf %21, %22 : vector<4x128xf32>
    %24 = vector.extract_strided_slice %23 {offsets = [0, 0], sizes = [4, 96], strides = [1, 1]} : vector<4x128xf32> to vector<4x96xf32>
    %25 = arith.negf %24 : vector<4x96xf32>
    %26 = math.exp %25 : vector<4x96xf32>
    %cst_12 = arith.constant 1.000000e+00 : f32
    %27 = vector.broadcast %cst_12 : f32 to vector<4x96xf32>
    %28 = arith.addf %27, %26 : vector<4x96xf32>
    %29 = arith.divf %27, %28 : vector<4x96xf32>
    %30 = vector.extract_strided_slice %23 {offsets = [0, 96], sizes = [4, 32], strides = [1, 1]} : vector<4x128xf32> to vector<4x32xf32>
    %31 = math.tanh %30 : vector<4x32xf32>
    %32 = vector.extract_strided_slice %29 {offsets = [0, 32], sizes = [4, 32], strides = [1, 1]} : vector<4x96xf32> to vector<4x32xf32>
    %33 = arith.mulf %32, %16 : vector<4x32xf32>
    %34 = vector.extract_strided_slice %29 {offsets = [0, 0], sizes = [4, 32], strides = [1, 1]} : vector<4x96xf32> to vector<4x32xf32>
    %35 = arith.mulf %34, %31 : vector<4x32xf32>
    %36 = arith.addf %33, %35 : vector<4x32xf32>
    %37 = vector.extract_strided_slice %29 {offsets = [0, 64], sizes = [4, 32], strides = [1, 1]} : vector<4x96xf32> to vector<4x32xf32>
    %38 = math.tanh %36 : vector<4x32xf32>
    %39 = arith.mulf %37, %38 : vector<4x32xf32>
    %40 = vector.extract_strided_slice %9 {offsets = [0, 7, 128], sizes = [4, 1, 128], strides = [1, 1, 1]} : vector<4x8x256xf32> to vector<4x1x128xf32>
    %41 = vector.shape_cast %40 : vector<4x1x128xf32> to vector<4x128xf32>
    %42 = vector.extract_strided_slice %19 {offsets = [0, 128], sizes = [4, 128], strides = [1, 1]} : vector<4x256xf32> to vector<4x128xf32>
    %43 = arith.addf %41, %42 : vector<4x128xf32>
    %44 = vector.extract_strided_slice %43 {offsets = [0, 0], sizes = [4, 96], strides = [1, 1]} : vector<4x128xf32> to vector<4x96xf32>
    %45 = arith.negf %44 : vector<4x96xf32>
    %46 = math.exp %45 : vector<4x96xf32>
    %cst_13 = arith.constant 1.000000e+00 : f32
    %47 = vector.broadcast %cst_13 : f32 to vector<4x96xf32>
    %48 = arith.addf %47, %46 : vector<4x96xf32>
    %49 = arith.divf %47, %48 : vector<4x96xf32>
    %50 = vector.extract_strided_slice %43 {offsets = [0, 96], sizes = [4, 32], strides = [1, 1]} : vector<4x128xf32> to vector<4x32xf32>
    %51 = math.tanh %50 : vector<4x32xf32>
    %52 = vector.extract_strided_slice %49 {offsets = [0, 32], sizes = [4, 32], strides = [1, 1]} : vector<4x96xf32> to vector<4x32xf32>
    %53 = arith.mulf %52, %16 : vector<4x32xf32>
    %54 = vector.extract_strided_slice %49 {offsets = [0, 0], sizes = [4, 32], strides = [1, 1]} : vector<4x96xf32> to vector<4x32xf32>
    %55 = arith.mulf %54, %51 : vector<4x32xf32>
    %56 = arith.addf %53, %55 : vector<4x32xf32>
    %57 = vector.extract_strided_slice %49 {offsets = [0, 64], sizes = [4, 32], strides = [1, 1]} : vector<4x96xf32> to vector<4x32xf32>
    %58 = math.tanh %56 : vector<4x32xf32>
    %59 = arith.mulf %57, %58 : vector<4x32xf32>
    %60 = vector.extract_strided_slice %15 {offsets = [0, 0], sizes = [4, 1], strides = [1, 1]} : vector<4x8xi1> to vector<4x1xi1>
    %61 = vector.extract_strided_slice %15 {offsets = [0, 7], sizes = [4, 1], strides = [1, 1]} : vector<4x8xi1> to vector<4x1xi1>
    %62 = vector.shape_cast %60 : vector<4x1xi1> to vector<4x1xi1>
    %63 = vector.broadcast %62 : vector<4x1xi1> to vector<4x32xi1>
    %64 = arith.select %63, %39, %16 : vector<4x32xi1>, vector<4x32xf32>
    %65 = vector.shape_cast %60 : vector<4x1xi1> to vector<4x1xi1>
    %66 = vector.broadcast %65 : vector<4x1xi1> to vector<4x32xi1>
    %67 = arith.select %66, %36, %16 : vector<4x32xi1>, vector<4x32xf32>
    %68 = vector.shape_cast %61 : vector<4x1xi1> to vector<4x1xi1>
    %69 = vector.broadcast %68 : vector<4x1xi1> to vector<4x32xi1>
    %70 = arith.select %69, %59, %16 : vector<4x32xi1>, vector<4x32xf32>
    %71 = vector.shape_cast %61 : vector<4x1xi1> to vector<4x1xi1>
    %72 = vector.broadcast %71 : vector<4x1xi1> to vector<4x32xi1>
    %73 = arith.select %72, %56, %16 : vector<4x32xi1>, vector<4x32xf32>
    %cst_14 = arith.constant 0.000000e+00 : f32
    %74 = vector.shape_cast %60 : vector<4x1xi1> to vector<4x1xi1>
    %75 = vector.broadcast %74 : vector<4x1xi1> to vector<4x32xi1>
    %76 = vector.broadcast %cst_14 : f32 to vector<4x32xf32>
    %77 = arith.select %75, %64, %76 : vector<4x32xi1>, vector<4x32xf32>
    %cst_15 = arith.constant 0.000000e+00 : f32
    %78 = vector.shape_cast %61 : vector<4x1xi1> to vector<4x1xi1>
    %79 = vector.broadcast %78 : vector<4x1xi1> to vector<4x32xi1>
    %80 = vector.broadcast %cst_15 : f32 to vector<4x32xf32>
    %81 = arith.select %79, %70, %80 : vector<4x32xi1>, vector<4x32xf32>
    %82 = tpu.concatenate %64, %70 in 1 : vector<4x32xf32>, vector<4x32xf32> -> vector<4x64xf32>
    %83 = arith.truncf %82 : vector<4x64xf32> to vector<4x64xbf16>
    %cst_16 = arith.constant dense<0.000000e+00> : vector<4x256xf32>
    %84 = tpu.matmul %83, %11, %cst_16 {dimension_numbers = #tpu.dot_dimension_numbers<[1], [0], [0], [1], [0, 0, 1, 1], [], []>} : vector<4x64xbf16>, vector<64x256xbf16>, vector<4x256xf32> -> vector<4x256xf32>
    %85 = vector.extract_strided_slice %9 {offsets = [0, 1, 0], sizes = [4, 1, 128], strides = [1, 1, 1]} : vector<4x8x256xf32> to vector<4x1x128xf32>
    %86 = vector.shape_cast %85 : vector<4x1x128xf32> to vector<4x128xf32>
    %87 = vector.extract_strided_slice %84 {offsets = [0, 0], sizes = [4, 128], strides = [1, 1]} : vector<4x256xf32> to vector<4x128xf32>
    %88 = arith.addf %86, %87 : vector<4x128xf32>
    %89 = vector.extract_strided_slice %88 {offsets = [0, 0], sizes = [4, 96], strides = [1, 1]} : vector<4x128xf32> to vector<4x96xf32>
    %90 = arith.negf %89 : vector<4x96xf32>
    %91 = math.exp %90 : vector<4x96xf32>
    %cst_17 = arith.constant 1.000000e+00 : f32
    %92 = vector.broadcast %cst_17 : f32 to vector<4x96xf32>
    %93 = arith.addf %92, %91 : vector<4x96xf32>
    %94 = arith.divf %92, %93 : vector<4x96xf32>
    %95 = vector.extract_strided_slice %88 {offsets = [0, 96], sizes = [4, 32], strides = [1, 1]} : vector<4x128xf32> to vector<4x32xf32>
    %96 = math.tanh %95 : vector<4x32xf32>
    %97 = vector.extract_strided_slice %94 {offsets = [0, 32], sizes = [4, 32], strides = [1, 1]} : vector<4x96xf32> to vector<4x32xf32>
    %98 = arith.mulf %97, %67 : vector<4x32xf32>
    %99 = vector.extract_strided_slice %94 {offsets = [0, 0], sizes = [4, 32], strides = [1, 1]} : vector<4x96xf32> to vector<4x32xf32>
    %100 = arith.mulf %99, %96 : vector<4x32xf32>
    %101 = arith.addf %98, %100 : vector<4x32xf32>
    %102 = vector.extract_strided_slice %94 {offsets = [0, 64], sizes = [4, 32], strides = [1, 1]} : vector<4x96xf32> to vector<4x32xf32>
    %103 = math.tanh %101 : vector<4x32xf32>
    %104 = arith.mulf %102, %103 : vector<4x32xf32>
    %105 = vector.extract_strided_slice %9 {offsets = [0, 6, 128], sizes = [4, 1, 128], strides = [1, 1, 1]} : vector<4x8x256xf32> to vector<4x1x128xf32>
    %106 = vector.shape_cast %105 : vector<4x1x128xf32> to vector<4x128xf32>
    %107 = vector.extract_strided_slice %84 {offsets = [0, 128], sizes = [4, 128], strides = [1, 1]} : vector<4x256xf32> to vector<4x128xf32>
    %108 = arith.addf %106, %107 : vector<4x128xf32>
    %109 = vector.extract_strided_slice %108 {offsets = [0, 0], sizes = [4, 96], strides = [1, 1]} : vector<4x128xf32> to vector<4x96xf32>
    %110 = arith.negf %109 : vector<4x96xf32>
    %111 = math.exp %110 : vector<4x96xf32>
    %cst_18 = arith.constant 1.000000e+00 : f32
    %112 = vector.broadcast %cst_18 : f32 to vector<4x96xf32>
    %113 = arith.addf %112, %111 : vector<4x96xf32>
    %114 = arith.divf %112, %113 : vector<4x96xf32>
    %115 = vector.extract_strided_slice %108 {offsets = [0, 96], sizes = [4, 32], strides = [1, 1]} : vector<4x128xf32> to vector<4x32xf32>
    %116 = math.tanh %115 : vector<4x32xf32>
    %117 = vector.extract_strided_slice %114 {offsets = [0, 32], sizes = [4, 32], strides = [1, 1]} : vector<4x96xf32> to vector<4x32xf32>
    %118 = arith.mulf %117, %73 : vector<4x32xf32>
    %119 = vector.extract_strided_slice %114 {offsets = [0, 0], sizes = [4, 32], strides = [1, 1]} : vector<4x96xf32> to vector<4x32xf32>
    %120 = arith.mulf %119, %116 : vector<4x32xf32>
    %121 = arith.addf %118, %120 : vector<4x32xf32>
    %122 = vector.extract_strided_slice %114 {offsets = [0, 64], sizes = [4, 32], strides = [1, 1]} : vector<4x96xf32> to vector<4x32xf32>
    %123 = math.tanh %121 : vector<4x32xf32>
    %124 = arith.mulf %122, %123 : vector<4x32xf32>
    %125 = vector.extract_strided_slice %15 {offsets = [0, 1], sizes = [4, 1], strides = [1, 1]} : vector<4x8xi1> to vector<4x1xi1>
    %126 = vector.extract_strided_slice %15 {offsets = [0, 6], sizes = [4, 1], strides = [1, 1]} : vector<4x8xi1> to vector<4x1xi1>
    %127 = vector.shape_cast %125 : vector<4x1xi1> to vector<4x1xi1>
    %128 = vector.broadcast %127 : vector<4x1xi1> to vector<4x32xi1>
    %129 = arith.select %128, %104, %64 : vector<4x32xi1>, vector<4x32xf32>
    %130 = vector.shape_cast %125 : vector<4x1xi1> to vector<4x1xi1>
    %131 = vector.broadcast %130 : vector<4x1xi1> to vector<4x32xi1>
    %132 = arith.select %131, %101, %67 : vector<4x32xi1>, vector<4x32xf32>
    %133 = vector.shape_cast %126 : vector<4x1xi1> to vector<4x1xi1>
    %134 = vector.broadcast %133 : vector<4x1xi1> to vector<4x32xi1>
    %135 = arith.select %134, %124, %70 : vector<4x32xi1>, vector<4x32xf32>
    %136 = vector.shape_cast %126 : vector<4x1xi1> to vector<4x1xi1>
    %137 = vector.broadcast %136 : vector<4x1xi1> to vector<4x32xi1>
    %138 = arith.select %137, %121, %73 : vector<4x32xi1>, vector<4x32xf32>
    %cst_19 = arith.constant 0.000000e+00 : f32
    %139 = vector.shape_cast %125 : vector<4x1xi1> to vector<4x1xi1>
    %140 = vector.broadcast %139 : vector<4x1xi1> to vector<4x32xi1>
    %141 = vector.broadcast %cst_19 : f32 to vector<4x32xf32>
    %142 = arith.select %140, %129, %141 : vector<4x32xi1>, vector<4x32xf32>
    %cst_20 = arith.constant 0.000000e+00 : f32
    %143 = vector.shape_cast %126 : vector<4x1xi1> to vector<4x1xi1>
    %144 = vector.broadcast %143 : vector<4x1xi1> to vector<4x32xi1>
    %145 = vector.broadcast %cst_20 : f32 to vector<4x32xf32>
    %146 = arith.select %144, %135, %145 : vector<4x32xi1>, vector<4x32xf32>
    %147 = tpu.concatenate %129, %135 in 1 : vector<4x32xf32>, vector<4x32xf32> -> vector<4x64xf32>
    %148 = arith.truncf %147 : vector<4x64xf32> to vector<4x64xbf16>
    %cst_21 = arith.constant dense<0.000000e+00> : vector<4x256xf32>
    %149 = tpu.matmul %148, %11, %cst_21 {dimension_numbers = #tpu.dot_dimension_numbers<[1], [0], [0], [1], [0, 0, 1, 1], [], []>} : vector<4x64xbf16>, vector<64x256xbf16>, vector<4x256xf32> -> vector<4x256xf32>
    %150 = vector.extract_strided_slice %9 {offsets = [0, 2, 0], sizes = [4, 1, 128], strides = [1, 1, 1]} : vector<4x8x256xf32> to vector<4x1x128xf32>
    %151 = vector.shape_cast %150 : vector<4x1x128xf32> to vector<4x128xf32>
    %152 = vector.extract_strided_slice %149 {offsets = [0, 0], sizes = [4, 128], strides = [1, 1]} : vector<4x256xf32> to vector<4x128xf32>
    %153 = arith.addf %151, %152 : vector<4x128xf32>
    %154 = vector.extract_strided_slice %153 {offsets = [0, 0], sizes = [4, 96], strides = [1, 1]} : vector<4x128xf32> to vector<4x96xf32>
    %155 = arith.negf %154 : vector<4x96xf32>
    %156 = math.exp %155 : vector<4x96xf32>
    %cst_22 = arith.constant 1.000000e+00 : f32
    %157 = vector.broadcast %cst_22 : f32 to vector<4x96xf32>
    %158 = arith.addf %157, %156 : vector<4x96xf32>
    %159 = arith.divf %157, %158 : vector<4x96xf32>
    %160 = vector.extract_strided_slice %153 {offsets = [0, 96], sizes = [4, 32], strides = [1, 1]} : vector<4x128xf32> to vector<4x32xf32>
    %161 = math.tanh %160 : vector<4x32xf32>
    %162 = vector.extract_strided_slice %159 {offsets = [0, 32], sizes = [4, 32], strides = [1, 1]} : vector<4x96xf32> to vector<4x32xf32>
    %163 = arith.mulf %162, %132 : vector<4x32xf32>
    %164 = vector.extract_strided_slice %159 {offsets = [0, 0], sizes = [4, 32], strides = [1, 1]} : vector<4x96xf32> to vector<4x32xf32>
    %165 = arith.mulf %164, %161 : vector<4x32xf32>
    %166 = arith.addf %163, %165 : vector<4x32xf32>
    %167 = vector.extract_strided_slice %159 {offsets = [0, 64], sizes = [4, 32], strides = [1, 1]} : vector<4x96xf32> to vector<4x32xf32>
    %168 = math.tanh %166 : vector<4x32xf32>
    %169 = arith.mulf %167, %168 : vector<4x32xf32>
    %170 = vector.extract_strided_slice %9 {offsets = [0, 5, 128], sizes = [4, 1, 128], strides = [1, 1, 1]} : vector<4x8x256xf32> to vector<4x1x128xf32>
    %171 = vector.shape_cast %170 : vector<4x1x128xf32> to vector<4x128xf32>
    %172 = vector.extract_strided_slice %149 {offsets = [0, 128], sizes = [4, 128], strides = [1, 1]} : vector<4x256xf32> to vector<4x128xf32>
    %173 = arith.addf %171, %172 : vector<4x128xf32>
    %174 = vector.extract_strided_slice %173 {offsets = [0, 0], sizes = [4, 96], strides = [1, 1]} : vector<4x128xf32> to vector<4x96xf32>
    %175 = arith.negf %174 : vector<4x96xf32>
    %176 = math.exp %175 : vector<4x96xf32>
    %cst_23 = arith.constant 1.000000e+00 : f32
    %177 = vector.broadcast %cst_23 : f32 to vector<4x96xf32>
    %178 = arith.addf %177, %176 : vector<4x96xf32>
    %179 = arith.divf %177, %178 : vector<4x96xf32>
    %180 = vector.extract_strided_slice %173 {offsets = [0, 96], sizes = [4, 32], strides = [1, 1]} : vector<4x128xf32> to vector<4x32xf32>
    %181 = math.tanh %180 : vector<4x32xf32>
    %182 = vector.extract_strided_slice %179 {offsets = [0, 32], sizes = [4, 32], strides = [1, 1]} : vector<4x96xf32> to vector<4x32xf32>
    %183 = arith.mulf %182, %138 : vector<4x32xf32>
    %184 = vector.extract_strided_slice %179 {offsets = [0, 0], sizes = [4, 32], strides = [1, 1]} : vector<4x96xf32> to vector<4x32xf32>
    %185 = arith.mulf %184, %181 : vector<4x32xf32>
    %186 = arith.addf %183, %185 : vector<4x32xf32>
    %187 = vector.extract_strided_slice %179 {offsets = [0, 64], sizes = [4, 32], strides = [1, 1]} : vector<4x96xf32> to vector<4x32xf32>
    %188 = math.tanh %186 : vector<4x32xf32>
    %189 = arith.mulf %187, %188 : vector<4x32xf32>
    %190 = vector.extract_strided_slice %15 {offsets = [0, 2], sizes = [4, 1], strides = [1, 1]} : vector<4x8xi1> to vector<4x1xi1>
    %191 = vector.extract_strided_slice %15 {offsets = [0, 5], sizes = [4, 1], strides = [1, 1]} : vector<4x8xi1> to vector<4x1xi1>
    %192 = vector.shape_cast %190 : vector<4x1xi1> to vector<4x1xi1>
    %193 = vector.broadcast %192 : vector<4x1xi1> to vector<4x32xi1>
    %194 = arith.select %193, %169, %129 : vector<4x32xi1>, vector<4x32xf32>
    %195 = vector.shape_cast %190 : vector<4x1xi1> to vector<4x1xi1>
    %196 = vector.broadcast %195 : vector<4x1xi1> to vector<4x32xi1>
    %197 = arith.select %196, %166, %132 : vector<4x32xi1>, vector<4x32xf32>
    %198 = vector.shape_cast %191 : vector<4x1xi1> to vector<4x1xi1>
    %199 = vector.broadcast %198 : vector<4x1xi1> to vector<4x32xi1>
    %200 = arith.select %199, %189, %135 : vector<4x32xi1>, vector<4x32xf32>
    %201 = vector.shape_cast %191 : vector<4x1xi1> to vector<4x1xi1>
    %202 = vector.broadcast %201 : vector<4x1xi1> to vector<4x32xi1>
    %203 = arith.select %202, %186, %138 : vector<4x32xi1>, vector<4x32xf32>
    %cst_24 = arith.constant 0.000000e+00 : f32
    %204 = vector.shape_cast %190 : vector<4x1xi1> to vector<4x1xi1>
    %205 = vector.broadcast %204 : vector<4x1xi1> to vector<4x32xi1>
    %206 = vector.broadcast %cst_24 : f32 to vector<4x32xf32>
    %207 = arith.select %205, %194, %206 : vector<4x32xi1>, vector<4x32xf32>
    %cst_25 = arith.constant 0.000000e+00 : f32
    %208 = vector.shape_cast %191 : vector<4x1xi1> to vector<4x1xi1>
    %209 = vector.broadcast %208 : vector<4x1xi1> to vector<4x32xi1>
    %210 = vector.broadcast %cst_25 : f32 to vector<4x32xf32>
    %211 = arith.select %209, %200, %210 : vector<4x32xi1>, vector<4x32xf32>
    %212 = tpu.concatenate %194, %200 in 1 : vector<4x32xf32>, vector<4x32xf32> -> vector<4x64xf32>
    %213 = arith.truncf %212 : vector<4x64xf32> to vector<4x64xbf16>
    %cst_26 = arith.constant dense<0.000000e+00> : vector<4x256xf32>
    %214 = tpu.matmul %213, %11, %cst_26 {dimension_numbers = #tpu.dot_dimension_numbers<[1], [0], [0], [1], [0, 0, 1, 1], [], []>} : vector<4x64xbf16>, vector<64x256xbf16>, vector<4x256xf32> -> vector<4x256xf32>
    %215 = vector.extract_strided_slice %9 {offsets = [0, 3, 0], sizes = [4, 1, 128], strides = [1, 1, 1]} : vector<4x8x256xf32> to vector<4x1x128xf32>
    %216 = vector.shape_cast %215 : vector<4x1x128xf32> to vector<4x128xf32>
    %217 = vector.extract_strided_slice %214 {offsets = [0, 0], sizes = [4, 128], strides = [1, 1]} : vector<4x256xf32> to vector<4x128xf32>
    %218 = arith.addf %216, %217 : vector<4x128xf32>
    %219 = vector.extract_strided_slice %218 {offsets = [0, 0], sizes = [4, 96], strides = [1, 1]} : vector<4x128xf32> to vector<4x96xf32>
    %220 = arith.negf %219 : vector<4x96xf32>
    %221 = math.exp %220 : vector<4x96xf32>
    %cst_27 = arith.constant 1.000000e+00 : f32
    %222 = vector.broadcast %cst_27 : f32 to vector<4x96xf32>
    %223 = arith.addf %222, %221 : vector<4x96xf32>
    %224 = arith.divf %222, %223 : vector<4x96xf32>
    %225 = vector.extract_strided_slice %218 {offsets = [0, 96], sizes = [4, 32], strides = [1, 1]} : vector<4x128xf32> to vector<4x32xf32>
    %226 = math.tanh %225 : vector<4x32xf32>
    %227 = vector.extract_strided_slice %224 {offsets = [0, 32], sizes = [4, 32], strides = [1, 1]} : vector<4x96xf32> to vector<4x32xf32>
    %228 = arith.mulf %227, %197 : vector<4x32xf32>
    %229 = vector.extract_strided_slice %224 {offsets = [0, 0], sizes = [4, 32], strides = [1, 1]} : vector<4x96xf32> to vector<4x32xf32>
    %230 = arith.mulf %229, %226 : vector<4x32xf32>
    %231 = arith.addf %228, %230 : vector<4x32xf32>
    %232 = vector.extract_strided_slice %224 {offsets = [0, 64], sizes = [4, 32], strides = [1, 1]} : vector<4x96xf32> to vector<4x32xf32>
    %233 = math.tanh %231 : vector<4x32xf32>
    %234 = arith.mulf %232, %233 : vector<4x32xf32>
    %235 = vector.extract_strided_slice %9 {offsets = [0, 4, 128], sizes = [4, 1, 128], strides = [1, 1, 1]} : vector<4x8x256xf32> to vector<4x1x128xf32>
    %236 = vector.shape_cast %235 : vector<4x1x128xf32> to vector<4x128xf32>
    %237 = vector.extract_strided_slice %214 {offsets = [0, 128], sizes = [4, 128], strides = [1, 1]} : vector<4x256xf32> to vector<4x128xf32>
    %238 = arith.addf %236, %237 : vector<4x128xf32>
    %239 = vector.extract_strided_slice %238 {offsets = [0, 0], sizes = [4, 96], strides = [1, 1]} : vector<4x128xf32> to vector<4x96xf32>
    %240 = arith.negf %239 : vector<4x96xf32>
    %241 = math.exp %240 : vector<4x96xf32>
    %cst_28 = arith.constant 1.000000e+00 : f32
    %242 = vector.broadcast %cst_28 : f32 to vector<4x96xf32>
    %243 = arith.addf %242, %241 : vector<4x96xf32>
    %244 = arith.divf %242, %243 : vector<4x96xf32>
    %245 = vector.extract_strided_slice %238 {offsets = [0, 96], sizes = [4, 32], strides = [1, 1]} : vector<4x128xf32> to vector<4x32xf32>
    %246 = math.tanh %245 : vector<4x32xf32>
    %247 = vector.extract_strided_slice %244 {offsets = [0, 32], sizes = [4, 32], strides = [1, 1]} : vector<4x96xf32> to vector<4x32xf32>
    %248 = arith.mulf %247, %203 : vector<4x32xf32>
    %249 = vector.extract_strided_slice %244 {offsets = [0, 0], sizes = [4, 32], strides = [1, 1]} : vector<4x96xf32> to vector<4x32xf32>
    %250 = arith.mulf %249, %246 : vector<4x32xf32>
    %251 = arith.addf %248, %250 : vector<4x32xf32>
    %252 = vector.extract_strided_slice %244 {offsets = [0, 64], sizes = [4, 32], strides = [1, 1]} : vector<4x96xf32> to vector<4x32xf32>
    %253 = math.tanh %251 : vector<4x32xf32>
    %254 = arith.mulf %252, %253 : vector<4x32xf32>
    %255 = vector.extract_strided_slice %15 {offsets = [0, 3], sizes = [4, 1], strides = [1, 1]} : vector<4x8xi1> to vector<4x1xi1>
    %256 = vector.extract_strided_slice %15 {offsets = [0, 4], sizes = [4, 1], strides = [1, 1]} : vector<4x8xi1> to vector<4x1xi1>
    %257 = vector.shape_cast %255 : vector<4x1xi1> to vector<4x1xi1>
    %258 = vector.broadcast %257 : vector<4x1xi1> to vector<4x32xi1>
    %259 = arith.select %258, %234, %194 : vector<4x32xi1>, vector<4x32xf32>
    %260 = vector.shape_cast %255 : vector<4x1xi1> to vector<4x1xi1>
    %261 = vector.broadcast %260 : vector<4x1xi1> to vector<4x32xi1>
    %262 = arith.select %261, %231, %197 : vector<4x32xi1>, vector<4x32xf32>
    %263 = vector.shape_cast %256 : vector<4x1xi1> to vector<4x1xi1>
    %264 = vector.broadcast %263 : vector<4x1xi1> to vector<4x32xi1>
    %265 = arith.select %264, %254, %200 : vector<4x32xi1>, vector<4x32xf32>
    %266 = vector.shape_cast %256 : vector<4x1xi1> to vector<4x1xi1>
    %267 = vector.broadcast %266 : vector<4x1xi1> to vector<4x32xi1>
    %268 = arith.select %267, %251, %203 : vector<4x32xi1>, vector<4x32xf32>
    %cst_29 = arith.constant 0.000000e+00 : f32
    %269 = vector.shape_cast %255 : vector<4x1xi1> to vector<4x1xi1>
    %270 = vector.broadcast %269 : vector<4x1xi1> to vector<4x32xi1>
    %271 = vector.broadcast %cst_29 : f32 to vector<4x32xf32>
    %272 = arith.select %270, %259, %271 : vector<4x32xi1>, vector<4x32xf32>
    %cst_30 = arith.constant 0.000000e+00 : f32
    %273 = vector.shape_cast %256 : vector<4x1xi1> to vector<4x1xi1>
    %274 = vector.broadcast %273 : vector<4x1xi1> to vector<4x32xi1>
    %275 = vector.broadcast %cst_30 : f32 to vector<4x32xf32>
    %276 = arith.select %274, %265, %275 : vector<4x32xi1>, vector<4x32xf32>
    %277 = tpu.concatenate %259, %265 in 1 : vector<4x32xf32>, vector<4x32xf32> -> vector<4x64xf32>
    %278 = arith.truncf %277 : vector<4x64xf32> to vector<4x64xbf16>
    %cst_31 = arith.constant dense<0.000000e+00> : vector<4x256xf32>
    %279 = tpu.matmul %278, %11, %cst_31 {dimension_numbers = #tpu.dot_dimension_numbers<[1], [0], [0], [1], [0, 0, 1, 1], [], []>} : vector<4x64xbf16>, vector<64x256xbf16>, vector<4x256xf32> -> vector<4x256xf32>
    %280 = vector.extract_strided_slice %9 {offsets = [0, 4, 0], sizes = [4, 1, 128], strides = [1, 1, 1]} : vector<4x8x256xf32> to vector<4x1x128xf32>
    %281 = vector.shape_cast %280 : vector<4x1x128xf32> to vector<4x128xf32>
    %282 = vector.extract_strided_slice %279 {offsets = [0, 0], sizes = [4, 128], strides = [1, 1]} : vector<4x256xf32> to vector<4x128xf32>
    %283 = arith.addf %281, %282 : vector<4x128xf32>
    %284 = vector.extract_strided_slice %283 {offsets = [0, 0], sizes = [4, 96], strides = [1, 1]} : vector<4x128xf32> to vector<4x96xf32>
    %285 = arith.negf %284 : vector<4x96xf32>
    %286 = math.exp %285 : vector<4x96xf32>
    %cst_32 = arith.constant 1.000000e+00 : f32
    %287 = vector.broadcast %cst_32 : f32 to vector<4x96xf32>
    %288 = arith.addf %287, %286 : vector<4x96xf32>
    %289 = arith.divf %287, %288 : vector<4x96xf32>
    %290 = vector.extract_strided_slice %283 {offsets = [0, 96], sizes = [4, 32], strides = [1, 1]} : vector<4x128xf32> to vector<4x32xf32>
    %291 = math.tanh %290 : vector<4x32xf32>
    %292 = vector.extract_strided_slice %289 {offsets = [0, 32], sizes = [4, 32], strides = [1, 1]} : vector<4x96xf32> to vector<4x32xf32>
    %293 = arith.mulf %292, %262 : vector<4x32xf32>
    %294 = vector.extract_strided_slice %289 {offsets = [0, 0], sizes = [4, 32], strides = [1, 1]} : vector<4x96xf32> to vector<4x32xf32>
    %295 = arith.mulf %294, %291 : vector<4x32xf32>
    %296 = arith.addf %293, %295 : vector<4x32xf32>
    %297 = vector.extract_strided_slice %289 {offsets = [0, 64], sizes = [4, 32], strides = [1, 1]} : vector<4x96xf32> to vector<4x32xf32>
    %298 = math.tanh %296 : vector<4x32xf32>
    %299 = arith.mulf %297, %298 : vector<4x32xf32>
    %300 = vector.extract_strided_slice %9 {offsets = [0, 3, 128], sizes = [4, 1, 128], strides = [1, 1, 1]} : vector<4x8x256xf32> to vector<4x1x128xf32>
    %301 = vector.shape_cast %300 : vector<4x1x128xf32> to vector<4x128xf32>
    %302 = vector.extract_strided_slice %279 {offsets = [0, 128], sizes = [4, 128], strides = [1, 1]} : vector<4x256xf32> to vector<4x128xf32>
    %303 = arith.addf %301, %302 : vector<4x128xf32>
    %304 = vector.extract_strided_slice %303 {offsets = [0, 0], sizes = [4, 96], strides = [1, 1]} : vector<4x128xf32> to vector<4x96xf32>
    %305 = arith.negf %304 : vector<4x96xf32>
    %306 = math.exp %305 : vector<4x96xf32>
    %cst_33 = arith.constant 1.000000e+00 : f32
    %307 = vector.broadcast %cst_33 : f32 to vector<4x96xf32>
    %308 = arith.addf %307, %306 : vector<4x96xf32>
    %309 = arith.divf %307, %308 : vector<4x96xf32>
    %310 = vector.extract_strided_slice %303 {offsets = [0, 96], sizes = [4, 32], strides = [1, 1]} : vector<4x128xf32> to vector<4x32xf32>
    %311 = math.tanh %310 : vector<4x32xf32>
    %312 = vector.extract_strided_slice %309 {offsets = [0, 32], sizes = [4, 32], strides = [1, 1]} : vector<4x96xf32> to vector<4x32xf32>
    %313 = arith.mulf %312, %268 : vector<4x32xf32>
    %314 = vector.extract_strided_slice %309 {offsets = [0, 0], sizes = [4, 32], strides = [1, 1]} : vector<4x96xf32> to vector<4x32xf32>
    %315 = arith.mulf %314, %311 : vector<4x32xf32>
    %316 = arith.addf %313, %315 : vector<4x32xf32>
    %317 = vector.extract_strided_slice %309 {offsets = [0, 64], sizes = [4, 32], strides = [1, 1]} : vector<4x96xf32> to vector<4x32xf32>
    %318 = math.tanh %316 : vector<4x32xf32>
    %319 = arith.mulf %317, %318 : vector<4x32xf32>
    %320 = vector.extract_strided_slice %15 {offsets = [0, 4], sizes = [4, 1], strides = [1, 1]} : vector<4x8xi1> to vector<4x1xi1>
    %321 = vector.extract_strided_slice %15 {offsets = [0, 3], sizes = [4, 1], strides = [1, 1]} : vector<4x8xi1> to vector<4x1xi1>
    %322 = vector.shape_cast %320 : vector<4x1xi1> to vector<4x1xi1>
    %323 = vector.broadcast %322 : vector<4x1xi1> to vector<4x32xi1>
    %324 = arith.select %323, %299, %259 : vector<4x32xi1>, vector<4x32xf32>
    %325 = vector.shape_cast %320 : vector<4x1xi1> to vector<4x1xi1>
    %326 = vector.broadcast %325 : vector<4x1xi1> to vector<4x32xi1>
    %327 = arith.select %326, %296, %262 : vector<4x32xi1>, vector<4x32xf32>
    %328 = vector.shape_cast %321 : vector<4x1xi1> to vector<4x1xi1>
    %329 = vector.broadcast %328 : vector<4x1xi1> to vector<4x32xi1>
    %330 = arith.select %329, %319, %265 : vector<4x32xi1>, vector<4x32xf32>
    %331 = vector.shape_cast %321 : vector<4x1xi1> to vector<4x1xi1>
    %332 = vector.broadcast %331 : vector<4x1xi1> to vector<4x32xi1>
    %333 = arith.select %332, %316, %268 : vector<4x32xi1>, vector<4x32xf32>
    %cst_34 = arith.constant 0.000000e+00 : f32
    %334 = vector.shape_cast %320 : vector<4x1xi1> to vector<4x1xi1>
    %335 = vector.broadcast %334 : vector<4x1xi1> to vector<4x32xi1>
    %336 = vector.broadcast %cst_34 : f32 to vector<4x32xf32>
    %337 = arith.select %335, %324, %336 : vector<4x32xi1>, vector<4x32xf32>
    %cst_35 = arith.constant 0.000000e+00 : f32
    %338 = vector.shape_cast %321 : vector<4x1xi1> to vector<4x1xi1>
    %339 = vector.broadcast %338 : vector<4x1xi1> to vector<4x32xi1>
    %340 = vector.broadcast %cst_35 : f32 to vector<4x32xf32>
    %341 = arith.select %339, %330, %340 : vector<4x32xi1>, vector<4x32xf32>
    %342 = tpu.concatenate %324, %330 in 1 : vector<4x32xf32>, vector<4x32xf32> -> vector<4x64xf32>
    %343 = arith.truncf %342 : vector<4x64xf32> to vector<4x64xbf16>
    %cst_36 = arith.constant dense<0.000000e+00> : vector<4x256xf32>
    %344 = tpu.matmul %343, %11, %cst_36 {dimension_numbers = #tpu.dot_dimension_numbers<[1], [0], [0], [1], [0, 0, 1, 1], [], []>} : vector<4x64xbf16>, vector<64x256xbf16>, vector<4x256xf32> -> vector<4x256xf32>
    %345 = vector.extract_strided_slice %9 {offsets = [0, 5, 0], sizes = [4, 1, 128], strides = [1, 1, 1]} : vector<4x8x256xf32> to vector<4x1x128xf32>
    %346 = vector.shape_cast %345 : vector<4x1x128xf32> to vector<4x128xf32>
    %347 = vector.extract_strided_slice %344 {offsets = [0, 0], sizes = [4, 128], strides = [1, 1]} : vector<4x256xf32> to vector<4x128xf32>
    %348 = arith.addf %346, %347 : vector<4x128xf32>
    %349 = vector.extract_strided_slice %348 {offsets = [0, 0], sizes = [4, 96], strides = [1, 1]} : vector<4x128xf32> to vector<4x96xf32>
    %350 = arith.negf %349 : vector<4x96xf32>
    %351 = math.exp %350 : vector<4x96xf32>
    %cst_37 = arith.constant 1.000000e+00 : f32
    %352 = vector.broadcast %cst_37 : f32 to vector<4x96xf32>
    %353 = arith.addf %352, %351 : vector<4x96xf32>
    %354 = arith.divf %352, %353 : vector<4x96xf32>
    %355 = vector.extract_strided_slice %348 {offsets = [0, 96], sizes = [4, 32], strides = [1, 1]} : vector<4x128xf32> to vector<4x32xf32>
    %356 = math.tanh %355 : vector<4x32xf32>
    %357 = vector.extract_strided_slice %354 {offsets = [0, 32], sizes = [4, 32], strides = [1, 1]} : vector<4x96xf32> to vector<4x32xf32>
    %358 = arith.mulf %357, %327 : vector<4x32xf32>
    %359 = vector.extract_strided_slice %354 {offsets = [0, 0], sizes = [4, 32], strides = [1, 1]} : vector<4x96xf32> to vector<4x32xf32>
    %360 = arith.mulf %359, %356 : vector<4x32xf32>
    %361 = arith.addf %358, %360 : vector<4x32xf32>
    %362 = vector.extract_strided_slice %354 {offsets = [0, 64], sizes = [4, 32], strides = [1, 1]} : vector<4x96xf32> to vector<4x32xf32>
    %363 = math.tanh %361 : vector<4x32xf32>
    %364 = arith.mulf %362, %363 : vector<4x32xf32>
    %365 = vector.extract_strided_slice %9 {offsets = [0, 2, 128], sizes = [4, 1, 128], strides = [1, 1, 1]} : vector<4x8x256xf32> to vector<4x1x128xf32>
    %366 = vector.shape_cast %365 : vector<4x1x128xf32> to vector<4x128xf32>
    %367 = vector.extract_strided_slice %344 {offsets = [0, 128], sizes = [4, 128], strides = [1, 1]} : vector<4x256xf32> to vector<4x128xf32>
    %368 = arith.addf %366, %367 : vector<4x128xf32>
    %369 = vector.extract_strided_slice %368 {offsets = [0, 0], sizes = [4, 96], strides = [1, 1]} : vector<4x128xf32> to vector<4x96xf32>
    %370 = arith.negf %369 : vector<4x96xf32>
    %371 = math.exp %370 : vector<4x96xf32>
    %cst_38 = arith.constant 1.000000e+00 : f32
    %372 = vector.broadcast %cst_38 : f32 to vector<4x96xf32>
    %373 = arith.addf %372, %371 : vector<4x96xf32>
    %374 = arith.divf %372, %373 : vector<4x96xf32>
    %375 = vector.extract_strided_slice %368 {offsets = [0, 96], sizes = [4, 32], strides = [1, 1]} : vector<4x128xf32> to vector<4x32xf32>
    %376 = math.tanh %375 : vector<4x32xf32>
    %377 = vector.extract_strided_slice %374 {offsets = [0, 32], sizes = [4, 32], strides = [1, 1]} : vector<4x96xf32> to vector<4x32xf32>
    %378 = arith.mulf %377, %333 : vector<4x32xf32>
    %379 = vector.extract_strided_slice %374 {offsets = [0, 0], sizes = [4, 32], strides = [1, 1]} : vector<4x96xf32> to vector<4x32xf32>
    %380 = arith.mulf %379, %376 : vector<4x32xf32>
    %381 = arith.addf %378, %380 : vector<4x32xf32>
    %382 = vector.extract_strided_slice %374 {offsets = [0, 64], sizes = [4, 32], strides = [1, 1]} : vector<4x96xf32> to vector<4x32xf32>
    %383 = math.tanh %381 : vector<4x32xf32>
    %384 = arith.mulf %382, %383 : vector<4x32xf32>
    %385 = vector.extract_strided_slice %15 {offsets = [0, 5], sizes = [4, 1], strides = [1, 1]} : vector<4x8xi1> to vector<4x1xi1>
    %386 = vector.extract_strided_slice %15 {offsets = [0, 2], sizes = [4, 1], strides = [1, 1]} : vector<4x8xi1> to vector<4x1xi1>
    %387 = vector.shape_cast %385 : vector<4x1xi1> to vector<4x1xi1>
    %388 = vector.broadcast %387 : vector<4x1xi1> to vector<4x32xi1>
    %389 = arith.select %388, %364, %324 : vector<4x32xi1>, vector<4x32xf32>
    %390 = vector.shape_cast %385 : vector<4x1xi1> to vector<4x1xi1>
    %391 = vector.broadcast %390 : vector<4x1xi1> to vector<4x32xi1>
    %392 = arith.select %391, %361, %327 : vector<4x32xi1>, vector<4x32xf32>
    %393 = vector.shape_cast %386 : vector<4x1xi1> to vector<4x1xi1>
    %394 = vector.broadcast %393 : vector<4x1xi1> to vector<4x32xi1>
    %395 = arith.select %394, %384, %330 : vector<4x32xi1>, vector<4x32xf32>
    %396 = vector.shape_cast %386 : vector<4x1xi1> to vector<4x1xi1>
    %397 = vector.broadcast %396 : vector<4x1xi1> to vector<4x32xi1>
    %398 = arith.select %397, %381, %333 : vector<4x32xi1>, vector<4x32xf32>
    %cst_39 = arith.constant 0.000000e+00 : f32
    %399 = vector.shape_cast %385 : vector<4x1xi1> to vector<4x1xi1>
    %400 = vector.broadcast %399 : vector<4x1xi1> to vector<4x32xi1>
    %401 = vector.broadcast %cst_39 : f32 to vector<4x32xf32>
    %402 = arith.select %400, %389, %401 : vector<4x32xi1>, vector<4x32xf32>
    %cst_40 = arith.constant 0.000000e+00 : f32
    %403 = vector.shape_cast %386 : vector<4x1xi1> to vector<4x1xi1>
    %404 = vector.broadcast %403 : vector<4x1xi1> to vector<4x32xi1>
    %405 = vector.broadcast %cst_40 : f32 to vector<4x32xf32>
    %406 = arith.select %404, %395, %405 : vector<4x32xi1>, vector<4x32xf32>
    %407 = tpu.concatenate %389, %395 in 1 : vector<4x32xf32>, vector<4x32xf32> -> vector<4x64xf32>
    %408 = arith.truncf %407 : vector<4x64xf32> to vector<4x64xbf16>
    %cst_41 = arith.constant dense<0.000000e+00> : vector<4x256xf32>
    %409 = tpu.matmul %408, %11, %cst_41 {dimension_numbers = #tpu.dot_dimension_numbers<[1], [0], [0], [1], [0, 0, 1, 1], [], []>} : vector<4x64xbf16>, vector<64x256xbf16>, vector<4x256xf32> -> vector<4x256xf32>
    %410 = vector.extract_strided_slice %9 {offsets = [0, 6, 0], sizes = [4, 1, 128], strides = [1, 1, 1]} : vector<4x8x256xf32> to vector<4x1x128xf32>
    %411 = vector.shape_cast %410 : vector<4x1x128xf32> to vector<4x128xf32>
    %412 = vector.extract_strided_slice %409 {offsets = [0, 0], sizes = [4, 128], strides = [1, 1]} : vector<4x256xf32> to vector<4x128xf32>
    %413 = arith.addf %411, %412 : vector<4x128xf32>
    %414 = vector.extract_strided_slice %413 {offsets = [0, 0], sizes = [4, 96], strides = [1, 1]} : vector<4x128xf32> to vector<4x96xf32>
    %415 = arith.negf %414 : vector<4x96xf32>
    %416 = math.exp %415 : vector<4x96xf32>
    %cst_42 = arith.constant 1.000000e+00 : f32
    %417 = vector.broadcast %cst_42 : f32 to vector<4x96xf32>
    %418 = arith.addf %417, %416 : vector<4x96xf32>
    %419 = arith.divf %417, %418 : vector<4x96xf32>
    %420 = vector.extract_strided_slice %413 {offsets = [0, 96], sizes = [4, 32], strides = [1, 1]} : vector<4x128xf32> to vector<4x32xf32>
    %421 = math.tanh %420 : vector<4x32xf32>
    %422 = vector.extract_strided_slice %419 {offsets = [0, 32], sizes = [4, 32], strides = [1, 1]} : vector<4x96xf32> to vector<4x32xf32>
    %423 = arith.mulf %422, %392 : vector<4x32xf32>
    %424 = vector.extract_strided_slice %419 {offsets = [0, 0], sizes = [4, 32], strides = [1, 1]} : vector<4x96xf32> to vector<4x32xf32>
    %425 = arith.mulf %424, %421 : vector<4x32xf32>
    %426 = arith.addf %423, %425 : vector<4x32xf32>
    %427 = vector.extract_strided_slice %419 {offsets = [0, 64], sizes = [4, 32], strides = [1, 1]} : vector<4x96xf32> to vector<4x32xf32>
    %428 = math.tanh %426 : vector<4x32xf32>
    %429 = arith.mulf %427, %428 : vector<4x32xf32>
    %430 = vector.extract_strided_slice %9 {offsets = [0, 1, 128], sizes = [4, 1, 128], strides = [1, 1, 1]} : vector<4x8x256xf32> to vector<4x1x128xf32>
    %431 = vector.shape_cast %430 : vector<4x1x128xf32> to vector<4x128xf32>
    %432 = vector.extract_strided_slice %409 {offsets = [0, 128], sizes = [4, 128], strides = [1, 1]} : vector<4x256xf32> to vector<4x128xf32>
    %433 = arith.addf %431, %432 : vector<4x128xf32>
    %434 = vector.extract_strided_slice %433 {offsets = [0, 0], sizes = [4, 96], strides = [1, 1]} : vector<4x128xf32> to vector<4x96xf32>
    %435 = arith.negf %434 : vector<4x96xf32>
    %436 = math.exp %435 : vector<4x96xf32>
    %cst_43 = arith.constant 1.000000e+00 : f32
    %437 = vector.broadcast %cst_43 : f32 to vector<4x96xf32>
    %438 = arith.addf %437, %436 : vector<4x96xf32>
    %439 = arith.divf %437, %438 : vector<4x96xf32>
    %440 = vector.extract_strided_slice %433 {offsets = [0, 96], sizes = [4, 32], strides = [1, 1]} : vector<4x128xf32> to vector<4x32xf32>
    %441 = math.tanh %440 : vector<4x32xf32>
    %442 = vector.extract_strided_slice %439 {offsets = [0, 32], sizes = [4, 32], strides = [1, 1]} : vector<4x96xf32> to vector<4x32xf32>
    %443 = arith.mulf %442, %398 : vector<4x32xf32>
    %444 = vector.extract_strided_slice %439 {offsets = [0, 0], sizes = [4, 32], strides = [1, 1]} : vector<4x96xf32> to vector<4x32xf32>
    %445 = arith.mulf %444, %441 : vector<4x32xf32>
    %446 = arith.addf %443, %445 : vector<4x32xf32>
    %447 = vector.extract_strided_slice %439 {offsets = [0, 64], sizes = [4, 32], strides = [1, 1]} : vector<4x96xf32> to vector<4x32xf32>
    %448 = math.tanh %446 : vector<4x32xf32>
    %449 = arith.mulf %447, %448 : vector<4x32xf32>
    %450 = vector.extract_strided_slice %15 {offsets = [0, 6], sizes = [4, 1], strides = [1, 1]} : vector<4x8xi1> to vector<4x1xi1>
    %451 = vector.extract_strided_slice %15 {offsets = [0, 1], sizes = [4, 1], strides = [1, 1]} : vector<4x8xi1> to vector<4x1xi1>
    %452 = vector.shape_cast %450 : vector<4x1xi1> to vector<4x1xi1>
    %453 = vector.broadcast %452 : vector<4x1xi1> to vector<4x32xi1>
    %454 = arith.select %453, %429, %389 : vector<4x32xi1>, vector<4x32xf32>
    %455 = vector.shape_cast %450 : vector<4x1xi1> to vector<4x1xi1>
    %456 = vector.broadcast %455 : vector<4x1xi1> to vector<4x32xi1>
    %457 = arith.select %456, %426, %392 : vector<4x32xi1>, vector<4x32xf32>
    %458 = vector.shape_cast %451 : vector<4x1xi1> to vector<4x1xi1>
    %459 = vector.broadcast %458 : vector<4x1xi1> to vector<4x32xi1>
    %460 = arith.select %459, %449, %395 : vector<4x32xi1>, vector<4x32xf32>
    %461 = vector.shape_cast %451 : vector<4x1xi1> to vector<4x1xi1>
    %462 = vector.broadcast %461 : vector<4x1xi1> to vector<4x32xi1>
    %463 = arith.select %462, %446, %398 : vector<4x32xi1>, vector<4x32xf32>
    %cst_44 = arith.constant 0.000000e+00 : f32
    %464 = vector.shape_cast %450 : vector<4x1xi1> to vector<4x1xi1>
    %465 = vector.broadcast %464 : vector<4x1xi1> to vector<4x32xi1>
    %466 = vector.broadcast %cst_44 : f32 to vector<4x32xf32>
    %467 = arith.select %465, %454, %466 : vector<4x32xi1>, vector<4x32xf32>
    %cst_45 = arith.constant 0.000000e+00 : f32
    %468 = vector.shape_cast %451 : vector<4x1xi1> to vector<4x1xi1>
    %469 = vector.broadcast %468 : vector<4x1xi1> to vector<4x32xi1>
    %470 = vector.broadcast %cst_45 : f32 to vector<4x32xf32>
    %471 = arith.select %469, %460, %470 : vector<4x32xi1>, vector<4x32xf32>
    %472 = tpu.concatenate %454, %460 in 1 : vector<4x32xf32>, vector<4x32xf32> -> vector<4x64xf32>
    %473 = arith.truncf %472 : vector<4x64xf32> to vector<4x64xbf16>
    %cst_46 = arith.constant dense<0.000000e+00> : vector<4x256xf32>
    %474 = tpu.matmul %473, %11, %cst_46 {dimension_numbers = #tpu.dot_dimension_numbers<[1], [0], [0], [1], [0, 0, 1, 1], [], []>} : vector<4x64xbf16>, vector<64x256xbf16>, vector<4x256xf32> -> vector<4x256xf32>
    %475 = vector.extract_strided_slice %9 {offsets = [0, 7, 0], sizes = [4, 1, 128], strides = [1, 1, 1]} : vector<4x8x256xf32> to vector<4x1x128xf32>
    %476 = vector.shape_cast %475 : vector<4x1x128xf32> to vector<4x128xf32>
    %477 = vector.extract_strided_slice %474 {offsets = [0, 0], sizes = [4, 128], strides = [1, 1]} : vector<4x256xf32> to vector<4x128xf32>
    %478 = arith.addf %476, %477 : vector<4x128xf32>
    %479 = vector.extract_strided_slice %478 {offsets = [0, 0], sizes = [4, 96], strides = [1, 1]} : vector<4x128xf32> to vector<4x96xf32>
    %480 = arith.negf %479 : vector<4x96xf32>
    %481 = math.exp %480 : vector<4x96xf32>
    %cst_47 = arith.constant 1.000000e+00 : f32
    %482 = vector.broadcast %cst_47 : f32 to vector<4x96xf32>
    %483 = arith.addf %482, %481 : vector<4x96xf32>
    %484 = arith.divf %482, %483 : vector<4x96xf32>
    %485 = vector.extract_strided_slice %478 {offsets = [0, 96], sizes = [4, 32], strides = [1, 1]} : vector<4x128xf32> to vector<4x32xf32>
    %486 = math.tanh %485 : vector<4x32xf32>
    %487 = vector.extract_strided_slice %484 {offsets = [0, 32], sizes = [4, 32], strides = [1, 1]} : vector<4x96xf32> to vector<4x32xf32>
    %488 = arith.mulf %487, %457 : vector<4x32xf32>
    %489 = vector.extract_strided_slice %484 {offsets = [0, 0], sizes = [4, 32], strides = [1, 1]} : vector<4x96xf32> to vector<4x32xf32>
    %490 = arith.mulf %489, %486 : vector<4x32xf32>
    %491 = arith.addf %488, %490 : vector<4x32xf32>
    %492 = vector.extract_strided_slice %484 {offsets = [0, 64], sizes = [4, 32], strides = [1, 1]} : vector<4x96xf32> to vector<4x32xf32>
    %493 = math.tanh %491 : vector<4x32xf32>
    %494 = arith.mulf %492, %493 : vector<4x32xf32>
    %495 = vector.extract_strided_slice %9 {offsets = [0, 0, 128], sizes = [4, 1, 128], strides = [1, 1, 1]} : vector<4x8x256xf32> to vector<4x1x128xf32>
    %496 = vector.shape_cast %495 : vector<4x1x128xf32> to vector<4x128xf32>
    %497 = vector.extract_strided_slice %474 {offsets = [0, 128], sizes = [4, 128], strides = [1, 1]} : vector<4x256xf32> to vector<4x128xf32>
    %498 = arith.addf %496, %497 : vector<4x128xf32>
    %499 = vector.extract_strided_slice %498 {offsets = [0, 0], sizes = [4, 96], strides = [1, 1]} : vector<4x128xf32> to vector<4x96xf32>
    %500 = arith.negf %499 : vector<4x96xf32>
    %501 = math.exp %500 : vector<4x96xf32>
    %cst_48 = arith.constant 1.000000e+00 : f32
    %502 = vector.broadcast %cst_48 : f32 to vector<4x96xf32>
    %503 = arith.addf %502, %501 : vector<4x96xf32>
    %504 = arith.divf %502, %503 : vector<4x96xf32>
    %505 = vector.extract_strided_slice %498 {offsets = [0, 96], sizes = [4, 32], strides = [1, 1]} : vector<4x128xf32> to vector<4x32xf32>
    %506 = math.tanh %505 : vector<4x32xf32>
    %507 = vector.extract_strided_slice %504 {offsets = [0, 32], sizes = [4, 32], strides = [1, 1]} : vector<4x96xf32> to vector<4x32xf32>
    %508 = arith.mulf %507, %463 : vector<4x32xf32>
    %509 = vector.extract_strided_slice %504 {offsets = [0, 0], sizes = [4, 32], strides = [1, 1]} : vector<4x96xf32> to vector<4x32xf32>
    %510 = arith.mulf %509, %506 : vector<4x32xf32>
    %511 = arith.addf %508, %510 : vector<4x32xf32>
    %512 = vector.extract_strided_slice %504 {offsets = [0, 64], sizes = [4, 32], strides = [1, 1]} : vector<4x96xf32> to vector<4x32xf32>
    %513 = math.tanh %511 : vector<4x32xf32>
    %514 = arith.mulf %512, %513 : vector<4x32xf32>
    %515 = vector.extract_strided_slice %15 {offsets = [0, 7], sizes = [4, 1], strides = [1, 1]} : vector<4x8xi1> to vector<4x1xi1>
    %516 = vector.extract_strided_slice %15 {offsets = [0, 0], sizes = [4, 1], strides = [1, 1]} : vector<4x8xi1> to vector<4x1xi1>
    %517 = vector.shape_cast %515 : vector<4x1xi1> to vector<4x1xi1>
    %518 = vector.broadcast %517 : vector<4x1xi1> to vector<4x32xi1>
    %519 = arith.select %518, %494, %454 : vector<4x32xi1>, vector<4x32xf32>
    %520 = vector.shape_cast %516 : vector<4x1xi1> to vector<4x1xi1>
    %521 = vector.broadcast %520 : vector<4x1xi1> to vector<4x32xi1>
    %522 = arith.select %521, %514, %460 : vector<4x32xi1>, vector<4x32xf32>
    %cst_49 = arith.constant 0.000000e+00 : f32
    %523 = vector.shape_cast %515 : vector<4x1xi1> to vector<4x1xi1>
    %524 = vector.broadcast %523 : vector<4x1xi1> to vector<4x32xi1>
    %525 = vector.broadcast %cst_49 : f32 to vector<4x32xf32>
    %526 = arith.select %524, %519, %525 : vector<4x32xi1>, vector<4x32xf32>
    %cst_50 = arith.constant 0.000000e+00 : f32
    %527 = vector.shape_cast %516 : vector<4x1xi1> to vector<4x1xi1>
    %528 = vector.broadcast %527 : vector<4x1xi1> to vector<4x32xi1>
    %529 = vector.broadcast %cst_50 : f32 to vector<4x32xf32>
    %530 = arith.select %528, %522, %529 : vector<4x32xi1>, vector<4x32xf32>
    %531 = tpu.concatenate %77, %530 in 1 : vector<4x32xf32>, vector<4x32xf32> -> vector<4x64xf32>
    %532 = tpu.concatenate %142, %471 in 1 : vector<4x32xf32>, vector<4x32xf32> -> vector<4x64xf32>
    %533 = tpu.concatenate %207, %406 in 1 : vector<4x32xf32>, vector<4x32xf32> -> vector<4x64xf32>
    %534 = tpu.concatenate %272, %341 in 1 : vector<4x32xf32>, vector<4x32xf32> -> vector<4x64xf32>
    %535 = tpu.concatenate %337, %276 in 1 : vector<4x32xf32>, vector<4x32xf32> -> vector<4x64xf32>
    %536 = tpu.concatenate %402, %211 in 1 : vector<4x32xf32>, vector<4x32xf32> -> vector<4x64xf32>
    %537 = tpu.concatenate %467, %146 in 1 : vector<4x32xf32>, vector<4x32xf32> -> vector<4x64xf32>
    %538 = tpu.concatenate %526, %81 in 1 : vector<4x32xf32>, vector<4x32xf32> -> vector<4x64xf32>
    %539 = vector.shape_cast %531 : vector<4x64xf32> to vector<4x1x64xf32>
    %540 = vector.shape_cast %532 : vector<4x64xf32> to vector<4x1x64xf32>
    %541 = vector.shape_cast %533 : vector<4x64xf32> to vector<4x1x64xf32>
    %542 = vector.shape_cast %534 : vector<4x64xf32> to vector<4x1x64xf32>
    %543 = vector.shape_cast %535 : vector<4x64xf32> to vector<4x1x64xf32>
    %544 = vector.shape_cast %536 : vector<4x64xf32> to vector<4x1x64xf32>
    %545 = vector.shape_cast %537 : vector<4x64xf32> to vector<4x1x64xf32>
    %546 = vector.shape_cast %538 : vector<4x64xf32> to vector<4x1x64xf32>
    %547 = tpu.concatenate %539, %540, %541, %542, %543, %544, %545, %546 in 1 : vector<4x1x64xf32>, vector<4x1x64xf32>, vector<4x1x64xf32>, vector<4x1x64xf32>, vector<4x1x64xf32>, vector<4x1x64xf32>, vector<4x1x64xf32>, vector<4x1x64xf32> -> vector<4x8x64xf32>
    %548 = vector.shape_cast %547 : vector<4x8x64xf32> to vector<32x64xf32>
    %c0_51 = arith.constant 0 : index
    %c0_52 = arith.constant 0 : index
    %549 = vector.load %arg5[%c0_51, %c0_52] : memref<64x64xf32, #tpu.memory_space<vmem>>, vector<64x64xf32>
    %550 = arith.truncf %548 : vector<32x64xf32> to vector<32x64xbf16>
    %551 = arith.truncf %549 : vector<64x64xf32> to vector<64x64xbf16>
    %cst_53 = arith.constant dense<0.000000e+00> : vector<32x64xf32>
    %552 = tpu.matmul %550, %551, %cst_53 {dimension_numbers = #tpu.dot_dimension_numbers<[1], [0], [0], [1], [0, 0, 1, 1], [], []>} : vector<32x64xbf16>, vector<64x64xbf16>, vector<32x64xf32> -> vector<32x64xf32>
    %c0_54 = arith.constant 0 : index
    %c0_55 = arith.constant 0 : index
    %553 = vector.load %arg6[%c0_54, %c0_55] : memref<1x64xf32, #tpu.memory_space<vmem>>, vector<1x64xf32>
    %554 = vector.broadcast %553 : vector<1x64xf32> to vector<32x64xf32>
    %555 = arith.addf %552, %554 : vector<32x64xf32>
    %556 = vector.shape_cast %555 : vector<32x64xf32> to vector<4x8x64xf32>
    %cst_56 = arith.constant dense<0.000000e+00> : vector<4x64xf32>
    %557 = vector.multi_reduction <add>, %547, %cst_56 [1] : vector<4x8x64xf32> to vector<4x64xf32>
    %cst_57 = arith.constant 8.000000e+00 : f32
    %558 = vector.broadcast %cst_57 : f32 to vector<4x64xf32>
    %559 = arith.divf %557, %558 : vector<4x64xf32>
    %c0_58 = arith.constant 0 : index
    %c0_59 = arith.constant 0 : index
    %560 = vector.load %arg7[%c0_58, %c0_59] : memref<64x64xf32, #tpu.memory_space<vmem>>, vector<64x64xf32>
    %561 = arith.truncf %559 : vector<4x64xf32> to vector<4x64xbf16>
    %562 = arith.truncf %560 : vector<64x64xf32> to vector<64x64xbf16>
    %cst_60 = arith.constant dense<0.000000e+00> : vector<4x64xf32>
    %563 = tpu.matmul %561, %562, %cst_60 {dimension_numbers = #tpu.dot_dimension_numbers<[1], [0], [0], [1], [0, 0, 1, 1], [], []>} : vector<4x64xbf16>, vector<64x64xbf16>, vector<4x64xf32> -> vector<4x64xf32>
    %c0_61 = arith.constant 0 : index
    %c0_62 = arith.constant 0 : index
    %564 = vector.load %arg8[%c0_61, %c0_62] : memref<1x64xf32, #tpu.memory_space<vmem>>, vector<1x64xf32>
    %565 = vector.broadcast %564 : vector<1x64xf32> to vector<4x64xf32>
    %566 = arith.addf %563, %565 : vector<4x64xf32>
    %567 = vector.shape_cast %566 : vector<4x64xf32> to vector<4x1x64xf32>
    %568 = vector.broadcast %567 : vector<4x1x64xf32> to vector<4x8x64xf32>
    %569 = arith.addf %556, %568 : vector<4x8x64xf32>
    %570 = math.tanh %569 : vector<4x8x64xf32>
    %c0_63 = arith.constant 0 : index
    %c0_64 = arith.constant 0 : index
    %571 = vector.load %arg9[%c0_63, %c0_64] : memref<1x64xf32, #tpu.memory_space<vmem>>, vector<1x64xf32>
    %572 = vector.shape_cast %571 : vector<1x64xf32> to vector<1x1x64xf32>
    %573 = vector.broadcast %572 : vector<1x1x64xf32> to vector<4x8x64xf32>
    %574 = arith.mulf %570, %573 : vector<4x8x64xf32>
    %cst_65 = arith.constant dense<0.000000e+00> : vector<4x8xf32>
    %575 = vector.multi_reduction <add>, %574, %cst_65 [2] : vector<4x8x64xf32> to vector<4x8xf32>
    %c0_66 = arith.constant 0 : index
    %c0_67 = arith.constant 0 : index
    %576 = vector.load %arg10[%c0_66, %c0_67] : memref<1x1xf32, #tpu.memory_space<vmem>>, vector<1x1xf32>
    %577 = vector.broadcast %576 : vector<1x1xf32> to vector<4x8xf32>
    %578 = arith.addf %575, %577 : vector<4x8xf32>
    %cst_68 = arith.constant dense<0xFF800000> : vector<4xf32>
    %579 = vector.multi_reduction <maximumf>, %578, %cst_68 [1] : vector<4x8xf32> to vector<4xf32>
    %580 = vector.shape_cast %579 : vector<4xf32> to vector<4x1xf32>
    %581 = vector.broadcast %580 : vector<4x1xf32> to vector<4x8xf32>
    %582 = arith.subf %578, %581 : vector<4x8xf32>
    %583 = math.exp %582 : vector<4x8xf32>
    %cst_69 = arith.constant dense<0.000000e+00> : vector<4xf32>
    %584 = vector.multi_reduction <add>, %583, %cst_69 [1] : vector<4x8xf32> to vector<4xf32>
    %585 = vector.shape_cast %584 : vector<4xf32> to vector<4x1xf32>
    %586 = vector.broadcast %585 : vector<4x1xf32> to vector<4x8xf32>
    %587 = arith.divf %583, %586 : vector<4x8xf32>
    %588 = vector.shape_cast %587 : vector<4x8xf32> to vector<4x8x1xf32>
    %589 = vector.broadcast %588 : vector<4x8x1xf32> to vector<4x8x64xf32>
    %590 = arith.mulf %589, %570 : vector<4x8x64xf32>
    %cst_70 = arith.constant dense<0.000000e+00> : vector<4x64xf32>
    %591 = vector.multi_reduction <add>, %590, %cst_70 [1] : vector<4x8x64xf32> to vector<4x64xf32>
    %592 = vector.extract_strided_slice %591 {offsets = [0, 0], sizes = [2, 64], strides = [1, 1]} : vector<4x64xf32> to vector<2x64xf32>
    %593 = vector.extract_strided_slice %591 {offsets = [2, 0], sizes = [2, 64], strides = [1, 1]} : vector<4x64xf32> to vector<2x64xf32>
    %594 = arith.mulf %592, %593 : vector<2x64xf32>
    %595 = arith.subf %592, %593 : vector<2x64xf32>
    %596 = tpu.concatenate %592, %594, %595, %593 in 1 : vector<2x64xf32>, vector<2x64xf32>, vector<2x64xf32>, vector<2x64xf32> -> vector<2x256xf32>
    %c0_71 = arith.constant 0 : index
    %c0_72 = arith.constant 0 : index
    %597 = vector.load %arg17[%c0_71, %c0_72] : memref<1x300xf32, #tpu.memory_space<vmem>>, vector<1x300xf32>
    %c0_73 = arith.constant 0 : index
    %c0_74 = arith.constant 0 : index
    %598 = vector.load %arg18[%c0_73, %c0_74] : memref<1x300xf32, #tpu.memory_space<vmem>>, vector<1x300xf32>
    %c0_75 = arith.constant 0 : index
    %c0_76 = arith.constant 0 : index
    %599 = vector.load %arg11[%c0_75, %c0_76] : memref<256x300xf32, #tpu.memory_space<vmem>>, vector<256x300xf32>
    %600 = arith.truncf %596 : vector<2x256xf32> to vector<2x256xbf16>
    %601 = arith.truncf %599 : vector<256x300xf32> to vector<256x300xbf16>
    %cst_77 = arith.constant dense<0.000000e+00> : vector<2x300xf32>
    %602 = tpu.matmul %600, %601, %cst_77 {dimension_numbers = #tpu.dot_dimension_numbers<[1], [0], [0], [1], [0, 0, 1, 1], [], []>} : vector<2x256xbf16>, vector<256x300xbf16>, vector<2x300xf32> -> vector<2x300xf32>
    %c0_78 = arith.constant 0 : index
    %c0_79 = arith.constant 0 : index
    %603 = vector.load %arg12[%c0_78, %c0_79] : memref<1x300xf32, #tpu.memory_space<vmem>>, vector<1x300xf32>
    %604 = vector.broadcast %603 : vector<1x300xf32> to vector<2x300xf32>
    %605 = arith.addf %602, %604 : vector<2x300xf32>
    %606 = math.tanh %605 : vector<2x300xf32>
    %cst_80 = arith.constant dense<0.000000e+00> : vector<2xf32>
    %607 = vector.multi_reduction <add>, %606, %cst_80 [1] : vector<2x300xf32> to vector<2xf32>
    %608 = vector.shape_cast %607 : vector<2xf32> to vector<2x1xf32>
    %cst_81 = arith.constant 3.000000e+02 : f32
    %609 = vector.broadcast %cst_81 : f32 to vector<2x1xf32>
    %610 = arith.divf %608, %609 : vector<2x1xf32>
    %611 = vector.broadcast %610 : vector<2x1xf32> to vector<2x300xf32>
    %612 = arith.subf %606, %611 : vector<2x300xf32>
    %613 = arith.mulf %612, %612 : vector<2x300xf32>
    %cst_82 = arith.constant dense<0.000000e+00> : vector<2xf32>
    %614 = vector.multi_reduction <add>, %613, %cst_82 [1] : vector<2x300xf32> to vector<2xf32>
    %615 = vector.shape_cast %614 : vector<2xf32> to vector<2x1xf32>
    %cst_83 = arith.constant 3.000000e+02 : f32
    %616 = vector.broadcast %cst_83 : f32 to vector<2x1xf32>
    %617 = arith.divf %615, %616 : vector<2x1xf32>
    %618 = vector.broadcast %610 : vector<2x1xf32> to vector<2x300xf32>
    %619 = arith.subf %606, %618 : vector<2x300xf32>
    %cst_84 = arith.constant 9.99999974E-6 : f32
    %620 = vector.broadcast %cst_84 : f32 to vector<2x1xf32>
    %621 = arith.addf %617, %620 : vector<2x1xf32>
    %622 = math.rsqrt %621 : vector<2x1xf32>
    %623 = vector.broadcast %622 : vector<2x1xf32> to vector<2x300xf32>
    %624 = arith.mulf %619, %623 : vector<2x300xf32>
    %625 = vector.broadcast %597 : vector<1x300xf32> to vector<2x300xf32>
    %626 = arith.mulf %624, %625 : vector<2x300xf32>
    %627 = vector.broadcast %598 : vector<1x300xf32> to vector<2x300xf32>
    %628 = arith.addf %626, %627 : vector<2x300xf32>
    %c0_85 = arith.constant 0 : index
    %c0_86 = arith.constant 0 : index
    %629 = vector.load %arg13[%c0_85, %c0_86] : memref<300x300xf32, #tpu.memory_space<vmem>>, vector<300x300xf32>
    %630 = arith.truncf %628 : vector<2x300xf32> to vector<2x300xbf16>
    %631 = arith.truncf %629 : vector<300x300xf32> to vector<300x300xbf16>
    %cst_87 = arith.constant dense<0.000000e+00> : vector<2x300xf32>
    %632 = tpu.matmul %630, %631, %cst_87 {dimension_numbers = #tpu.dot_dimension_numbers<[1], [0], [0], [1], [0, 0, 1, 1], [], []>} : vector<2x300xbf16>, vector<300x300xbf16>, vector<2x300xf32> -> vector<2x300xf32>
    %c0_88 = arith.constant 0 : index
    %c0_89 = arith.constant 0 : index
    %633 = vector.load %arg14[%c0_88, %c0_89] : memref<1x300xf32, #tpu.memory_space<vmem>>, vector<1x300xf32>
    %634 = vector.broadcast %633 : vector<1x300xf32> to vector<2x300xf32>
    %635 = arith.addf %632, %634 : vector<2x300xf32>
    %636 = math.tanh %635 : vector<2x300xf32>
    %cst_90 = arith.constant dense<0.000000e+00> : vector<2xf32>
    %637 = vector.multi_reduction <add>, %636, %cst_90 [1] : vector<2x300xf32> to vector<2xf32>
    %638 = vector.shape_cast %637 : vector<2xf32> to vector<2x1xf32>
    %cst_91 = arith.constant 3.000000e+02 : f32
    %639 = vector.broadcast %cst_91 : f32 to vector<2x1xf32>
    %640 = arith.divf %638, %639 : vector<2x1xf32>
    %641 = vector.broadcast %640 : vector<2x1xf32> to vector<2x300xf32>
    %642 = arith.subf %636, %641 : vector<2x300xf32>
    %643 = arith.mulf %642, %642 : vector<2x300xf32>
    %cst_92 = arith.constant dense<0.000000e+00> : vector<2xf32>
    %644 = vector.multi_reduction <add>, %643, %cst_92 [1] : vector<2x300xf32> to vector<2xf32>
    %645 = vector.shape_cast %644 : vector<2xf32> to vector<2x1xf32>
    %cst_93 = arith.constant 3.000000e+02 : f32
    %646 = vector.broadcast %cst_93 : f32 to vector<2x1xf32>
    %647 = arith.divf %645, %646 : vector<2x1xf32>
    %648 = vector.broadcast %640 : vector<2x1xf32> to vector<2x300xf32>
    %649 = arith.subf %636, %648 : vector<2x300xf32>
    %cst_94 = arith.constant 9.99999974E-6 : f32
    %650 = vector.broadcast %cst_94 : f32 to vector<2x1xf32>
    %651 = arith.addf %647, %650 : vector<2x1xf32>
    %652 = math.rsqrt %651 : vector<2x1xf32>
    %653 = vector.broadcast %652 : vector<2x1xf32> to vector<2x300xf32>
    %654 = arith.mulf %649, %653 : vector<2x300xf32>
    %655 = vector.broadcast %597 : vector<1x300xf32> to vector<2x300xf32>
    %656 = arith.mulf %654, %655 : vector<2x300xf32>
    %657 = vector.broadcast %598 : vector<1x300xf32> to vector<2x300xf32>
    %658 = arith.addf %656, %657 : vector<2x300xf32>
    %c0_95 = arith.constant 0 : index
    %c0_96 = arith.constant 0 : index
    %659 = vector.load %arg15[%c0_95, %c0_96] : memref<300x3xf32, #tpu.memory_space<vmem>>, vector<300x3xf32>
    %660 = arith.truncf %658 : vector<2x300xf32> to vector<2x300xbf16>
    %661 = arith.truncf %659 : vector<300x3xf32> to vector<300x3xbf16>
    %cst_97 = arith.constant dense<0.000000e+00> : vector<2x3xf32>
    %662 = tpu.matmul %660, %661, %cst_97 {dimension_numbers = #tpu.dot_dimension_numbers<[1], [0], [0], [1], [0, 0, 1, 1], [], []>} : vector<2x300xbf16>, vector<300x3xbf16>, vector<2x3xf32> -> vector<2x3xf32>
    %c0_98 = arith.constant 0 : index
    %c0_99 = arith.constant 0 : index
    %663 = vector.load %arg16[%c0_98, %c0_99] : memref<1x3xf32, #tpu.memory_space<vmem>>, vector<1x3xf32>
    %664 = vector.broadcast %663 : vector<1x3xf32> to vector<2x3xf32>
    %665 = arith.addf %662, %664 : vector<2x3xf32>
    %c0_100 = arith.constant 0 : index
    %c0_101 = arith.constant 0 : index
    %666 = vector.load %arg19[%c0_100, %c0_101] : memref<2x3xf32, #tpu.memory_space<vmem>>, vector<2x3xf32>
    tpu.vector_store %arg19[%c0_100, %c0_101], %665 {strides = array<i32>} : memref<2x3xf32, #tpu.memory_space<vmem>>, vector<2x3xf32>,
    return
  }
}

</mosaic_0001>

<llo_original>
// kernel: inner_attention_forward.1
$region0: #{inner_attention_forward.1}
  #allocation0 [shape = 'u32[]', space=smem, size = 0x4, offset = 0x4, fixed_abs, tag = 'smem constant byte address 0x4 - core index']
  #allocation1 [shape = 'u32[144,128]{1,0:T(1,128)}', space=vmem, size = 0x12000, scoped, tag = 'internal scratch']
  #allocation2 [shape = 'f32[1,1]{1,0:T(1,128)S(1)}', space=vmem, size = 0x200, scoped, tag = 'scoped memory for inner_attention_forward.1']
  %s0 = inlined_call_operand.vmem [shape: s32[4,1], index: 0, kind: input, shape index: {}]
  %s1 = inlined_call_operand.vmem [shape: f32[4,8,32], index: 1, kind: input, shape index: {}]
  %s2 = inlined_call_operand.vmem [shape: f32[32,256], index: 2, kind: input, shape index: {}]
  %s3 = inlined_call_operand.vmem [shape: f32[1,256], index: 3, kind: input, shape index: {}]
  %s4 = inlined_call_operand.vmem [shape: f32[64,256], index: 4, kind: input, shape index: {}]
  %s5 = inlined_call_operand.vmem [shape: f32[64,64], index: 5, kind: input, shape index: {}]
  %s6 = inlined_call_operand.vmem [shape: f32[1,64], index: 6, kind: input, shape index: {}]
  %s7 = inlined_call_operand.vmem [shape: f32[64,64], index: 7, kind: input, shape index: {}]
  %s8 = inlined_call_operand.vmem [shape: f32[1,64], index: 8, kind: input, shape index: {}]
  %s9 = inlined_call_operand.vmem [shape: f32[1,64], index: 9, kind: input, shape index: {}]
  %s10 = inlined_call_operand.<no memory space> [shape: f32[1,1], index: 10, kind: input, shape index: {}]
  %s11 = inlined_call_operand.vmem [shape: f32[256,300], index: 11, kind: input, shape index: {}]
  %s12 = inlined_call_operand.vmem [shape: f32[1,300], index: 12, kind: input, shape index: {}]
  %s13 = inlined_call_operand.vmem [shape: f32[300,300], index: 13, kind: input, shape index: {}]
  %s14 = inlined_call_operand.vmem [shape: f32[1,300], index: 14, kind: input, shape index: {}]
  %s15 = inlined_call_operand.vmem [shape: f32[300,3], index: 15, kind: input, shape index: {}]
  %s16 = inlined_call_operand.vmem [shape: f32[1,3], index: 16, kind: input, shape index: {}]
  %s17 = inlined_call_operand.vmem [shape: f32[1,300], index: 17, kind: input, shape index: {}]
  %s18 = inlined_call_operand.vmem [shape: f32[1,300], index: 18, kind: input, shape index: {}]
  %s19 = inlined_call_operand.hbm [shape: f32[2,3], index: 19, kind: output, shape index: {}]
  %s20 = sld [smem:[#allocation0]]
  $region86: #{inner_attention_forward.1} parent=0
    _
  %s22 = ssub.s32 1, %s20
  %s23 = scalar_select 0, %s22, %s20
  %v24 = vstv %s10
  %25 = vst [vmem:[#allocation2] sm:$0x1] %v24
  $region1: #{inner_attention_forward.1} parent=0
    #allocation3 [shape = 'u8[1024]{0}', space=vmem, size = 0x400, scoped, tag = 'output window, operand 0, single buffered']
    #allocation4 [shape = 's32[1]{0}', space=sflag, size = 0x4, scoped, tag = 'scoped memory for inner_attention_forward.1']
    %26 = vsyncpa [#allocation4], 0
    // Predicated region
    $region2: #{inner_attention_forward.1} parent=1 // pred_check
      _
    $region3: #{inner_attention_forward.1} parent=1 // pred_check_branch
      %28 = sbr.rel (0) target = $region5
    $region4: #{inner_attention_forward.1} parent=1 // pred_region
      _
    $region5: #{inner_attention_forward.1} parent=1 // pred_fallthru
      _
    // Predicated region
    $region6: #{inner_attention_forward.1} parent=1 // pred_check
      _
    $region7: #{inner_attention_forward.1} parent=1 // pred_check_branch
      %30 = sbr.rel (0) target = $region9
    $region8: #{inner_attention_forward.1} parent=1 // pred_region
      _
    $region9: #{inner_attention_forward.1} parent=1 // pred_fallthru
      _
    // Predicated region
    $region10: #{inner_attention_forward.1} parent=1 // pred_check
      _
    $region11: #{inner_attention_forward.1} parent=1 // pred_check_branch
      %32 = sbr.rel (0) target = $region13
    $region12: #{inner_attention_forward.1} parent=1 // pred_region
      _
    $region13: #{inner_attention_forward.1} parent=1 // pred_fallthru
      _
    // Predicated region
    $region14: #{inner_attention_forward.1} parent=1 // pred_check
      _
    $region15: #{inner_attention_forward.1} parent=1 // pred_check_branch
      %34 = sbr.rel (0) target = $region17
    $region16: #{inner_attention_forward.1} parent=1 // pred_region
      _
    $region17: #{inner_attention_forward.1} parent=1 // pred_fallthru
      _
    // Predicated region
    $region18: #{inner_attention_forward.1} parent=1 // pred_check
      _
    $region19: #{inner_attention_forward.1} parent=1 // pred_check_branch
      %36 = sbr.rel (0) target = $region21
    $region20: #{inner_attention_forward.1} parent=1 // pred_region
      _
    $region21: #{inner_attention_forward.1} parent=1 // pred_fallthru
      _
    // Predicated region
    $region22: #{inner_attention_forward.1} parent=1 // pred_check
      _
    $region23: #{inner_attention_forward.1} parent=1 // pred_check_branch
      %38 = sbr.rel (0) target = $region25
    $region24: #{inner_attention_forward.1} parent=1 // pred_region
      _
    $region25: #{inner_attention_forward.1} parent=1 // pred_fallthru
      _
    // Predicated region
    $region26: #{inner_attention_forward.1} parent=1 // pred_check
      _
    $region27: #{inner_attention_forward.1} parent=1 // pred_check_branch
      %40 = sbr.rel (0) target = $region29
    $region28: #{inner_attention_forward.1} parent=1 // pred_region
      _
    $region29: #{inner_attention_forward.1} parent=1 // pred_fallthru
      _
    // Predicated region
    $region30: #{inner_attention_forward.1} parent=1 // pred_check
      _
    $region31: #{inner_attention_forward.1} parent=1 // pred_check_branch
      %42 = sbr.rel (0) target = $region33
    $region32: #{inner_attention_forward.1} parent=1 // pred_region
      _
    $region33: #{inner_attention_forward.1} parent=1 // pred_fallthru
      _
    // Predicated region
    $region34: #{inner_attention_forward.1} parent=1 // pred_check
      _
    $region35: #{inner_attention_forward.1} parent=1 // pred_check_branch
      %44 = sbr.rel (0) target = $region37
    $region36: #{inner_attention_forward.1} parent=1 // pred_region
      _
    $region37: #{inner_attention_forward.1} parent=1 // pred_fallthru
      _
    // Predicated region
    $region38: #{inner_attention_forward.1} parent=1 // pred_check
      _
    $region39: #{inner_attention_forward.1} parent=1 // pred_check_branch
      %46 = sbr.rel (0) target = $region41
    $region40: #{inner_attention_forward.1} parent=1 // pred_region
      _
    $region41: #{inner_attention_forward.1} parent=1 // pred_fallthru
      _
    // Predicated region
    $region42: #{inner_attention_forward.1} parent=1 // pred_check
      _
    $region43: #{inner_attention_forward.1} parent=1 // pred_check_branch
      %48 = sbr.rel (0) target = $region45
    $region44: #{inner_attention_forward.1} parent=1 // pred_region
      _
    $region45: #{inner_attention_forward.1} parent=1 // pred_fallthru
      _
    // Predicated region
    $region46: #{inner_attention_forward.1} parent=1 // pred_check
      _
    $region47: #{inner_attention_forward.1} parent=1 // pred_check_branch
      %50 = sbr.rel (0) target = $region49
    $region48: #{inner_attention_forward.1} parent=1 // pred_region
      _
    $region49: #{inner_attention_forward.1} parent=1 // pred_fallthru
      _
    // Predicated region
    $region50: #{inner_attention_forward.1} parent=1 // pred_check
      _
    $region51: #{inner_attention_forward.1} parent=1 // pred_check_branch
      %52 = sbr.rel (0) target = $region53
    $region52: #{inner_attention_forward.1} parent=1 // pred_region
      _
    $region53: #{inner_attention_forward.1} parent=1 // pred_fallthru
      _
    // Predicated region
    $region54: #{inner_attention_forward.1} parent=1 // pred_check
      _
    $region55: #{inner_attention_forward.1} parent=1 // pred_check_branch
      %54 = sbr.rel (0) target = $region57
    $region56: #{inner_attention_forward.1} parent=1 // pred_region
      _
    $region57: #{inner_attention_forward.1} parent=1 // pred_fallthru
      _
    // Predicated region
    $region58: #{inner_attention_forward.1} parent=1 // pred_check
      _
    $region59: #{inner_attention_forward.1} parent=1 // pred_check_branch
      %56 = sbr.rel (0) target = $region61
    $region60: #{inner_attention_forward.1} parent=1 // pred_region
      _
    $region61: #{inner_attention_forward.1} parent=1 // pred_fallthru
      _
    // Predicated region
    $region62: #{inner_attention_forward.1} parent=1 // pred_check
      _
    $region63: #{inner_attention_forward.1} parent=1 // pred_check_branch
      %58 = sbr.rel (0) target = $region65
    $region64: #{inner_attention_forward.1} parent=1 // pred_region
      _
    $region65: #{inner_attention_forward.1} parent=1 // pred_fallthru
      _
    // Predicated region
    $region66: #{inner_attention_forward.1} parent=1 // pred_check
      _
    $region67: #{inner_attention_forward.1} parent=1 // pred_check_branch
      %60 = sbr.rel (0) target = $region69
    $region68: #{inner_attention_forward.1} parent=1 // pred_region
      _
    $region69: #{inner_attention_forward.1} parent=1 // pred_fallthru
      _
    // Predicated region
    $region70: #{inner_attention_forward.1} parent=1 // pred_check
      _
    $region71: #{inner_attention_forward.1} parent=1 // pred_check_branch
      %62 = sbr.rel (0) target = $region73
    $region72: #{inner_attention_forward.1} parent=1 // pred_region
      _
    $region73: #{inner_attention_forward.1} parent=1 // pred_fallthru
      _
    // Predicated region
    $region74: #{inner_attention_forward.1} parent=1 // pred_check
      _
    $region75: #{inner_attention_forward.1} parent=1 // pred_check_branch
      %64 = sbr.rel (0) target = $region77
    $region76: #{inner_attention_forward.1} parent=1 // pred_region
      _
    $region77: #{inner_attention_forward.1} parent=1 // pred_fallthru
      _
    %v66 = vld [vmem:[%s1] sm:$0xff]
    %v67 = vld [vmem:[%s1 + $0x8] sm:$0xff]
    %v68 = vld [vmem:[%s1 + $0x10] sm:$0xff]
    %v69 = vld [vmem:[%s1 + $0x18] sm:$0xff]
    %v70 = vld [vmem:[%s2] sm:$0xff]
    %v71 = vld [vmem:[%s2 + $0x8] sm:$0xff]
    %v72 = vld [vmem:[%s2 + $0x10] sm:$0xff]
    %v73 = vld [vmem:[%s2 + $0x18] sm:$0xff]
    %v74 = vld [vmem:[%s2 + $0x20] sm:$0xff]
    %v75 = vld [vmem:[%s2 + $0x28] sm:$0xff]
    %v76 = vld [vmem:[%s2 + $0x30] sm:$0xff]
    %v77 = vld [vmem:[%s2 + $0x38] sm:$0xff]
    %v78 = vpack.c.bf16 %v67, %v66
    %v79 = vpack.c.bf16 %v69, %v68
    %v80 = vpack.c.bf16 %v72, %v70
    %v81 = vpack.c.bf16 %v73, %v71
    %v82 = vpack.c.bf16 %v76, %v74
    %v83 = vpack.c.bf16 %v77, %v75
    %v84 = vld [vmem:[%s3] sm:$0x3]
    %v86 = vlaneseq
    %v87 = vshrl.u32 %v86, 7
    %v88 = vsub.s32 0, %v87
    %v89 = vrot.slane %v84, %v88
    %v90 = vlaneseq
    %v91 = vshrl.u32 %v90, 7
    %v92 = vsub.s32 1, %v91
    %v93 = vrot.slane %v84, %v92
    %vm96 = vcmask 261120
    %v98 = vsel %vm96, %v78, 0
    %v101 = vsel %vm96, %v79, 0
    %103 = vmatprep.subr.bf16.mxu0 %v81
    %104 = vmatpush1.bf16.msra.mxu0 %v80
    %105 = vmatprep.subr.bf16.mxu0 %v83
    %106 = vmatpush1.bf16.msra.mxu0 %v82
    %107 = vmatprep.subr.bf16.mxu0 0
    %108 = vmatpush1.bf16.msra.mxu0 0
    %109 = vmatprep.subr.bf16.mxu0 0
    %110 = vmatpush1.bf16.msra.mxu0 0
    %111 = vmatprep.subr.bf16.mxu0 0
    %112 = vmatpush1.bf16.msra.mxu0 0
    %113 = vmatprep.subr.bf16.mxu0 0
    %114 = vmatpush1.bf16.msra.mxu0 0
    %115 = vmatprep.subr.bf16.mxu0 0
    %116 = vmatpush1.bf16.msra.mxu0 0
    %117 = vmatprep.subr.bf16.mxu0 0
    %118 = vmatpush1.bf16.msra.mxu0 0
    %119 = vmatprep.subr.bf16.mxu0 0
    %120 = vmatpush1.bf16.msra.mxu0 0
    %121 = vmatprep.subr.bf16.mxu0 0
    %122 = vmatpush1.bf16.msra.mxu0 0
    %123 = vmatprep.subr.bf16.mxu0 0
    %124 = vmatpush1.bf16.msra.mxu0 0
    %125 = vmatprep.subr.bf16.mxu0 0
    %126 = vmatpush1.bf16.msra.mxu0 0
    %127 = vmatprep.subr.bf16.mxu0 0
    %128 = vmatpush1.bf16.msra.mxu0 0
    %129 = vmatprep.subr.bf16.mxu0 0
    %130 = vmatpush1.bf16.msra.mxu0 0
    %131 = vmatprep.subr.bf16.mxu0 0
    %132 = vmatpush1.bf16.msra.mxu0 0
    %133 = vmatprep.subr.bf16.mxu0 0
    %134 = vmatpush1.bf16.msra.mxu0 0
    %135 = vmatprep.mubr.bf16.mxu0 0
    %136 = vmatmul.mubr.bf16.gmra.mrb[0].mxu0 %v98
    %v137 = vpop.f32.mrb[0].mxu0
    %v138 = vadd.f32 %v89, %v137
    %v139 = vpop.f32.mrb[0].mxu0
    %v140 = vadd.f32 %v93, %v139
    %v141 = vpop.f32.mrb[0].mxu0
    %v142 = vadd.f32 %v89, %v141
    %v143 = vpop.f32.mrb[0].mxu0
    %v144 = vadd.f32 %v93, %v143
    %145 = vmatprep.mubr.bf16.mxu0 0
    %146 = vmatmul.mubr.bf16.gmra.mrb[0].mxu0 %v101
    %v147 = vpop.f32.mrb[0].mxu0
    %v148 = vadd.f32 %v89, %v147
    %v149 = vpop.f32.mrb[0].mxu0
    %v150 = vadd.f32 %v93, %v149
    %v151 = vpop.f32.mrb[0].mxu0
    %v152 = vadd.f32 %v89, %v151
    %v153 = vpop.f32.mrb[0].mxu0
    %v154 = vadd.f32 %v93, %v153
    %155 = vdwg.mxu0
    %v156 = vld [vmem:[%s4] sm:$0xff]
    %v157 = vld [vmem:[%s4 + $0x8] sm:$0xff]
    %v158 = vld [vmem:[%s4 + $0x10] sm:$0xff]
    %v159 = vld [vmem:[%s4 + $0x18] sm:$0xff]
    %v160 = vld [vmem:[%s4 + $0x20] sm:$0xff]
    %v161 = vld [vmem:[%s4 + $0x28] sm:$0xff]
    %v162 = vld [vmem:[%s4 + $0x30] sm:$0xff]
    %v163 = vld [vmem:[%s4 + $0x38] sm:$0xff]
    %v164 = vld [vmem:[%s4 + $0x40] sm:$0xff]
    %v165 = vld [vmem:[%s4 + $0x48] sm:$0xff]
    %v166 = vld [vmem:[%s4 + $0x50] sm:$0xff]
    %v167 = vld [vmem:[%s4 + $0x58] sm:$0xff]
    %v168 = vld [vmem:[%s4 + $0x60] sm:$0xff]
    %v169 = vld [vmem:[%s4 + $0x68] sm:$0xff]
    %v170 = vld [vmem:[%s4 + $0x70] sm:$0xff]
    %v171 = vld [vmem:[%s4 + $0x78] sm:$0xff]
    %v172 = vpack.c.bf16 %v158, %v156
    %v173 = vpack.c.bf16 %v159, %v157
    %v174 = vpack.c.bf16 %v162, %v160
    %v175 = vpack.c.bf16 %v163, %v161
    %v176 = vpack.c.bf16 %v166, %v164
    %v177 = vpack.c.bf16 %v167, %v165
    %v178 = vpack.c.bf16 %v170, %v168
    %v179 = vpack.c.bf16 %v171, %v169
    %v180 = vlaneseq
    %v181 = vand.u32 %v180, 127
    %v182 = vld [vmem:[%s0] sm:$0xf]
    %183 = vset.pattern.permute.xlu0 0
    %184 = vperm.xlu0 %183, %v182
    %v185 = vpop.permute.xlu0 %184
    %vm186 = vcmp.lt.s32.totalorder %v181, %v185
    %v187 = vpack.c.bf16 0.0, 0.0
    %vm188 = vcmask 523264
    %v190 = vsel %vm188, %v187, 0
    %192 = vmatprep.subr.bf16.mxu0 %v173
    %193 = vmatpush1.bf16.msra.mxu0 %v172
    %194 = vmatprep.subr.bf16.mxu0 %v175
    %195 = vmatpush1.bf16.msra.mxu0 %v174
    %196 = vmatprep.subr.bf16.mxu0 %v177
    %197 = vmatpush1.bf16.msra.mxu0 %v176
    %198 = vmatprep.subr.bf16.mxu0 %v179
    %199 = vmatpush1.bf16.msra.mxu0 %v178
    %200 = vmatprep.subr.bf16.mxu0 0
    %201 = vmatpush1.bf16.msra.mxu0 0
    %202 = vmatprep.subr.bf16.mxu0 0
    %203 = vmatpush1.bf16.msra.mxu0 0
    %204 = vmatprep.subr.bf16.mxu0 0
    %205 = vmatpush1.bf16.msra.mxu0 0
    %206 = vmatprep.subr.bf16.mxu0 0
    %207 = vmatpush1.bf16.msra.mxu0 0
    %208 = vmatprep.subr.bf16.mxu0 0
    %209 = vmatpush1.bf16.msra.mxu0 0
    %210 = vmatprep.subr.bf16.mxu0 0
    %211 = vmatpush1.bf16.msra.mxu0 0
    %212 = vmatprep.subr.bf16.mxu0 0
    %213 = vmatpush1.bf16.msra.mxu0 0
    %214 = vmatprep.subr.bf16.mxu0 0
    %215 = vmatpush1.bf16.msra.mxu0 0
    %216 = vmatprep.subr.bf16.mxu0 0
    %217 = vmatpush1.bf16.msra.mxu0 0
    %218 = vmatprep.subr.bf16.mxu0 0
    %219 = vmatpush1.bf16.msra.mxu0 0
    %220 = vmatprep.subr.bf16.mxu0 0
    %221 = vmatpush1.bf16.msra.mxu0 0
    %222 = vmatprep.subr.bf16.mxu0 0
    %223 = vmatpush1.bf16.msra.mxu0 0
    %224 = vmatprep.mubr.bf16.mxu0 0
    %225 = vmatmul.mubr.bf16.gmra.mrb[0].mxu0 %v190
    %v226 = vpop.f32.mrb[0].mxu0
    %v227 = vadd.f32 0.0, %v226
    %v228 = vpop.f32.mrb[0].mxu0
    %v229 = vadd.f32 0.0, %v228
    %v230 = vpop.f32.mrb[0].mxu0
    %v231 = vpop.f32.mrb[0].mxu0
    %232 = vdwg.mxu0
    %v234 = vrot.slane %v227, 1
    %v235 = vrot.slane %v227, 2
    %v236 = vrot.slane %v227, 3
    %v241 = vadd.f32 %v138, %v227
    %v242 = vadd.f32 %v142, %v234
    %v243 = vadd.f32 %v148, %v235
    %v244 = vadd.f32 %v152, %v236
    %v245 = vxor.u32 %v241, 2147483648
    %v246 = vxor.u32 %v242, 2147483648
    %v247 = vxor.u32 %v243, 2147483648
    %v248 = vxor.u32 %v244, 2147483648
    %v249 = vmul.f32 %v245, 1.442695
    %v250 = vpow.pop %v249
    %v251 = vmul.f32 %v246, 1.442695
    %v252 = vpow.pop %v251
    %v253 = vmul.f32 %v247, 1.442695
    %v254 = vpow.pop %v253
    %v255 = vmul.f32 %v248, 1.442695
    %v256 = vpow.pop %v255
    %v257 = vadd.f32 %v250, 1.0
    %v258 = vadd.f32 %v252, 1.0
    %v259 = vadd.f32 %v254, 1.0
    %v260 = vadd.f32 %v256, 1.0
    %v261 = vrcp.pop %v257
    %v262 = vmul.f32 1.0, %v261
    %v263 = vrcp.pop %v258
    %v264 = vmul.f32 1.0, %v263
    %v265 = vrcp.pop %v259
    %v266 = vmul.f32 1.0, %v265
    %v267 = vrcp.pop %v260
    %v268 = vmul.f32 1.0, %v267
    %v269 = vtanh.pop %v241
    %v270 = vtanh.pop %v242
    %v271 = vtanh.pop %v243
    %v272 = vtanh.pop %v244
    %v273 = vmul.f32 %v262, 0.0
    %v274 = vmul.f32 %v264, 0.0
    %v275 = vmul.f32 %v266, 0.0
    %v276 = vmul.f32 %v268, 0.0
    %281 = vrot.lane.b32.xlu0 %v269, 32
    %v282 = vpop.permute.xlu0 %281
    %283 = vrot.lane.b32.xlu0 %v270, 32
    %v284 = vpop.permute.xlu0 %283
    %285 = vrot.lane.b32.xlu0 %v271, 32
    %v286 = vpop.permute.xlu0 %285
    %287 = vrot.lane.b32.xlu0 %v272, 32
    %v288 = vpop.permute.xlu0 %287
    %v293 = vmul.f32 %v262, %v282
    %v294 = vmul.f32 %v264, %v284
    %v295 = vmul.f32 %v266, %v286
    %v296 = vmul.f32 %v268, %v288
    %301 = vrot.lane.b32.xlu0 %v293, 32
    %v302 = vpop.permute.xlu0 %301
    %303 = vrot.lane.b32.xlu0 %v294, 32
    %v304 = vpop.permute.xlu0 %303
    %305 = vrot.lane.b32.xlu0 %v295, 32
    %v306 = vpop.permute.xlu0 %305
    %307 = vrot.lane.b32.xlu0 %v296, 32
    %v308 = vpop.permute.xlu0 %307
    %v313 = vadd.f32 %v273, %v302
    %v314 = vadd.f32 %v274, %v304
    %v315 = vadd.f32 %v275, %v306
    %v316 = vadd.f32 %v276, %v308
    %v317 = vtanh.pop %v313
    %v318 = vtanh.pop %v314
    %v319 = vtanh.pop %v315
    %v320 = vtanh.pop %v316
    %325 = vrot.lane.b32.xlu0 %v317, 32
    %v326 = vpop.permute.xlu0 %325
    %327 = vrot.lane.b32.xlu0 %v318, 32
    %v328 = vpop.permute.xlu0 %327
    %329 = vrot.lane.b32.xlu0 %v319, 32
    %v330 = vpop.permute.xlu0 %329
    %331 = vrot.lane.b32.xlu0 %v320, 32
    %v332 = vpop.permute.xlu0 %331
    %v337 = vmul.f32 %v262, %v326
    %v338 = vmul.f32 %v264, %v328
    %v339 = vmul.f32 %v266, %v330
    %v340 = vmul.f32 %v268, %v332
    %v342 = vrot.slane %v229, 1
    %v343 = vrot.slane %v229, 2
    %v344 = vrot.slane %v229, 3
    %v345 = vrot.slane %v229, 4
    %v350 = vadd.f32 %v140, %v342
    %v351 = vadd.f32 %v144, %v343
    %v352 = vadd.f32 %v150, %v344
    %v353 = vadd.f32 %v154, %v345
    %v354 = vxor.u32 %v350, 2147483648
    %v355 = vxor.u32 %v351, 2147483648
    %v356 = vxor.u32 %v352, 2147483648
    %v357 = vxor.u32 %v353, 2147483648
    %v358 = vmul.f32 %v354, 1.442695
    %v359 = vpow.pop %v358
    %v360 = vmul.f32 %v355, 1.442695
    %v361 = vpow.pop %v360
    %v362 = vmul.f32 %v356, 1.442695
    %v363 = vpow.pop %v362
    %v364 = vmul.f32 %v357, 1.442695
    %v365 = vpow.pop %v364
    %v366 = vadd.f32 %v359, 1.0
    %v367 = vadd.f32 %v361, 1.0
    %v368 = vadd.f32 %v363, 1.0
    %v369 = vadd.f32 %v365, 1.0
    %v370 = vrcp.pop %v366
    %v371 = vmul.f32 1.0, %v370
    %v372 = vrcp.pop %v367
    %v373 = vmul.f32 1.0, %v372
    %v374 = vrcp.pop %v368
    %v375 = vmul.f32 1.0, %v374
    %v376 = vrcp.pop %v369
    %v377 = vmul.f32 1.0, %v376
    %v378 = vtanh.pop %v350
    %v379 = vtanh.pop %v351
    %v380 = vtanh.pop %v352
    %v381 = vtanh.pop %v353
    %v382 = vmul.f32 %v371, 0.0
    %v383 = vmul.f32 %v373, 0.0
    %v384 = vmul.f32 %v375, 0.0
    %v385 = vmul.f32 %v377, 0.0
    %390 = vrot.lane.b32.xlu0 %v378, 32
    %v391 = vpop.permute.xlu0 %390
    %392 = vrot.lane.b32.xlu0 %v379, 32
    %v393 = vpop.permute.xlu0 %392
    %394 = vrot.lane.b32.xlu0 %v380, 32
    %v395 = vpop.permute.xlu0 %394
    %396 = vrot.lane.b32.xlu0 %v381, 32
    %v397 = vpop.permute.xlu0 %396
    %v402 = vmul.f32 %v371, %v391
    %v403 = vmul.f32 %v373, %v393
    %v404 = vmul.f32 %v375, %v395
    %v405 = vmul.f32 %v377, %v397
    %410 = vrot.lane.b32.xlu0 %v402, 32
    %v411 = vpop.permute.xlu0 %410
    %412 = vrot.lane.b32.xlu0 %v403, 32
    %v413 = vpop.permute.xlu0 %412
    %414 = vrot.lane.b32.xlu0 %v404, 32
    %v415 = vpop.permute.xlu0 %414
    %416 = vrot.lane.b32.xlu0 %v405, 32
    %v417 = vpop.permute.xlu0 %416
    %v422 = vadd.f32 %v382, %v411
    %v423 = vadd.f32 %v383, %v413
    %v424 = vadd.f32 %v384, %v415
    %v425 = vadd.f32 %v385, %v417
    %v426 = vtanh.pop %v422
    %v427 = vtanh.pop %v423
    %v428 = vtanh.pop %v424
    %v429 = vtanh.pop %v425
    %434 = vrot.lane.b32.xlu0 %v426, 32
    %v435 = vpop.permute.xlu0 %434
    %436 = vrot.lane.b32.xlu0 %v427, 32
    %v437 = vpop.permute.xlu0 %436
    %438 = vrot.lane.b32.xlu0 %v428, 32
    %v439 = vpop.permute.xlu0 %438
    %440 = vrot.lane.b32.xlu0 %v429, 32
    %v441 = vpop.permute.xlu0 %440
    %v446 = vmul.f32 %v371, %v435
    %v447 = vmul.f32 %v373, %v437
    %v448 = vmul.f32 %v375, %v439
    %v449 = vmul.f32 %v377, %v441
    %v450 = vsel %vm186, 1, 0
    %451 = vset.pattern.permute.xlu0 0
    %452 = vperm.xlu0 %451, %v450
    %v453 = vpop.permute.xlu0 %452
    %vm454 = vcmp.eq.s32.totalorder %v453, 1
    %v459 = vrot.slane %v338, 7
    %vm460 = vcmask 1041409
    %v461 = vsel %vm460, %v459, %v337
    %v462 = vrot.slane %v339, 6
    %vm463 = vcmask 1042434
    %v464 = vsel %vm463, %v462, %v461
    %v465 = vrot.slane %v340, 5
    %vm466 = vcmask 1043459
    %v467 = vsel %vm466, %v465, %v464
    %468 = vrot.lane.b32.xlu0 %v467, 64
    %v469 = vpop.permute.xlu0 %468
    %v471 = vsel %vm454, %v469, 0.0
    %v476 = vrot.slane %v314, 7
    %v477 = vsel %vm460, %v476, %v313
    %v478 = vrot.slane %v315, 6
    %v479 = vsel %vm463, %v478, %v477
    %v480 = vrot.slane %v316, 5
    %v481 = vsel %vm466, %v480, %v479
    %482 = vrot.lane.b32.xlu0 %v481, 96
    %v483 = vpop.permute.xlu0 %482
    %v485 = vsel %vm454, %v483, 0.0
    %486 = vset.pattern.permute.xlu0 7
    %487 = vperm.xlu0 %486, %v450
    %v488 = vpop.permute.xlu0 %487
    %vm489 = vcmp.eq.s32.totalorder %v488, 1
    %v494 = vrot.slane %v446, 7
    %v495 = vrot.slane %v447, 6
    %v496 = vsel %vm460, %v495, %v494
    %v497 = vrot.slane %v448, 5
    %v498 = vsel %vm463, %v497, %v496
    %v499 = vrot.slane %v449, 4
    %v500 = vsel %vm466, %v499, %v498
    %501 = vrot.lane.b32.xlu0 %v500, 64
    %v502 = vpop.permute.xlu0 %501
    %v504 = vsel %vm489, %v502, 0.0
    %v509 = vrot.slane %v422, 7
    %v510 = vrot.slane %v423, 6
    %v511 = vsel %vm460, %v510, %v509
    %v512 = vrot.slane %v424, 5
    %v513 = vsel %vm463, %v512, %v511
    %v514 = vrot.slane %v425, 4
    %v515 = vsel %vm466, %v514, %v513
    %516 = vrot.lane.b32.xlu0 %v515, 96
    %v517 = vpop.permute.xlu0 %516
    %v519 = vsel %vm489, %v517, 0.0
    %521 = vrot.lane.b32.xlu0 %v504, 32
    %v522 = vpop.permute.xlu0 %521
    %v524 = vsel %vm96, %v471, %v522
    %v525 = vpack.c.bf16 %v524, %v524
    %v527 = vsel %vm188, %v525, 0
    %529 = vmatprep.subr.bf16.mxu0 %v173
    %530 = vmatpush1.bf16.msra.mxu0 %v172
    %531 = vmatprep.subr.bf16.mxu0 %v175
    %532 = vmatpush1.bf16.msra.mxu0 %v174
    %533 = vmatprep.subr.bf16.mxu0 %v177
    %534 = vmatpush1.bf16.msra.mxu0 %v176
    %535 = vmatprep.subr.bf16.mxu0 %v179
    %536 = vmatpush1.bf16.msra.mxu0 %v178
    %537 = vmatprep.subr.bf16.mxu0 0
    %538 = vmatpush1.bf16.msra.mxu0 0
    %539 = vmatprep.subr.bf16.mxu0 0
    %540 = vmatpush1.bf16.msra.mxu0 0
    %541 = vmatprep.subr.bf16.mxu0 0
    %542 = vmatpush1.bf16.msra.mxu0 0
    %543 = vmatprep.subr.bf16.mxu0 0
    %544 = vmatpush1.bf16.msra.mxu0 0
    %545 = vmatprep.subr.bf16.mxu0 0
    %546 = vmatpush1.bf16.msra.mxu0 0
    %547 = vmatprep.subr.bf16.mxu0 0
    %548 = vmatpush1.bf16.msra.mxu0 0
    %549 = vmatprep.subr.bf16.mxu0 0
    %550 = vmatpush1.bf16.msra.mxu0 0
    %551 = vmatprep.subr.bf16.mxu0 0
    %552 = vmatpush1.bf16.msra.mxu0 0
    %553 = vmatprep.subr.bf16.mxu0 0
    %554 = vmatpush1.bf16.msra.mxu0 0
    %555 = vmatprep.subr.bf16.mxu0 0
    %556 = vmatpush1.bf16.msra.mxu0 0
    %557 = vmatprep.subr.bf16.mxu0 0
    %558 = vmatpush1.bf16.msra.mxu0 0
    %559 = vmatprep.subr.bf16.mxu0 0
    %560 = vmatpush1.bf16.msra.mxu0 0
    %561 = vmatprep.mubr.bf16.mxu0 0
    %562 = vmatmul.mubr.bf16.gmra.mrb[0].mxu0 %v527
    %v563 = vpop.f32.mrb[0].mxu0
    %v564 = vadd.f32 0.0, %v563
    %v565 = vpop.f32.mrb[0].mxu0
    %v566 = vadd.f32 0.0, %v565
    %v567 = vpop.f32.mrb[0].mxu0
    %v568 = vpop.f32.mrb[0].mxu0
    %569 = vdwg.mxu0
    %v571 = vrot.slane %v564, 7
    %v572 = vrot.slane %v564, 1
    %v573 = vrot.slane %v564, 2
    %v578 = vadd.f32 %v138, %v571
    %v579 = vadd.f32 %v142, %v564
    %v580 = vadd.f32 %v148, %v572
    %v581 = vadd.f32 %v152, %v573
    %v582 = vxor.u32 %v578, 2147483648
    %v583 = vxor.u32 %v579, 2147483648
    %v584 = vxor.u32 %v580, 2147483648
    %v585 = vxor.u32 %v581, 2147483648
    %v586 = vmul.f32 %v582, 1.442695
    %v587 = vpow.pop %v586
    %v588 = vmul.f32 %v583, 1.442695
    %v589 = vpow.pop %v588
    %v590 = vmul.f32 %v584, 1.442695
    %v591 = vpow.pop %v590
    %v592 = vmul.f32 %v585, 1.442695
    %v593 = vpow.pop %v592
    %v594 = vadd.f32 %v587, 1.0
    %v595 = vadd.f32 %v589, 1.0
    %v596 = vadd.f32 %v591, 1.0
    %v597 = vadd.f32 %v593, 1.0
    %v598 = vrcp.pop %v594
    %v599 = vmul.f32 1.0, %v598
    %v600 = vrcp.pop %v595
    %v601 = vmul.f32 1.0, %v600
    %v602 = vrcp.pop %v596
    %v603 = vmul.f32 1.0, %v602
    %v604 = vrcp.pop %v597
    %v605 = vmul.f32 1.0, %v604
    %v606 = vtanh.pop %v578
    %v607 = vtanh.pop %v579
    %v608 = vtanh.pop %v580
    %v609 = vtanh.pop %v581
    %v611 = vrot.slane %v485, 7
    %v612 = vrot.slane %v485, 1
    %v613 = vrot.slane %v485, 2
    %614 = vrot.lane.b32.xlu0 %v611, 32
    %v615 = vpop.permute.xlu0 %614
    %616 = vrot.lane.b32.xlu0 %v485, 32
    %v617 = vpop.permute.xlu0 %616
    %618 = vrot.lane.b32.xlu0 %v612, 32
    %v619 = vpop.permute.xlu0 %618
    %620 = vrot.lane.b32.xlu0 %v613, 32
    %v621 = vpop.permute.xlu0 %620
    %v626 = vmul.f32 %v599, %v615
    %v627 = vmul.f32 %v601, %v617
    %v628 = vmul.f32 %v603, %v619
    %v629 = vmul.f32 %v605, %v621
    %634 = vrot.lane.b32.xlu0 %v606, 32
    %v635 = vpop.permute.xlu0 %634
    %636 = vrot.lane.b32.xlu0 %v607, 32
    %v637 = vpop.permute.xlu0 %636
    %638 = vrot.lane.b32.xlu0 %v608, 32
    %v639 = vpop.permute.xlu0 %638
    %640 = vrot.lane.b32.xlu0 %v609, 32
    %v641 = vpop.permute.xlu0 %640
    %v646 = vmul.f32 %v599, %v635
    %v647 = vmul.f32 %v601, %v637
    %v648 = vmul.f32 %v603, %v639
    %v649 = vmul.f32 %v605, %v641
    %654 = vrot.lane.b32.xlu0 %v646, 32
    %v655 = vpop.permute.xlu0 %654
    %656 = vrot.lane.b32.xlu0 %v647, 32
    %v657 = vpop.permute.xlu0 %656
    %658 = vrot.lane.b32.xlu0 %v648, 32
    %v659 = vpop.permute.xlu0 %658
    %660 = vrot.lane.b32.xlu0 %v649, 32
    %v661 = vpop.permute.xlu0 %660
    %v666 = vadd.f32 %v626, %v655
    %v667 = vadd.f32 %v627, %v657
    %v668 = vadd.f32 %v628, %v659
    %v669 = vadd.f32 %v629, %v661
    %v670 = vtanh.pop %v666
    %v671 = vtanh.pop %v667
    %v672 = vtanh.pop %v668
    %v673 = vtanh.pop %v669
    %678 = vrot.lane.b32.xlu0 %v670, 32
    %v679 = vpop.permute.xlu0 %678
    %680 = vrot.lane.b32.xlu0 %v671, 32
    %v681 = vpop.permute.xlu0 %680
    %682 = vrot.lane.b32.xlu0 %v672, 32
    %v683 = vpop.permute.xlu0 %682
    %684 = vrot.lane.b32.xlu0 %v673, 32
    %v685 = vpop.permute.xlu0 %684
    %v690 = vmul.f32 %v599, %v679
    %v691 = vmul.f32 %v601, %v681
    %v692 = vmul.f32 %v603, %v683
    %v693 = vmul.f32 %v605, %v685
    %v695 = vrot.slane %v566, 2
    %v696 = vrot.slane %v566, 3
    %v697 = vrot.slane %v566, 4
    %v698 = vrot.slane %v566, 5
    %v703 = vadd.f32 %v140, %v695
    %v704 = vadd.f32 %v144, %v696
    %v705 = vadd.f32 %v150, %v697
    %v706 = vadd.f32 %v154, %v698
    %v707 = vxor.u32 %v703, 2147483648
    %v708 = vxor.u32 %v704, 2147483648
    %v709 = vxor.u32 %v705, 2147483648
    %v710 = vxor.u32 %v706, 2147483648
    %v711 = vmul.f32 %v707, 1.442695
    %v712 = vpow.pop %v711
    %v713 = vmul.f32 %v708, 1.442695
    %v714 = vpow.pop %v713
    %v715 = vmul.f32 %v709, 1.442695
    %v716 = vpow.pop %v715
    %v717 = vmul.f32 %v710, 1.442695
    %v718 = vpow.pop %v717
    %v719 = vadd.f32 %v712, 1.0
    %v720 = vadd.f32 %v714, 1.0
    %v721 = vadd.f32 %v716, 1.0
    %v722 = vadd.f32 %v718, 1.0
    %v723 = vrcp.pop %v719
    %v724 = vmul.f32 1.0, %v723
    %v725 = vrcp.pop %v720
    %v726 = vmul.f32 1.0, %v725
    %v727 = vrcp.pop %v721
    %v728 = vmul.f32 1.0, %v727
    %v729 = vrcp.pop %v722
    %v730 = vmul.f32 1.0, %v729
    %v731 = vtanh.pop %v703
    %v732 = vtanh.pop %v704
    %v733 = vtanh.pop %v705
    %v734 = vtanh.pop %v706
    %v736 = vrot.slane %v519, 2
    %v737 = vrot.slane %v519, 3
    %v738 = vrot.slane %v519, 4
    %v739 = vrot.slane %v519, 5
    %740 = vrot.lane.b32.xlu0 %v736, 32
    %v741 = vpop.permute.xlu0 %740
    %742 = vrot.lane.b32.xlu0 %v737, 32
    %v743 = vpop.permute.xlu0 %742
    %744 = vrot.lane.b32.xlu0 %v738, 32
    %v745 = vpop.permute.xlu0 %744
    %746 = vrot.lane.b32.xlu0 %v739, 32
    %v747 = vpop.permute.xlu0 %746
    %v752 = vmul.f32 %v724, %v741
    %v753 = vmul.f32 %v726, %v743
    %v754 = vmul.f32 %v728, %v745
    %v755 = vmul.f32 %v730, %v747
    %760 = vrot.lane.b32.xlu0 %v731, 32
    %v761 = vpop.permute.xlu0 %760
    %762 = vrot.lane.b32.xlu0 %v732, 32
    %v763 = vpop.permute.xlu0 %762
    %764 = vrot.lane.b32.xlu0 %v733, 32
    %v765 = vpop.permute.xlu0 %764
    %766 = vrot.lane.b32.xlu0 %v734, 32
    %v767 = vpop.permute.xlu0 %766
    %v772 = vmul.f32 %v724, %v761
    %v773 = vmul.f32 %v726, %v763
    %v774 = vmul.f32 %v728, %v765
    %v775 = vmul.f32 %v730, %v767
    %780 = vrot.lane.b32.xlu0 %v772, 32
    %v781 = vpop.permute.xlu0 %780
    %782 = vrot.lane.b32.xlu0 %v773, 32
    %v783 = vpop.permute.xlu0 %782
    %784 = vrot.lane.b32.xlu0 %v774, 32
    %v785 = vpop.permute.xlu0 %784
    %786 = vrot.lane.b32.xlu0 %v775, 32
    %v787 = vpop.permute.xlu0 %786
    %v792 = vadd.f32 %v752, %v781
    %v793 = vadd.f32 %v753, %v783
    %v794 = vadd.f32 %v754, %v785
    %v795 = vadd.f32 %v755, %v787
    %v796 = vtanh.pop %v792
    %v797 = vtanh.pop %v793
    %v798 = vtanh.pop %v794
    %v799 = vtanh.pop %v795
    %804 = vrot.lane.b32.xlu0 %v796, 32
    %v805 = vpop.permute.xlu0 %804
    %806 = vrot.lane.b32.xlu0 %v797, 32
    %v807 = vpop.permute.xlu0 %806
    %808 = vrot.lane.b32.xlu0 %v798, 32
    %v809 = vpop.permute.xlu0 %808
    %810 = vrot.lane.b32.xlu0 %v799, 32
    %v811 = vpop.permute.xlu0 %810
    %v816 = vmul.f32 %v724, %v805
    %v817 = vmul.f32 %v726, %v807
    %v818 = vmul.f32 %v728, %v809
    %v819 = vmul.f32 %v730, %v811
    %820 = vset.pattern.permute.xlu0 1
    %821 = vperm.xlu0 %820, %v450
    %v822 = vpop.permute.xlu0 %821
    %vm823 = vcmp.eq.s32.totalorder %v822, 1
    %v828 = vrot.slane %v690, 1
    %v829 = vsel %vm460, %v691, %v828
    %v830 = vrot.slane %v692, 7
    %v831 = vsel %vm463, %v830, %v829
    %v832 = vrot.slane %v693, 6
    %v833 = vsel %vm466, %v832, %v831
    %834 = vrot.lane.b32.xlu0 %v833, 64
    %v835 = vpop.permute.xlu0 %834
    %v837 = vsel %vm823, %v835, %v471
    %v842 = vrot.slane %v666, 1
    %v843 = vsel %vm460, %v667, %v842
    %v844 = vrot.slane %v668, 7
    %v845 = vsel %vm463, %v844, %v843
    %v846 = vrot.slane %v669, 6
    %v847 = vsel %vm466, %v846, %v845
    %848 = vrot.lane.b32.xlu0 %v847, 96
    %v849 = vpop.permute.xlu0 %848
    %v851 = vsel %vm823, %v849, %v485
    %852 = vset.pattern.permute.xlu0 6
    %853 = vperm.xlu0 %852, %v450
    %v854 = vpop.permute.xlu0 %853
    %vm855 = vcmp.eq.s32.totalorder %v854, 1
    %v860 = vrot.slane %v816, 6
    %v861 = vrot.slane %v817, 5
    %v862 = vsel %vm460, %v861, %v860
    %v863 = vrot.slane %v818, 4
    %v864 = vsel %vm463, %v863, %v862
    %v865 = vrot.slane %v819, 3
    %v866 = vsel %vm466, %v865, %v864
    %867 = vrot.lane.b32.xlu0 %v866, 64
    %v868 = vpop.permute.xlu0 %867
    %v870 = vsel %vm855, %v868, %v504
    %v875 = vrot.slane %v792, 6
    %v876 = vrot.slane %v793, 5
    %v877 = vsel %vm460, %v876, %v875
    %v878 = vrot.slane %v794, 4
    %v879 = vsel %vm463, %v878, %v877
    %v880 = vrot.slane %v795, 3
    %v881 = vsel %vm466, %v880, %v879
    %882 = vrot.lane.b32.xlu0 %v881, 96
    %v883 = vpop.permute.xlu0 %882
    %v885 = vsel %vm855, %v883, %v519
    %v886 = vsel %vm823, %v835, 0.0
    %v887 = vsel %vm855, %v868, 0.0
    %889 = vrot.lane.b32.xlu0 %v870, 32
    %v890 = vpop.permute.xlu0 %889
    %v892 = vsel %vm96, %v837, %v890
    %v893 = vpack.c.bf16 %v892, %v892
    %v895 = vsel %vm188, %v893, 0
    %897 = vmatprep.subr.bf16.mxu0 %v173
    %898 = vmatpush1.bf16.msra.mxu0 %v172
    %899 = vmatprep.subr.bf16.mxu0 %v175
    %900 = vmatpush1.bf16.msra.mxu0 %v174
    %901 = vmatprep.subr.bf16.mxu0 %v177
    %902 = vmatpush1.bf16.msra.mxu0 %v176
    %903 = vmatprep.subr.bf16.mxu0 %v179
    %904 = vmatpush1.bf16.msra.mxu0 %v178
    %905 = vmatprep.subr.bf16.mxu0 0
    %906 = vmatpush1.bf16.msra.mxu0 0
    %907 = vmatprep.subr.bf16.mxu0 0
    %908 = vmatpush1.bf16.msra.mxu0 0
    %909 = vmatprep.subr.bf16.mxu0 0
    %910 = vmatpush1.bf16.msra.mxu0 0
    %911 = vmatprep.subr.bf16.mxu0 0
    %912 = vmatpush1.bf16.msra.mxu0 0
    %913 = vmatprep.subr.bf16.mxu0 0
    %914 = vmatpush1.bf16.msra.mxu0 0
    %915 = vmatprep.subr.bf16.mxu0 0
    %916 = vmatpush1.bf16.msra.mxu0 0
    %917 = vmatprep.subr.bf16.mxu0 0
    %918 = vmatpush1.bf16.msra.mxu0 0
    %919 = vmatprep.subr.bf16.mxu0 0
    %920 = vmatpush1.bf16.msra.mxu0 0
    %921 = vmatprep.subr.bf16.mxu0 0
    %922 = vmatpush1.bf16.msra.mxu0 0
    %923 = vmatprep.subr.bf16.mxu0 0
    %924 = vmatpush1.bf16.msra.mxu0 0
    %925 = vmatprep.subr.bf16.mxu0 0
    %926 = vmatpush1.bf16.msra.mxu0 0
    %927 = vmatprep.subr.bf16.mxu0 0
    %928 = vmatpush1.bf16.msra.mxu0 0
    %929 = vmatprep.mubr.bf16.mxu0 0
    %930 = vmatmul.mubr.bf16.gmra.mrb[0].mxu0 %v895
    %v931 = vpop.f32.mrb[0].mxu0
    %v932 = vadd.f32 0.0, %v931
    %v933 = vpop.f32.mrb[0].mxu0
    %v934 = vadd.f32 0.0, %v933
    %v935 = vpop.f32.mrb[0].mxu0
    %v936 = vpop.f32.mrb[0].mxu0
    %937 = vdwg.mxu0
    %v939 = vrot.slane %v932, 6
    %v940 = vrot.slane %v932, 7
    %v941 = vrot.slane %v932, 1
    %v946 = vadd.f32 %v138, %v939
    %v947 = vadd.f32 %v142, %v940
    %v948 = vadd.f32 %v148, %v932
    %v949 = vadd.f32 %v152, %v941
    %v950 = vxor.u32 %v946, 2147483648
    %v951 = vxor.u32 %v947, 2147483648
    %v952 = vxor.u32 %v948, 2147483648
    %v953 = vxor.u32 %v949, 2147483648
    %v954 = vmul.f32 %v950, 1.442695
    %v955 = vpow.pop %v954
    %v956 = vmul.f32 %v951, 1.442695
    %v957 = vpow.pop %v956
    %v958 = vmul.f32 %v952, 1.442695
    %v959 = vpow.pop %v958
    %v960 = vmul.f32 %v953, 1.442695
    %v961 = vpow.pop %v960
    %v962 = vadd.f32 %v955, 1.0
    %v963 = vadd.f32 %v957, 1.0
    %v964 = vadd.f32 %v959, 1.0
    %v965 = vadd.f32 %v961, 1.0
    %v966 = vrcp.pop %v962
    %v967 = vmul.f32 1.0, %v966
    %v968 = vrcp.pop %v963
    %v969 = vmul.f32 1.0, %v968
    %v970 = vrcp.pop %v964
    %v971 = vmul.f32 1.0, %v970
    %v972 = vrcp.pop %v965
    %v973 = vmul.f32 1.0, %v972
    %v974 = vtanh.pop %v946
    %v975 = vtanh.pop %v947
    %v976 = vtanh.pop %v948
    %v977 = vtanh.pop %v949
    %v979 = vrot.slane %v851, 6
    %v980 = vrot.slane %v851, 7
    %v981 = vrot.slane %v851, 1
    %982 = vrot.lane.b32.xlu0 %v979, 32
    %v983 = vpop.permute.xlu0 %982
    %984 = vrot.lane.b32.xlu0 %v980, 32
    %v985 = vpop.permute.xlu0 %984
    %986 = vrot.lane.b32.xlu0 %v851, 32
    %v987 = vpop.permute.xlu0 %986
    %988 = vrot.lane.b32.xlu0 %v981, 32
    %v989 = vpop.permute.xlu0 %988
    %v994 = vmul.f32 %v967, %v983
    %v995 = vmul.f32 %v969, %v985
    %v996 = vmul.f32 %v971, %v987
    %v997 = vmul.f32 %v973, %v989
    %1002 = vrot.lane.b32.xlu0 %v974, 32
    %v1003 = vpop.permute.xlu0 %1002
    %1004 = vrot.lane.b32.xlu0 %v975, 32
    %v1005 = vpop.permute.xlu0 %1004
    %1006 = vrot.lane.b32.xlu0 %v976, 32
    %v1007 = vpop.permute.xlu0 %1006
    %1008 = vrot.lane.b32.xlu0 %v977, 32
    %v1009 = vpop.permute.xlu0 %1008
    %v1014 = vmul.f32 %v967, %v1003
    %v1015 = vmul.f32 %v969, %v1005
    %v1016 = vmul.f32 %v971, %v1007
    %v1017 = vmul.f32 %v973, %v1009
    %1022 = vrot.lane.b32.xlu0 %v1014, 32
    %v1023 = vpop.permute.xlu0 %1022
    %1024 = vrot.lane.b32.xlu0 %v1015, 32
    %v1025 = vpop.permute.xlu0 %1024
    %1026 = vrot.lane.b32.xlu0 %v1016, 32
    %v1027 = vpop.permute.xlu0 %1026
    %1028 = vrot.lane.b32.xlu0 %v1017, 32
    %v1029 = vpop.permute.xlu0 %1028
    %v1034 = vadd.f32 %v994, %v1023
    %v1035 = vadd.f32 %v995, %v1025
    %v1036 = vadd.f32 %v996, %v1027
    %v1037 = vadd.f32 %v997, %v1029
    %v1038 = vtanh.pop %v1034
    %v1039 = vtanh.pop %v1035
    %v1040 = vtanh.pop %v1036
    %v1041 = vtanh.pop %v1037
    %1046 = vrot.lane.b32.xlu0 %v1038, 32
    %v1047 = vpop.permute.xlu0 %1046
    %1048 = vrot.lane.b32.xlu0 %v1039, 32
    %v1049 = vpop.permute.xlu0 %1048
    %1050 = vrot.lane.b32.xlu0 %v1040, 32
    %v1051 = vpop.permute.xlu0 %1050
    %1052 = vrot.lane.b32.xlu0 %v1041, 32
    %v1053 = vpop.permute.xlu0 %1052
    %v1058 = vmul.f32 %v967, %v1047
    %v1059 = vmul.f32 %v969, %v1049
    %v1060 = vmul.f32 %v971, %v1051
    %v1061 = vmul.f32 %v973, %v1053
    %v1063 = vrot.slane %v934, 3
    %v1064 = vrot.slane %v934, 4
    %v1065 = vrot.slane %v934, 5
    %v1066 = vrot.slane %v934, 6
    %v1071 = vadd.f32 %v140, %v1063
    %v1072 = vadd.f32 %v144, %v1064
    %v1073 = vadd.f32 %v150, %v1065
    %v1074 = vadd.f32 %v154, %v1066
    %v1075 = vxor.u32 %v1071, 2147483648
    %v1076 = vxor.u32 %v1072, 2147483648
    %v1077 = vxor.u32 %v1073, 2147483648
    %v1078 = vxor.u32 %v1074, 2147483648
    %v1079 = vmul.f32 %v1075, 1.442695
    %v1080 = vpow.pop %v1079
    %v1081 = vmul.f32 %v1076, 1.442695
    %v1082 = vpow.pop %v1081
    %v1083 = vmul.f32 %v1077, 1.442695
    %v1084 = vpow.pop %v1083
    %v1085 = vmul.f32 %v1078, 1.442695
    %v1086 = vpow.pop %v1085
    %v1087 = vadd.f32 %v1080, 1.0
    %v1088 = vadd.f32 %v1082, 1.0
    %v1089 = vadd.f32 %v1084, 1.0
    %v1090 = vadd.f32 %v1086, 1.0
    %v1091 = vrcp.pop %v1087
    %v1092 = vmul.f32 1.0, %v1091
    %v1093 = vrcp.pop %v1088
    %v1094 = vmul.f32 1.0, %v1093
    %v1095 = vrcp.pop %v1089
    %v1096 = vmul.f32 1.0, %v1095
    %v1097 = vrcp.pop %v1090
    %v1098 = vmul.f32 1.0, %v1097
    %v1099 = vtanh.pop %v1071
    %v1100 = vtanh.pop %v1072
    %v1101 = vtanh.pop %v1073
    %v1102 = vtanh.pop %v1074
    %v1104 = vrot.slane %v885, 3
    %v1105 = vrot.slane %v885, 4
    %v1106 = vrot.slane %v885, 5
    %v1107 = vrot.slane %v885, 6
    %1108 = vrot.lane.b32.xlu0 %v1104, 32
    %v1109 = vpop.permute.xlu0 %1108
    %1110 = vrot.lane.b32.xlu0 %v1105, 32
    %v1111 = vpop.permute.xlu0 %1110
    %1112 = vrot.lane.b32.xlu0 %v1106, 32
    %v1113 = vpop.permute.xlu0 %1112
    %1114 = vrot.lane.b32.xlu0 %v1107, 32
    %v1115 = vpop.permute.xlu0 %1114
    %v1120 = vmul.f32 %v1092, %v1109
    %v1121 = vmul.f32 %v1094, %v1111
    %v1122 = vmul.f32 %v1096, %v1113
    %v1123 = vmul.f32 %v1098, %v1115
    %1128 = vrot.lane.b32.xlu0 %v1099, 32
    %v1129 = vpop.permute.xlu0 %1128
    %1130 = vrot.lane.b32.xlu0 %v1100, 32
    %v1131 = vpop.permute.xlu0 %1130
    %1132 = vrot.lane.b32.xlu0 %v1101, 32
    %v1133 = vpop.permute.xlu0 %1132
    %1134 = vrot.lane.b32.xlu0 %v1102, 32
    %v1135 = vpop.permute.xlu0 %1134
    %v1140 = vmul.f32 %v1092, %v1129
    %v1141 = vmul.f32 %v1094, %v1131
    %v1142 = vmul.f32 %v1096, %v1133
    %v1143 = vmul.f32 %v1098, %v1135
    %1148 = vrot.lane.b32.xlu0 %v1140, 32
    %v1149 = vpop.permute.xlu0 %1148
    %1150 = vrot.lane.b32.xlu0 %v1141, 32
    %v1151 = vpop.permute.xlu0 %1150
    %1152 = vrot.lane.b32.xlu0 %v1142, 32
    %v1153 = vpop.permute.xlu0 %1152
    %1154 = vrot.lane.b32.xlu0 %v1143, 32
    %v1155 = vpop.permute.xlu0 %1154
    %v1160 = vadd.f32 %v1120, %v1149
    %v1161 = vadd.f32 %v1121, %v1151
    %v1162 = vadd.f32 %v1122, %v1153
    %v1163 = vadd.f32 %v1123, %v1155
    %v1164 = vtanh.pop %v1160
    %v1165 = vtanh.pop %v1161
    %v1166 = vtanh.pop %v1162
    %v1167 = vtanh.pop %v1163
    %1172 = vrot.lane.b32.xlu0 %v1164, 32
    %v1173 = vpop.permute.xlu0 %1172
    %1174 = vrot.lane.b32.xlu0 %v1165, 32
    %v1175 = vpop.permute.xlu0 %1174
    %1176 = vrot.lane.b32.xlu0 %v1166, 32
    %v1177 = vpop.permute.xlu0 %1176
    %1178 = vrot.lane.b32.xlu0 %v1167, 32
    %v1179 = vpop.permute.xlu0 %1178
    %v1184 = vmul.f32 %v1092, %v1173
    %v1185 = vmul.f32 %v1094, %v1175
    %v1186 = vmul.f32 %v1096, %v1177
    %v1187 = vmul.f32 %v1098, %v1179
    %1188 = vset.pattern.permute.xlu0 2
    %1189 = vperm.xlu0 %1188, %v450
    %v1190 = vpop.permute.xlu0 %1189
    %vm1191 = vcmp.eq.s32.totalorder %v1190, 1
    %v1196 = vrot.slane %v1058, 2
    %v1197 = vrot.slane %v1059, 1
    %v1198 = vsel %vm460, %v1197, %v1196
    %v1199 = vsel %vm463, %v1060, %v1198
    %v1200 = vrot.slane %v1061, 7
    %v1201 = vsel %vm466, %v1200, %v1199
    %1202 = vrot.lane.b32.xlu0 %v1201, 64
    %v1203 = vpop.permute.xlu0 %1202
    %v1205 = vsel %vm1191, %v1203, %v837
    %v1210 = vrot.slane %v1034, 2
    %v1211 = vrot.slane %v1035, 1
    %v1212 = vsel %vm460, %v1211, %v1210
    %v1213 = vsel %vm463, %v1036, %v1212
    %v1214 = vrot.slane %v1037, 7
    %v1215 = vsel %vm466, %v1214, %v1213
    %1216 = vrot.lane.b32.xlu0 %v1215, 96
    %v1217 = vpop.permute.xlu0 %1216
    %v1219 = vsel %vm1191, %v1217, %v851
    %1220 = vset.pattern.permute.xlu0 5
    %1221 = vperm.xlu0 %1220, %v450
    %v1222 = vpop.permute.xlu0 %1221
    %vm1223 = vcmp.eq.s32.totalorder %v1222, 1
    %v1228 = vrot.slane %v1184, 5
    %v1229 = vrot.slane %v1185, 4
    %v1230 = vsel %vm460, %v1229, %v1228
    %v1231 = vrot.slane %v1186, 3
    %v1232 = vsel %vm463, %v1231, %v1230
    %v1233 = vrot.slane %v1187, 2
    %v1234 = vsel %vm466, %v1233, %v1232
    %1235 = vrot.lane.b32.xlu0 %v1234, 64
    %v1236 = vpop.permute.xlu0 %1235
    %v1238 = vsel %vm1223, %v1236, %v870
    %v1243 = vrot.slane %v1160, 5
    %v1244 = vrot.slane %v1161, 4
    %v1245 = vsel %vm460, %v1244, %v1243
    %v1246 = vrot.slane %v1162, 3
    %v1247 = vsel %vm463, %v1246, %v1245
    %v1248 = vrot.slane %v1163, 2
    %v1249 = vsel %vm466, %v1248, %v1247
    %1250 = vrot.lane.b32.xlu0 %v1249, 96
    %v1251 = vpop.permute.xlu0 %1250
    %v1253 = vsel %vm1223, %v1251, %v885
    %v1254 = vsel %vm1191, %v1203, 0.0
    %v1255 = vsel %vm1223, %v1236, 0.0
    %1257 = vrot.lane.b32.xlu0 %v1238, 32
    %v1258 = vpop.permute.xlu0 %1257
    %v1260 = vsel %vm96, %v1205, %v1258
    %v1261 = vpack.c.bf16 %v1260, %v1260
    %v1263 = vsel %vm188, %v1261, 0
    %1265 = vmatprep.subr.bf16.mxu0 %v173
    %1266 = vmatpush1.bf16.msra.mxu0 %v172
    %1267 = vmatprep.subr.bf16.mxu0 %v175
    %1268 = vmatpush1.bf16.msra.mxu0 %v174
    %1269 = vmatprep.subr.bf16.mxu0 %v177
    %1270 = vmatpush1.bf16.msra.mxu0 %v176
    %1271 = vmatprep.subr.bf16.mxu0 %v179
    %1272 = vmatpush1.bf16.msra.mxu0 %v178
    %1273 = vmatprep.subr.bf16.mxu0 0
    %1274 = vmatpush1.bf16.msra.mxu0 0
    %1275 = vmatprep.subr.bf16.mxu0 0
    %1276 = vmatpush1.bf16.msra.mxu0 0
    %1277 = vmatprep.subr.bf16.mxu0 0
    %1278 = vmatpush1.bf16.msra.mxu0 0
    %1279 = vmatprep.subr.bf16.mxu0 0
    %1280 = vmatpush1.bf16.msra.mxu0 0
    %1281 = vmatprep.subr.bf16.mxu0 0
    %1282 = vmatpush1.bf16.msra.mxu0 0
    %1283 = vmatprep.subr.bf16.mxu0 0
    %1284 = vmatpush1.bf16.msra.mxu0 0
    %1285 = vmatprep.subr.bf16.mxu0 0
    %1286 = vmatpush1.bf16.msra.mxu0 0
    %1287 = vmatprep.subr.bf16.mxu0 0
    %1288 = vmatpush1.bf16.msra.mxu0 0
    %1289 = vmatprep.subr.bf16.mxu0 0
    %1290 = vmatpush1.bf16.msra.mxu0 0
    %1291 = vmatprep.subr.bf16.mxu0 0
    %1292 = vmatpush1.bf16.msra.mxu0 0
    %1293 = vmatprep.subr.bf16.mxu0 0
    %1294 = vmatpush1.bf16.msra.mxu0 0
    %1295 = vmatprep.subr.bf16.mxu0 0
    %1296 = vmatpush1.bf16.msra.mxu0 0
    %1297 = vmatprep.mubr.bf16.mxu0 0
    %1298 = vmatmul.mubr.bf16.gmra.mrb[0].mxu0 %v1263
    %v1299 = vpop.f32.mrb[0].mxu0
    %v1300 = vadd.f32 0.0, %v1299
    %v1301 = vpop.f32.mrb[0].mxu0
    %v1302 = vadd.f32 0.0, %v1301
    %v1303 = vpop.f32.mrb[0].mxu0
    %v1304 = vpop.f32.mrb[0].mxu0
    %1305 = vdwg.mxu0
    %v1307 = vrot.slane %v1300, 5
    %v1308 = vrot.slane %v1300, 6
    %v1309 = vrot.slane %v1300, 7
    %v1314 = vadd.f32 %v138, %v1307
    %v1315 = vadd.f32 %v142, %v1308
    %v1316 = vadd.f32 %v148, %v1309
    %v1317 = vadd.f32 %v152, %v1300
    %v1318 = vxor.u32 %v1314, 2147483648
    %v1319 = vxor.u32 %v1315, 2147483648
    %v1320 = vxor.u32 %v1316, 2147483648
    %v1321 = vxor.u32 %v1317, 2147483648
    %v1322 = vmul.f32 %v1318, 1.442695
    %v1323 = vpow.pop %v1322
    %v1324 = vmul.f32 %v1319, 1.442695
    %v1325 = vpow.pop %v1324
    %v1326 = vmul.f32 %v1320, 1.442695
    %v1327 = vpow.pop %v1326
    %v1328 = vmul.f32 %v1321, 1.442695
    %v1329 = vpow.pop %v1328
    %v1330 = vadd.f32 %v1323, 1.0
    %v1331 = vadd.f32 %v1325, 1.0
    %v1332 = vadd.f32 %v1327, 1.0
    %v1333 = vadd.f32 %v1329, 1.0
    %v1334 = vrcp.pop %v1330
    %v1335 = vmul.f32 1.0, %v1334
    %v1336 = vrcp.pop %v1331
    %v1337 = vmul.f32 1.0, %v1336
    %v1338 = vrcp.pop %v1332
    %v1339 = vmul.f32 1.0, %v1338
    %v1340 = vrcp.pop %v1333
    %v1341 = vmul.f32 1.0, %v1340
    %v1342 = vtanh.pop %v1314
    %v1343 = vtanh.pop %v1315
    %v1344 = vtanh.pop %v1316
    %v1345 = vtanh.pop %v1317
    %v1347 = vrot.slane %v1219, 5
    %v1348 = vrot.slane %v1219, 6
    %v1349 = vrot.slane %v1219, 7
    %1350 = vrot.lane.b32.xlu0 %v1347, 32
    %v1351 = vpop.permute.xlu0 %1350
    %1352 = vrot.lane.b32.xlu0 %v1348, 32
    %v1353 = vpop.permute.xlu0 %1352
    %1354 = vrot.lane.b32.xlu0 %v1349, 32
    %v1355 = vpop.permute.xlu0 %1354
    %1356 = vrot.lane.b32.xlu0 %v1219, 32
    %v1357 = vpop.permute.xlu0 %1356
    %v1362 = vmul.f32 %v1335, %v1351
    %v1363 = vmul.f32 %v1337, %v1353
    %v1364 = vmul.f32 %v1339, %v1355
    %v1365 = vmul.f32 %v1341, %v1357
    %1370 = vrot.lane.b32.xlu0 %v1342, 32
    %v1371 = vpop.permute.xlu0 %1370
    %1372 = vrot.lane.b32.xlu0 %v1343, 32
    %v1373 = vpop.permute.xlu0 %1372
    %1374 = vrot.lane.b32.xlu0 %v1344, 32
    %v1375 = vpop.permute.xlu0 %1374
    %1376 = vrot.lane.b32.xlu0 %v1345, 32
    %v1377 = vpop.permute.xlu0 %1376
    %v1382 = vmul.f32 %v1335, %v1371
    %v1383 = vmul.f32 %v1337, %v1373
    %v1384 = vmul.f32 %v1339, %v1375
    %v1385 = vmul.f32 %v1341, %v1377
    %1390 = vrot.lane.b32.xlu0 %v1382, 32
    %v1391 = vpop.permute.xlu0 %1390
    %1392 = vrot.lane.b32.xlu0 %v1383, 32
    %v1393 = vpop.permute.xlu0 %1392
    %1394 = vrot.lane.b32.xlu0 %v1384, 32
    %v1395 = vpop.permute.xlu0 %1394
    %1396 = vrot.lane.b32.xlu0 %v1385, 32
    %v1397 = vpop.permute.xlu0 %1396
    %v1402 = vadd.f32 %v1362, %v1391
    %v1403 = vadd.f32 %v1363, %v1393
    %v1404 = vadd.f32 %v1364, %v1395
    %v1405 = vadd.f32 %v1365, %v1397
    %v1406 = vtanh.pop %v1402
    %v1407 = vtanh.pop %v1403
    %v1408 = vtanh.pop %v1404
    %v1409 = vtanh.pop %v1405
    %1414 = vrot.lane.b32.xlu0 %v1406, 32
    %v1415 = vpop.permute.xlu0 %1414
    %1416 = vrot.lane.b32.xlu0 %v1407, 32
    %v1417 = vpop.permute.xlu0 %1416
    %1418 = vrot.lane.b32.xlu0 %v1408, 32
    %v1419 = vpop.permute.xlu0 %1418
    %1420 = vrot.lane.b32.xlu0 %v1409, 32
    %v1421 = vpop.permute.xlu0 %1420
    %v1426 = vmul.f32 %v1335, %v1415
    %v1427 = vmul.f32 %v1337, %v1417
    %v1428 = vmul.f32 %v1339, %v1419
    %v1429 = vmul.f32 %v1341, %v1421
    %v1431 = vrot.slane %v1302, 4
    %v1432 = vrot.slane %v1302, 5
    %v1433 = vrot.slane %v1302, 6
    %v1434 = vrot.slane %v1302, 7
    %v1439 = vadd.f32 %v140, %v1431
    %v1440 = vadd.f32 %v144, %v1432
    %v1441 = vadd.f32 %v150, %v1433
    %v1442 = vadd.f32 %v154, %v1434
    %v1443 = vxor.u32 %v1439, 2147483648
    %v1444 = vxor.u32 %v1440, 2147483648
    %v1445 = vxor.u32 %v1441, 2147483648
    %v1446 = vxor.u32 %v1442, 2147483648
    %v1447 = vmul.f32 %v1443, 1.442695
    %v1448 = vpow.pop %v1447
    %v1449 = vmul.f32 %v1444, 1.442695
    %v1450 = vpow.pop %v1449
    %v1451 = vmul.f32 %v1445, 1.442695
    %v1452 = vpow.pop %v1451
    %v1453 = vmul.f32 %v1446, 1.442695
    %v1454 = vpow.pop %v1453
    %v1455 = vadd.f32 %v1448, 1.0
    %v1456 = vadd.f32 %v1450, 1.0
    %v1457 = vadd.f32 %v1452, 1.0
    %v1458 = vadd.f32 %v1454, 1.0
    %v1459 = vrcp.pop %v1455
    %v1460 = vmul.f32 1.0, %v1459
    %v1461 = vrcp.pop %v1456
    %v1462 = vmul.f32 1.0, %v1461
    %v1463 = vrcp.pop %v1457
    %v1464 = vmul.f32 1.0, %v1463
    %v1465 = vrcp.pop %v1458
    %v1466 = vmul.f32 1.0, %v1465
    %v1467 = vtanh.pop %v1439
    %v1468 = vtanh.pop %v1440
    %v1469 = vtanh.pop %v1441
    %v1470 = vtanh.pop %v1442
    %v1472 = vrot.slane %v1253, 4
    %v1473 = vrot.slane %v1253, 5
    %v1474 = vrot.slane %v1253, 6
    %v1475 = vrot.slane %v1253, 7
    %1476 = vrot.lane.b32.xlu0 %v1472, 32
    %v1477 = vpop.permute.xlu0 %1476
    %1478 = vrot.lane.b32.xlu0 %v1473, 32
    %v1479 = vpop.permute.xlu0 %1478
    %1480 = vrot.lane.b32.xlu0 %v1474, 32
    %v1481 = vpop.permute.xlu0 %1480
    %1482 = vrot.lane.b32.xlu0 %v1475, 32
    %v1483 = vpop.permute.xlu0 %1482
    %v1488 = vmul.f32 %v1460, %v1477
    %v1489 = vmul.f32 %v1462, %v1479
    %v1490 = vmul.f32 %v1464, %v1481
    %v1491 = vmul.f32 %v1466, %v1483
    %1496 = vrot.lane.b32.xlu0 %v1467, 32
    %v1497 = vpop.permute.xlu0 %1496
    %1498 = vrot.lane.b32.xlu0 %v1468, 32
    %v1499 = vpop.permute.xlu0 %1498
    %1500 = vrot.lane.b32.xlu0 %v1469, 32
    %v1501 = vpop.permute.xlu0 %1500
    %1502 = vrot.lane.b32.xlu0 %v1470, 32
    %v1503 = vpop.permute.xlu0 %1502
    %v1508 = vmul.f32 %v1460, %v1497
    %v1509 = vmul.f32 %v1462, %v1499
    %v1510 = vmul.f32 %v1464, %v1501
    %v1511 = vmul.f32 %v1466, %v1503
    %1516 = vrot.lane.b32.xlu0 %v1508, 32
    %v1517 = vpop.permute.xlu0 %1516
    %1518 = vrot.lane.b32.xlu0 %v1509, 32
    %v1519 = vpop.permute.xlu0 %1518
    %1520 = vrot.lane.b32.xlu0 %v1510, 32
    %v1521 = vpop.permute.xlu0 %1520
    %1522 = vrot.lane.b32.xlu0 %v1511, 32
    %v1523 = vpop.permute.xlu0 %1522
    %v1528 = vadd.f32 %v1488, %v1517
    %v1529 = vadd.f32 %v1489, %v1519
    %v1530 = vadd.f32 %v1490, %v1521
    %v1531 = vadd.f32 %v1491, %v1523
    %v1532 = vtanh.pop %v1528
    %v1533 = vtanh.pop %v1529
    %v1534 = vtanh.pop %v1530
    %v1535 = vtanh.pop %v1531
    %1540 = vrot.lane.b32.xlu0 %v1532, 32
    %v1541 = vpop.permute.xlu0 %1540
    %1542 = vrot.lane.b32.xlu0 %v1533, 32
    %v1543 = vpop.permute.xlu0 %1542
    %1544 = vrot.lane.b32.xlu0 %v1534, 32
    %v1545 = vpop.permute.xlu0 %1544
    %1546 = vrot.lane.b32.xlu0 %v1535, 32
    %v1547 = vpop.permute.xlu0 %1546
    %v1552 = vmul.f32 %v1460, %v1541
    %v1553 = vmul.f32 %v1462, %v1543
    %v1554 = vmul.f32 %v1464, %v1545
    %v1555 = vmul.f32 %v1466, %v1547
    %1556 = vset.pattern.permute.xlu0 3
    %1557 = vperm.xlu0 %1556, %v450
    %v1558 = vpop.permute.xlu0 %1557
    %vm1559 = vcmp.eq.s32.totalorder %v1558, 1
    %v1564 = vrot.slane %v1426, 3
    %v1565 = vrot.slane %v1427, 2
    %v1566 = vsel %vm460, %v1565, %v1564
    %v1567 = vrot.slane %v1428, 1
    %v1568 = vsel %vm463, %v1567, %v1566
    %v1569 = vsel %vm466, %v1429, %v1568
    %1570 = vrot.lane.b32.xlu0 %v1569, 64
    %v1571 = vpop.permute.xlu0 %1570
    %v1573 = vsel %vm1559, %v1571, %v1205
    %v1578 = vrot.slane %v1402, 3
    %v1579 = vrot.slane %v1403, 2
    %v1580 = vsel %vm460, %v1579, %v1578
    %v1581 = vrot.slane %v1404, 1
    %v1582 = vsel %vm463, %v1581, %v1580
    %v1583 = vsel %vm466, %v1405, %v1582
    %1584 = vrot.lane.b32.xlu0 %v1583, 96
    %v1585 = vpop.permute.xlu0 %1584
    %v1587 = vsel %vm1559, %v1585, %v1219
    %1588 = vset.pattern.permute.xlu0 4
    %1589 = vperm.xlu0 %1588, %v450
    %v1590 = vpop.permute.xlu0 %1589
    %vm1591 = vcmp.eq.s32.totalorder %v1590, 1
    %v1596 = vrot.slane %v1552, 4
    %v1597 = vrot.slane %v1553, 3
    %v1598 = vsel %vm460, %v1597, %v1596
    %v1599 = vrot.slane %v1554, 2
    %v1600 = vsel %vm463, %v1599, %v1598
    %v1601 = vrot.slane %v1555, 1
    %v1602 = vsel %vm466, %v1601, %v1600
    %1603 = vrot.lane.b32.xlu0 %v1602, 64
    %v1604 = vpop.permute.xlu0 %1603
    %v1606 = vsel %vm1591, %v1604, %v1238
    %v1611 = vrot.slane %v1528, 4
    %v1612 = vrot.slane %v1529, 3
    %v1613 = vsel %vm460, %v1612, %v1611
    %v1614 = vrot.slane %v1530, 2
    %v1615 = vsel %vm463, %v1614, %v1613
    %v1616 = vrot.slane %v1531, 1
    %v1617 = vsel %vm466, %v1616, %v1615
    %1618 = vrot.lane.b32.xlu0 %v1617, 96
    %v1619 = vpop.permute.xlu0 %1618
    %v1621 = vsel %vm1591, %v1619, %v1253
    %v1622 = vsel %vm1559, %v1571, 0.0
    %v1623 = vsel %vm1591, %v1604, 0.0
    %1625 = vrot.lane.b32.xlu0 %v1606, 32
    %v1626 = vpop.permute.xlu0 %1625
    %v1628 = vsel %vm96, %v1573, %v1626
    %v1629 = vpack.c.bf16 %v1628, %v1628
    %v1631 = vsel %vm188, %v1629, 0
    %1633 = vmatprep.subr.bf16.mxu0 %v173
    %1634 = vmatpush1.bf16.msra.mxu0 %v172
    %1635 = vmatprep.subr.bf16.mxu0 %v175
    %1636 = vmatpush1.bf16.msra.mxu0 %v174
    %1637 = vmatprep.subr.bf16.mxu0 %v177
    %1638 = vmatpush1.bf16.msra.mxu0 %v176
    %1639 = vmatprep.subr.bf16.mxu0 %v179
    %1640 = vmatpush1.bf16.msra.mxu0 %v178
    %1641 = vmatprep.subr.bf16.mxu0 0
    %1642 = vmatpush1.bf16.msra.mxu0 0
    %1643 = vmatprep.subr.bf16.mxu0 0
    %1644 = vmatpush1.bf16.msra.mxu0 0
    %1645 = vmatprep.subr.bf16.mxu0 0
    %1646 = vmatpush1.bf16.msra.mxu0 0
    %1647 = vmatprep.subr.bf16.mxu0 0
    %1648 = vmatpush1.bf16.msra.mxu0 0
    %1649 = vmatprep.subr.bf16.mxu0 0
    %1650 = vmatpush1.bf16.msra.mxu0 0
    %1651 = vmatprep.subr.bf16.mxu0 0
    %1652 = vmatpush1.bf16.msra.mxu0 0
    %1653 = vmatprep.subr.bf16.mxu0 0
    %1654 = vmatpush1.bf16.msra.mxu0 0
    %1655 = vmatprep.subr.bf16.mxu0 0
    %1656 = vmatpush1.bf16.msra.mxu0 0
    %1657 = vmatprep.subr.bf16.mxu0 0
    %1658 = vmatpush1.bf16.msra.mxu0 0
    %1659 = vmatprep.subr.bf16.mxu0 0
    %1660 = vmatpush1.bf16.msra.mxu0 0
    %1661 = vmatprep.subr.bf16.mxu0 0
    %1662 = vmatpush1.bf16.msra.mxu0 0
    %1663 = vmatprep.subr.bf16.mxu0 0
    %1664 = vmatpush1.bf16.msra.mxu0 0
    %1665 = vmatprep.mubr.bf16.mxu0 0
    %1666 = vmatmul.mubr.bf16.gmra.mrb[0].mxu0 %v1631
    %v1667 = vpop.f32.mrb[0].mxu0
    %v1668 = vadd.f32 0.0, %v1667
    %v1669 = vpop.f32.mrb[0].mxu0
    %v1670 = vadd.f32 0.0, %v1669
    %v1671 = vpop.f32.mrb[0].mxu0
    %v1672 = vpop.f32.mrb[0].mxu0
    %1673 = vdwg.mxu0
    %v1675 = vrot.slane %v1668, 4
    %v1676 = vrot.slane %v1668, 5
    %v1677 = vrot.slane %v1668, 6
    %v1678 = vrot.slane %v1668, 7
    %v1683 = vadd.f32 %v138, %v1675
    %v1684 = vadd.f32 %v142, %v1676
    %v1685 = vadd.f32 %v148, %v1677
    %v1686 = vadd.f32 %v152, %v1678
    %v1687 = vxor.u32 %v1683, 2147483648
    %v1688 = vxor.u32 %v1684, 2147483648
    %v1689 = vxor.u32 %v1685, 2147483648
    %v1690 = vxor.u32 %v1686, 2147483648
    %v1691 = vmul.f32 %v1687, 1.442695
    %v1692 = vpow.pop %v1691
    %v1693 = vmul.f32 %v1688, 1.442695
    %v1694 = vpow.pop %v1693
    %v1695 = vmul.f32 %v1689, 1.442695
    %v1696 = vpow.pop %v1695
    %v1697 = vmul.f32 %v1690, 1.442695
    %v1698 = vpow.pop %v1697
    %v1699 = vadd.f32 %v1692, 1.0
    %v1700 = vadd.f32 %v1694, 1.0
    %v1701 = vadd.f32 %v1696, 1.0
    %v1702 = vadd.f32 %v1698, 1.0
    %v1703 = vrcp.pop %v1699
    %v1704 = vmul.f32 1.0, %v1703
    %v1705 = vrcp.pop %v1700
    %v1706 = vmul.f32 1.0, %v1705
    %v1707 = vrcp.pop %v1701
    %v1708 = vmul.f32 1.0, %v1707
    %v1709 = vrcp.pop %v1702
    %v1710 = vmul.f32 1.0, %v1709
    %v1711 = vtanh.pop %v1683
    %v1712 = vtanh.pop %v1684
    %v1713 = vtanh.pop %v1685
    %v1714 = vtanh.pop %v1686
    %v1716 = vrot.slane %v1587, 4
    %v1717 = vrot.slane %v1587, 5
    %v1718 = vrot.slane %v1587, 6
    %v1719 = vrot.slane %v1587, 7
    %1720 = vrot.lane.b32.xlu0 %v1716, 32
    %v1721 = vpop.permute.xlu0 %1720
    %1722 = vrot.lane.b32.xlu0 %v1717, 32
    %v1723 = vpop.permute.xlu0 %1722
    %1724 = vrot.lane.b32.xlu0 %v1718, 32
    %v1725 = vpop.permute.xlu0 %1724
    %1726 = vrot.lane.b32.xlu0 %v1719, 32
    %v1727 = vpop.permute.xlu0 %1726
    %v1732 = vmul.f32 %v1704, %v1721
    %v1733 = vmul.f32 %v1706, %v1723
    %v1734 = vmul.f32 %v1708, %v1725
    %v1735 = vmul.f32 %v1710, %v1727
    %1740 = vrot.lane.b32.xlu0 %v1711, 32
    %v1741 = vpop.permute.xlu0 %1740
    %1742 = vrot.lane.b32.xlu0 %v1712, 32
    %v1743 = vpop.permute.xlu0 %1742
    %1744 = vrot.lane.b32.xlu0 %v1713, 32
    %v1745 = vpop.permute.xlu0 %1744
    %1746 = vrot.lane.b32.xlu0 %v1714, 32
    %v1747 = vpop.permute.xlu0 %1746
    %v1752 = vmul.f32 %v1704, %v1741
    %v1753 = vmul.f32 %v1706, %v1743
    %v1754 = vmul.f32 %v1708, %v1745
    %v1755 = vmul.f32 %v1710, %v1747
    %1760 = vrot.lane.b32.xlu0 %v1752, 32
    %v1761 = vpop.permute.xlu0 %1760
    %1762 = vrot.lane.b32.xlu0 %v1753, 32
    %v1763 = vpop.permute.xlu0 %1762
    %1764 = vrot.lane.b32.xlu0 %v1754, 32
    %v1765 = vpop.permute.xlu0 %1764
    %1766 = vrot.lane.b32.xlu0 %v1755, 32
    %v1767 = vpop.permute.xlu0 %1766
    %v1772 = vadd.f32 %v1732, %v1761
    %v1773 = vadd.f32 %v1733, %v1763
    %v1774 = vadd.f32 %v1734, %v1765
    %v1775 = vadd.f32 %v1735, %v1767
    %v1776 = vtanh.pop %v1772
    %v1777 = vtanh.pop %v1773
    %v1778 = vtanh.pop %v1774
    %v1779 = vtanh.pop %v1775
    %1784 = vrot.lane.b32.xlu0 %v1776, 32
    %v1785 = vpop.permute.xlu0 %1784
    %1786 = vrot.lane.b32.xlu0 %v1777, 32
    %v1787 = vpop.permute.xlu0 %1786
    %1788 = vrot.lane.b32.xlu0 %v1778, 32
    %v1789 = vpop.permute.xlu0 %1788
    %1790 = vrot.lane.b32.xlu0 %v1779, 32
    %v1791 = vpop.permute.xlu0 %1790
    %v1796 = vmul.f32 %v1704, %v1785
    %v1797 = vmul.f32 %v1706, %v1787
    %v1798 = vmul.f32 %v1708, %v1789
    %v1799 = vmul.f32 %v1710, %v1791
    %v1801 = vrot.slane %v1670, 5
    %v1802 = vrot.slane %v1670, 6
    %v1803 = vrot.slane %v1670, 7
    %v1808 = vadd.f32 %v140, %v1801
    %v1809 = vadd.f32 %v144, %v1802
    %v1810 = vadd.f32 %v150, %v1803
    %v1811 = vadd.f32 %v154, %v1670
    %v1812 = vxor.u32 %v1808, 2147483648
    %v1813 = vxor.u32 %v1809, 2147483648
    %v1814 = vxor.u32 %v1810, 2147483648
    %v1815 = vxor.u32 %v1811, 2147483648
    %v1816 = vmul.f32 %v1812, 1.442695
    %v1817 = vpow.pop %v1816
    %v1818 = vmul.f32 %v1813, 1.442695
    %v1819 = vpow.pop %v1818
    %v1820 = vmul.f32 %v1814, 1.442695
    %v1821 = vpow.pop %v1820
    %v1822 = vmul.f32 %v1815, 1.442695
    %v1823 = vpow.pop %v1822
    %v1824 = vadd.f32 %v1817, 1.0
    %v1825 = vadd.f32 %v1819, 1.0
    %v1826 = vadd.f32 %v1821, 1.0
    %v1827 = vadd.f32 %v1823, 1.0
    %v1828 = vrcp.pop %v1824
    %v1829 = vmul.f32 1.0, %v1828
    %v1830 = vrcp.pop %v1825
    %v1831 = vmul.f32 1.0, %v1830
    %v1832 = vrcp.pop %v1826
    %v1833 = vmul.f32 1.0, %v1832
    %v1834 = vrcp.pop %v1827
    %v1835 = vmul.f32 1.0, %v1834
    %v1836 = vtanh.pop %v1808
    %v1837 = vtanh.pop %v1809
    %v1838 = vtanh.pop %v1810
    %v1839 = vtanh.pop %v1811
    %v1841 = vrot.slane %v1621, 5
    %v1842 = vrot.slane %v1621, 6
    %v1843 = vrot.slane %v1621, 7
    %1844 = vrot.lane.b32.xlu0 %v1841, 32
    %v1845 = vpop.permute.xlu0 %1844
    %1846 = vrot.lane.b32.xlu0 %v1842, 32
    %v1847 = vpop.permute.xlu0 %1846
    %1848 = vrot.lane.b32.xlu0 %v1843, 32
    %v1849 = vpop.permute.xlu0 %1848
    %1850 = vrot.lane.b32.xlu0 %v1621, 32
    %v1851 = vpop.permute.xlu0 %1850
    %v1856 = vmul.f32 %v1829, %v1845
    %v1857 = vmul.f32 %v1831, %v1847
    %v1858 = vmul.f32 %v1833, %v1849
    %v1859 = vmul.f32 %v1835, %v1851
    %1864 = vrot.lane.b32.xlu0 %v1836, 32
    %v1865 = vpop.permute.xlu0 %1864
    %1866 = vrot.lane.b32.xlu0 %v1837, 32
    %v1867 = vpop.permute.xlu0 %1866
    %1868 = vrot.lane.b32.xlu0 %v1838, 32
    %v1869 = vpop.permute.xlu0 %1868
    %1870 = vrot.lane.b32.xlu0 %v1839, 32
    %v1871 = vpop.permute.xlu0 %1870
    %v1876 = vmul.f32 %v1829, %v1865
    %v1877 = vmul.f32 %v1831, %v1867
    %v1878 = vmul.f32 %v1833, %v1869
    %v1879 = vmul.f32 %v1835, %v1871
    %1884 = vrot.lane.b32.xlu0 %v1876, 32
    %v1885 = vpop.permute.xlu0 %1884
    %1886 = vrot.lane.b32.xlu0 %v1877, 32
    %v1887 = vpop.permute.xlu0 %1886
    %1888 = vrot.lane.b32.xlu0 %v1878, 32
    %v1889 = vpop.permute.xlu0 %1888
    %1890 = vrot.lane.b32.xlu0 %v1879, 32
    %v1891 = vpop.permute.xlu0 %1890
    %v1896 = vadd.f32 %v1856, %v1885
    %v1897 = vadd.f32 %v1857, %v1887
    %v1898 = vadd.f32 %v1858, %v1889
    %v1899 = vadd.f32 %v1859, %v1891
    %v1900 = vtanh.pop %v1896
    %v1901 = vtanh.pop %v1897
    %v1902 = vtanh.pop %v1898
    %v1903 = vtanh.pop %v1899
    %1908 = vrot.lane.b32.xlu0 %v1900, 32
    %v1909 = vpop.permute.xlu0 %1908
    %1910 = vrot.lane.b32.xlu0 %v1901, 32
    %v1911 = vpop.permute.xlu0 %1910
    %1912 = vrot.lane.b32.xlu0 %v1902, 32
    %v1913 = vpop.permute.xlu0 %1912
    %1914 = vrot.lane.b32.xlu0 %v1903, 32
    %v1915 = vpop.permute.xlu0 %1914
    %v1920 = vmul.f32 %v1829, %v1909
    %v1921 = vmul.f32 %v1831, %v1911
    %v1922 = vmul.f32 %v1833, %v1913
    %v1923 = vmul.f32 %v1835, %v1915
    %v1928 = vrot.slane %v1796, 4
    %v1929 = vrot.slane %v1797, 3
    %v1930 = vsel %vm460, %v1929, %v1928
    %v1931 = vrot.slane %v1798, 2
    %v1932 = vsel %vm463, %v1931, %v1930
    %v1933 = vrot.slane %v1799, 1
    %v1934 = vsel %vm466, %v1933, %v1932
    %1935 = vrot.lane.b32.xlu0 %v1934, 64
    %v1936 = vpop.permute.xlu0 %1935
    %v1938 = vsel %vm1591, %v1936, %v1573
    %v1943 = vrot.slane %v1772, 4
    %v1944 = vrot.slane %v1773, 3
    %v1945 = vsel %vm460, %v1944, %v1943
    %v1946 = vrot.slane %v1774, 2
    %v1947 = vsel %vm463, %v1946, %v1945
    %v1948 = vrot.slane %v1775, 1
    %v1949 = vsel %vm466, %v1948, %v1947
    %1950 = vrot.lane.b32.xlu0 %v1949, 96
    %v1951 = vpop.permute.xlu0 %1950
    %v1953 = vsel %vm1591, %v1951, %v1587
    %v1958 = vrot.slane %v1920, 3
    %v1959 = vrot.slane %v1921, 2
    %v1960 = vsel %vm460, %v1959, %v1958
    %v1961 = vrot.slane %v1922, 1
    %v1962 = vsel %vm463, %v1961, %v1960
    %v1963 = vsel %vm466, %v1923, %v1962
    %1964 = vrot.lane.b32.xlu0 %v1963, 64
    %v1965 = vpop.permute.xlu0 %1964
    %v1967 = vsel %vm1559, %v1965, %v1606
    %v1972 = vrot.slane %v1896, 3
    %v1973 = vrot.slane %v1897, 2
    %v1974 = vsel %vm460, %v1973, %v1972
    %v1975 = vrot.slane %v1898, 1
    %v1976 = vsel %vm463, %v1975, %v1974
    %v1977 = vsel %vm466, %v1899, %v1976
    %1978 = vrot.lane.b32.xlu0 %v1977, 96
    %v1979 = vpop.permute.xlu0 %1978
    %v1981 = vsel %vm1559, %v1979, %v1621
    %v1982 = vsel %vm1591, %v1936, 0.0
    %v1983 = vsel %vm1559, %v1965, 0.0
    %1985 = vrot.lane.b32.xlu0 %v1967, 32
    %v1986 = vpop.permute.xlu0 %1985
    %v1988 = vsel %vm96, %v1938, %v1986
    %v1989 = vpack.c.bf16 %v1988, %v1988
    %v1991 = vsel %vm188, %v1989, 0
    %1993 = vmatprep.subr.bf16.mxu0 %v173
    %1994 = vmatpush1.bf16.msra.mxu0 %v172
    %1995 = vmatprep.subr.bf16.mxu0 %v175
    %1996 = vmatpush1.bf16.msra.mxu0 %v174
    %1997 = vmatprep.subr.bf16.mxu0 %v177
    %1998 = vmatpush1.bf16.msra.mxu0 %v176
    %1999 = vmatprep.subr.bf16.mxu0 %v179
    %2000 = vmatpush1.bf16.msra.mxu0 %v178
    %2001 = vmatprep.subr.bf16.mxu0 0
    %2002 = vmatpush1.bf16.msra.mxu0 0
    %2003 = vmatprep.subr.bf16.mxu0 0
    %2004 = vmatpush1.bf16.msra.mxu0 0
    %2005 = vmatprep.subr.bf16.mxu0 0
    %2006 = vmatpush1.bf16.msra.mxu0 0
    %2007 = vmatprep.subr.bf16.mxu0 0
    %2008 = vmatpush1.bf16.msra.mxu0 0
    %2009 = vmatprep.subr.bf16.mxu0 0
    %2010 = vmatpush1.bf16.msra.mxu0 0
    %2011 = vmatprep.subr.bf16.mxu0 0
    %2012 = vmatpush1.bf16.msra.mxu0 0
    %2013 = vmatprep.subr.bf16.mxu0 0
    %2014 = vmatpush1.bf16.msra.mxu0 0
    %2015 = vmatprep.subr.bf16.mxu0 0
    %2016 = vmatpush1.bf16.msra.mxu0 0
    %2017 = vmatprep.subr.bf16.mxu0 0
    %2018 = vmatpush1.bf16.msra.mxu0 0
    %2019 = vmatprep.subr.bf16.mxu0 0
    %2020 = vmatpush1.bf16.msra.mxu0 0
    %2021 = vmatprep.subr.bf16.mxu0 0
    %2022 = vmatpush1.bf16.msra.mxu0 0
    %2023 = vmatprep.subr.bf16.mxu0 0
    %2024 = vmatpush1.bf16.msra.mxu0 0
    %2025 = vmatprep.mubr.bf16.mxu0 0
    %2026 = vmatmul.mubr.bf16.gmra.mrb[0].mxu0 %v1991
    %v2027 = vpop.f32.mrb[0].mxu0
    %v2028 = vadd.f32 0.0, %v2027
    %v2029 = vpop.f32.mrb[0].mxu0
    %v2030 = vadd.f32 0.0, %v2029
    %v2031 = vpop.f32.mrb[0].mxu0
    %v2032 = vpop.f32.mrb[0].mxu0
    %2033 = vdwg.mxu0
    %v2035 = vrot.slane %v2028, 3
    %v2036 = vrot.slane %v2028, 4
    %v2037 = vrot.slane %v2028, 5
    %v2038 = vrot.slane %v2028, 6
    %v2043 = vadd.f32 %v138, %v2035
    %v2044 = vadd.f32 %v142, %v2036
    %v2045 = vadd.f32 %v148, %v2037
    %v2046 = vadd.f32 %v152, %v2038
    %v2047 = vxor.u32 %v2043, 2147483648
    %v2048 = vxor.u32 %v2044, 2147483648
    %v2049 = vxor.u32 %v2045, 2147483648
    %v2050 = vxor.u32 %v2046, 2147483648
    %v2051 = vmul.f32 %v2047, 1.442695
    %v2052 = vpow.pop %v2051
    %v2053 = vmul.f32 %v2048, 1.442695
    %v2054 = vpow.pop %v2053
    %v2055 = vmul.f32 %v2049, 1.442695
    %v2056 = vpow.pop %v2055
    %v2057 = vmul.f32 %v2050, 1.442695
    %v2058 = vpow.pop %v2057
    %v2059 = vadd.f32 %v2052, 1.0
    %v2060 = vadd.f32 %v2054, 1.0
    %v2061 = vadd.f32 %v2056, 1.0
    %v2062 = vadd.f32 %v2058, 1.0
    %v2063 = vrcp.pop %v2059
    %v2064 = vmul.f32 1.0, %v2063
    %v2065 = vrcp.pop %v2060
    %v2066 = vmul.f32 1.0, %v2065
    %v2067 = vrcp.pop %v2061
    %v2068 = vmul.f32 1.0, %v2067
    %v2069 = vrcp.pop %v2062
    %v2070 = vmul.f32 1.0, %v2069
    %v2071 = vtanh.pop %v2043
    %v2072 = vtanh.pop %v2044
    %v2073 = vtanh.pop %v2045
    %v2074 = vtanh.pop %v2046
    %v2076 = vrot.slane %v1953, 3
    %v2077 = vrot.slane %v1953, 4
    %v2078 = vrot.slane %v1953, 5
    %v2079 = vrot.slane %v1953, 6
    %2080 = vrot.lane.b32.xlu0 %v2076, 32
    %v2081 = vpop.permute.xlu0 %2080
    %2082 = vrot.lane.b32.xlu0 %v2077, 32
    %v2083 = vpop.permute.xlu0 %2082
    %2084 = vrot.lane.b32.xlu0 %v2078, 32
    %v2085 = vpop.permute.xlu0 %2084
    %2086 = vrot.lane.b32.xlu0 %v2079, 32
    %v2087 = vpop.permute.xlu0 %2086
    %v2092 = vmul.f32 %v2064, %v2081
    %v2093 = vmul.f32 %v2066, %v2083
    %v2094 = vmul.f32 %v2068, %v2085
    %v2095 = vmul.f32 %v2070, %v2087
    %2100 = vrot.lane.b32.xlu0 %v2071, 32
    %v2101 = vpop.permute.xlu0 %2100
    %2102 = vrot.lane.b32.xlu0 %v2072, 32
    %v2103 = vpop.permute.xlu0 %2102
    %2104 = vrot.lane.b32.xlu0 %v2073, 32
    %v2105 = vpop.permute.xlu0 %2104
    %2106 = vrot.lane.b32.xlu0 %v2074, 32
    %v2107 = vpop.permute.xlu0 %2106
    %v2112 = vmul.f32 %v2064, %v2101
    %v2113 = vmul.f32 %v2066, %v2103
    %v2114 = vmul.f32 %v2068, %v2105
    %v2115 = vmul.f32 %v2070, %v2107
    %2120 = vrot.lane.b32.xlu0 %v2112, 32
    %v2121 = vpop.permute.xlu0 %2120
    %2122 = vrot.lane.b32.xlu0 %v2113, 32
    %v2123 = vpop.permute.xlu0 %2122
    %2124 = vrot.lane.b32.xlu0 %v2114, 32
    %v2125 = vpop.permute.xlu0 %2124
    %2126 = vrot.lane.b32.xlu0 %v2115, 32
    %v2127 = vpop.permute.xlu0 %2126
    %v2132 = vadd.f32 %v2092, %v2121
    %v2133 = vadd.f32 %v2093, %v2123
    %v2134 = vadd.f32 %v2094, %v2125
    %v2135 = vadd.f32 %v2095, %v2127
    %v2136 = vtanh.pop %v2132
    %v2137 = vtanh.pop %v2133
    %v2138 = vtanh.pop %v2134
    %v2139 = vtanh.pop %v2135
    %2144 = vrot.lane.b32.xlu0 %v2136, 32
    %v2145 = vpop.permute.xlu0 %2144
    %2146 = vrot.lane.b32.xlu0 %v2137, 32
    %v2147 = vpop.permute.xlu0 %2146
    %2148 = vrot.lane.b32.xlu0 %v2138, 32
    %v2149 = vpop.permute.xlu0 %2148
    %2150 = vrot.lane.b32.xlu0 %v2139, 32
    %v2151 = vpop.permute.xlu0 %2150
    %v2156 = vmul.f32 %v2064, %v2145
    %v2157 = vmul.f32 %v2066, %v2147
    %v2158 = vmul.f32 %v2068, %v2149
    %v2159 = vmul.f32 %v2070, %v2151
    %v2161 = vrot.slane %v2030, 6
    %v2162 = vrot.slane %v2030, 7
    %v2163 = vrot.slane %v2030, 1
    %v2168 = vadd.f32 %v140, %v2161
    %v2169 = vadd.f32 %v144, %v2162
    %v2170 = vadd.f32 %v150, %v2030
    %v2171 = vadd.f32 %v154, %v2163
    %v2172 = vxor.u32 %v2168, 2147483648
    %v2173 = vxor.u32 %v2169, 2147483648
    %v2174 = vxor.u32 %v2170, 2147483648
    %v2175 = vxor.u32 %v2171, 2147483648
    %v2176 = vmul.f32 %v2172, 1.442695
    %v2177 = vpow.pop %v2176
    %v2178 = vmul.f32 %v2173, 1.442695
    %v2179 = vpow.pop %v2178
    %v2180 = vmul.f32 %v2174, 1.442695
    %v2181 = vpow.pop %v2180
    %v2182 = vmul.f32 %v2175, 1.442695
    %v2183 = vpow.pop %v2182
    %v2184 = vadd.f32 %v2177, 1.0
    %v2185 = vadd.f32 %v2179, 1.0
    %v2186 = vadd.f32 %v2181, 1.0
    %v2187 = vadd.f32 %v2183, 1.0
    %v2188 = vrcp.pop %v2184
    %v2189 = vmul.f32 1.0, %v2188
    %v2190 = vrcp.pop %v2185
    %v2191 = vmul.f32 1.0, %v2190
    %v2192 = vrcp.pop %v2186
    %v2193 = vmul.f32 1.0, %v2192
    %v2194 = vrcp.pop %v2187
    %v2195 = vmul.f32 1.0, %v2194
    %v2196 = vtanh.pop %v2168
    %v2197 = vtanh.pop %v2169
    %v2198 = vtanh.pop %v2170
    %v2199 = vtanh.pop %v2171
    %v2201 = vrot.slane %v1981, 6
    %v2202 = vrot.slane %v1981, 7
    %v2203 = vrot.slane %v1981, 1
    %2204 = vrot.lane.b32.xlu0 %v2201, 32
    %v2205 = vpop.permute.xlu0 %2204
    %2206 = vrot.lane.b32.xlu0 %v2202, 32
    %v2207 = vpop.permute.xlu0 %2206
    %2208 = vrot.lane.b32.xlu0 %v1981, 32
    %v2209 = vpop.permute.xlu0 %2208
    %2210 = vrot.lane.b32.xlu0 %v2203, 32
    %v2211 = vpop.permute.xlu0 %2210
    %v2216 = vmul.f32 %v2189, %v2205
    %v2217 = vmul.f32 %v2191, %v2207
    %v2218 = vmul.f32 %v2193, %v2209
    %v2219 = vmul.f32 %v2195, %v2211
    %2224 = vrot.lane.b32.xlu0 %v2196, 32
    %v2225 = vpop.permute.xlu0 %2224
    %2226 = vrot.lane.b32.xlu0 %v2197, 32
    %v2227 = vpop.permute.xlu0 %2226
    %2228 = vrot.lane.b32.xlu0 %v2198, 32
    %v2229 = vpop.permute.xlu0 %2228
    %2230 = vrot.lane.b32.xlu0 %v2199, 32
    %v2231 = vpop.permute.xlu0 %2230
    %v2236 = vmul.f32 %v2189, %v2225
    %v2237 = vmul.f32 %v2191, %v2227
    %v2238 = vmul.f32 %v2193, %v2229
    %v2239 = vmul.f32 %v2195, %v2231
    %2244 = vrot.lane.b32.xlu0 %v2236, 32
    %v2245 = vpop.permute.xlu0 %2244
    %2246 = vrot.lane.b32.xlu0 %v2237, 32
    %v2247 = vpop.permute.xlu0 %2246
    %2248 = vrot.lane.b32.xlu0 %v2238, 32
    %v2249 = vpop.permute.xlu0 %2248
    %2250 = vrot.lane.b32.xlu0 %v2239, 32
    %v2251 = vpop.permute.xlu0 %2250
    %v2256 = vadd.f32 %v2216, %v2245
    %v2257 = vadd.f32 %v2217, %v2247
    %v2258 = vadd.f32 %v2218, %v2249
    %v2259 = vadd.f32 %v2219, %v2251
    %v2260 = vtanh.pop %v2256
    %v2261 = vtanh.pop %v2257
    %v2262 = vtanh.pop %v2258
    %v2263 = vtanh.pop %v2259
    %2268 = vrot.lane.b32.xlu0 %v2260, 32
    %v2269 = vpop.permute.xlu0 %2268
    %2270 = vrot.lane.b32.xlu0 %v2261, 32
    %v2271 = vpop.permute.xlu0 %2270
    %2272 = vrot.lane.b32.xlu0 %v2262, 32
    %v2273 = vpop.permute.xlu0 %2272
    %2274 = vrot.lane.b32.xlu0 %v2263, 32
    %v2275 = vpop.permute.xlu0 %2274
    %v2280 = vmul.f32 %v2189, %v2269
    %v2281 = vmul.f32 %v2191, %v2271
    %v2282 = vmul.f32 %v2193, %v2273
    %v2283 = vmul.f32 %v2195, %v2275
    %v2288 = vrot.slane %v2156, 5
    %v2289 = vrot.slane %v2157, 4
    %v2290 = vsel %vm460, %v2289, %v2288
    %v2291 = vrot.slane %v2158, 3
    %v2292 = vsel %vm463, %v2291, %v2290
    %v2293 = vrot.slane %v2159, 2
    %v2294 = vsel %vm466, %v2293, %v2292
    %2295 = vrot.lane.b32.xlu0 %v2294, 64
    %v2296 = vpop.permute.xlu0 %2295
    %v2298 = vsel %vm1223, %v2296, %v1938
    %v2303 = vrot.slane %v2132, 5
    %v2304 = vrot.slane %v2133, 4
    %v2305 = vsel %vm460, %v2304, %v2303
    %v2306 = vrot.slane %v2134, 3
    %v2307 = vsel %vm463, %v2306, %v2305
    %v2308 = vrot.slane %v2135, 2
    %v2309 = vsel %vm466, %v2308, %v2307
    %2310 = vrot.lane.b32.xlu0 %v2309, 96
    %v2311 = vpop.permute.xlu0 %2310
    %v2313 = vsel %vm1223, %v2311, %v1953
    %v2318 = vrot.slane %v2280, 2
    %v2319 = vrot.slane %v2281, 1
    %v2320 = vsel %vm460, %v2319, %v2318
    %v2321 = vsel %vm463, %v2282, %v2320
    %v2322 = vrot.slane %v2283, 7
    %v2323 = vsel %vm466, %v2322, %v2321
    %2324 = vrot.lane.b32.xlu0 %v2323, 64
    %v2325 = vpop.permute.xlu0 %2324
    %v2327 = vsel %vm1191, %v2325, %v1967
    %v2332 = vrot.slane %v2256, 2
    %v2333 = vrot.slane %v2257, 1
    %v2334 = vsel %vm460, %v2333, %v2332
    %v2335 = vsel %vm463, %v2258, %v2334
    %v2336 = vrot.slane %v2259, 7
    %v2337 = vsel %vm466, %v2336, %v2335
    %2338 = vrot.lane.b32.xlu0 %v2337, 96
    %v2339 = vpop.permute.xlu0 %2338
    %v2341 = vsel %vm1191, %v2339, %v1981
    %v2342 = vsel %vm1223, %v2296, 0.0
    %v2343 = vsel %vm1191, %v2325, 0.0
    %2345 = vrot.lane.b32.xlu0 %v2327, 32
    %v2346 = vpop.permute.xlu0 %2345
    %v2348 = vsel %vm96, %v2298, %v2346
    %v2349 = vpack.c.bf16 %v2348, %v2348
    %v2351 = vsel %vm188, %v2349, 0
    %2353 = vmatprep.subr.bf16.mxu0 %v173
    %2354 = vmatpush1.bf16.msra.mxu0 %v172
    %2355 = vmatprep.subr.bf16.mxu0 %v175
    %2356 = vmatpush1.bf16.msra.mxu0 %v174
    %2357 = vmatprep.subr.bf16.mxu0 %v177
    %2358 = vmatpush1.bf16.msra.mxu0 %v176
    %2359 = vmatprep.subr.bf16.mxu0 %v179
    %2360 = vmatpush1.bf16.msra.mxu0 %v178
    %2361 = vmatprep.subr.bf16.mxu0 0
    %2362 = vmatpush1.bf16.msra.mxu0 0
    %2363 = vmatprep.subr.bf16.mxu0 0
    %2364 = vmatpush1.bf16.msra.mxu0 0
    %2365 = vmatprep.subr.bf16.mxu0 0
    %2366 = vmatpush1.bf16.msra.mxu0 0
    %2367 = vmatprep.subr.bf16.mxu0 0
    %2368 = vmatpush1.bf16.msra.mxu0 0
    %2369 = vmatprep.subr.bf16.mxu0 0
    %2370 = vmatpush1.bf16.msra.mxu0 0
    %2371 = vmatprep.subr.bf16.mxu0 0
    %2372 = vmatpush1.bf16.msra.mxu0 0
    %2373 = vmatprep.subr.bf16.mxu0 0
    %2374 = vmatpush1.bf16.msra.mxu0 0
    %2375 = vmatprep.subr.bf16.mxu0 0
    %2376 = vmatpush1.bf16.msra.mxu0 0
    %2377 = vmatprep.subr.bf16.mxu0 0
    %2378 = vmatpush1.bf16.msra.mxu0 0
    %2379 = vmatprep.subr.bf16.mxu0 0
    %2380 = vmatpush1.bf16.msra.mxu0 0
    %2381 = vmatprep.subr.bf16.mxu0 0
    %2382 = vmatpush1.bf16.msra.mxu0 0
    %2383 = vmatprep.subr.bf16.mxu0 0
    %2384 = vmatpush1.bf16.msra.mxu0 0
    %2385 = vmatprep.mubr.bf16.mxu0 0
    %2386 = vmatmul.mubr.bf16.gmra.mrb[0].mxu0 %v2351
    %v2387 = vpop.f32.mrb[0].mxu0
    %v2388 = vadd.f32 0.0, %v2387
    %v2389 = vpop.f32.mrb[0].mxu0
    %v2390 = vadd.f32 0.0, %v2389
    %v2391 = vpop.f32.mrb[0].mxu0
    %v2392 = vpop.f32.mrb[0].mxu0
    %2393 = vdwg.mxu0
    %v2395 = vrot.slane %v2388, 2
    %v2396 = vrot.slane %v2388, 3
    %v2397 = vrot.slane %v2388, 4
    %v2398 = vrot.slane %v2388, 5
    %v2403 = vadd.f32 %v138, %v2395
    %v2404 = vadd.f32 %v142, %v2396
    %v2405 = vadd.f32 %v148, %v2397
    %v2406 = vadd.f32 %v152, %v2398
    %v2407 = vxor.u32 %v2403, 2147483648
    %v2408 = vxor.u32 %v2404, 2147483648
    %v2409 = vxor.u32 %v2405, 2147483648
    %v2410 = vxor.u32 %v2406, 2147483648
    %v2411 = vmul.f32 %v2407, 1.442695
    %v2412 = vpow.pop %v2411
    %v2413 = vmul.f32 %v2408, 1.442695
    %v2414 = vpow.pop %v2413
    %v2415 = vmul.f32 %v2409, 1.442695
    %v2416 = vpow.pop %v2415
    %v2417 = vmul.f32 %v2410, 1.442695
    %v2418 = vpow.pop %v2417
    %v2419 = vadd.f32 %v2412, 1.0
    %v2420 = vadd.f32 %v2414, 1.0
    %v2421 = vadd.f32 %v2416, 1.0
    %v2422 = vadd.f32 %v2418, 1.0
    %v2423 = vrcp.pop %v2419
    %v2424 = vmul.f32 1.0, %v2423
    %v2425 = vrcp.pop %v2420
    %v2426 = vmul.f32 1.0, %v2425
    %v2427 = vrcp.pop %v2421
    %v2428 = vmul.f32 1.0, %v2427
    %v2429 = vrcp.pop %v2422
    %v2430 = vmul.f32 1.0, %v2429
    %v2431 = vtanh.pop %v2403
    %v2432 = vtanh.pop %v2404
    %v2433 = vtanh.pop %v2405
    %v2434 = vtanh.pop %v2406
    %v2436 = vrot.slane %v2313, 2
    %v2437 = vrot.slane %v2313, 3
    %v2438 = vrot.slane %v2313, 4
    %v2439 = vrot.slane %v2313, 5
    %2440 = vrot.lane.b32.xlu0 %v2436, 32
    %v2441 = vpop.permute.xlu0 %2440
    %2442 = vrot.lane.b32.xlu0 %v2437, 32
    %v2443 = vpop.permute.xlu0 %2442
    %2444 = vrot.lane.b32.xlu0 %v2438, 32
    %v2445 = vpop.permute.xlu0 %2444
    %2446 = vrot.lane.b32.xlu0 %v2439, 32
    %v2447 = vpop.permute.xlu0 %2446
    %v2452 = vmul.f32 %v2424, %v2441
    %v2453 = vmul.f32 %v2426, %v2443
    %v2454 = vmul.f32 %v2428, %v2445
    %v2455 = vmul.f32 %v2430, %v2447
    %2460 = vrot.lane.b32.xlu0 %v2431, 32
    %v2461 = vpop.permute.xlu0 %2460
    %2462 = vrot.lane.b32.xlu0 %v2432, 32
    %v2463 = vpop.permute.xlu0 %2462
    %2464 = vrot.lane.b32.xlu0 %v2433, 32
    %v2465 = vpop.permute.xlu0 %2464
    %2466 = vrot.lane.b32.xlu0 %v2434, 32
    %v2467 = vpop.permute.xlu0 %2466
    %v2472 = vmul.f32 %v2424, %v2461
    %v2473 = vmul.f32 %v2426, %v2463
    %v2474 = vmul.f32 %v2428, %v2465
    %v2475 = vmul.f32 %v2430, %v2467
    %2480 = vrot.lane.b32.xlu0 %v2472, 32
    %v2481 = vpop.permute.xlu0 %2480
    %2482 = vrot.lane.b32.xlu0 %v2473, 32
    %v2483 = vpop.permute.xlu0 %2482
    %2484 = vrot.lane.b32.xlu0 %v2474, 32
    %v2485 = vpop.permute.xlu0 %2484
    %2486 = vrot.lane.b32.xlu0 %v2475, 32
    %v2487 = vpop.permute.xlu0 %2486
    %v2492 = vadd.f32 %v2452, %v2481
    %v2493 = vadd.f32 %v2453, %v2483
    %v2494 = vadd.f32 %v2454, %v2485
    %v2495 = vadd.f32 %v2455, %v2487
    %v2496 = vtanh.pop %v2492
    %v2497 = vtanh.pop %v2493
    %v2498 = vtanh.pop %v2494
    %v2499 = vtanh.pop %v2495
    %2504 = vrot.lane.b32.xlu0 %v2496, 32
    %v2505 = vpop.permute.xlu0 %2504
    %2506 = vrot.lane.b32.xlu0 %v2497, 32
    %v2507 = vpop.permute.xlu0 %2506
    %2508 = vrot.lane.b32.xlu0 %v2498, 32
    %v2509 = vpop.permute.xlu0 %2508
    %2510 = vrot.lane.b32.xlu0 %v2499, 32
    %v2511 = vpop.permute.xlu0 %2510
    %v2516 = vmul.f32 %v2424, %v2505
    %v2517 = vmul.f32 %v2426, %v2507
    %v2518 = vmul.f32 %v2428, %v2509
    %v2519 = vmul.f32 %v2430, %v2511
    %v2521 = vrot.slane %v2390, 7
    %v2522 = vrot.slane %v2390, 1
    %v2523 = vrot.slane %v2390, 2
    %v2528 = vadd.f32 %v140, %v2521
    %v2529 = vadd.f32 %v144, %v2390
    %v2530 = vadd.f32 %v150, %v2522
    %v2531 = vadd.f32 %v154, %v2523
    %v2532 = vxor.u32 %v2528, 2147483648
    %v2533 = vxor.u32 %v2529, 2147483648
    %v2534 = vxor.u32 %v2530, 2147483648
    %v2535 = vxor.u32 %v2531, 2147483648
    %v2536 = vmul.f32 %v2532, 1.442695
    %v2537 = vpow.pop %v2536
    %v2538 = vmul.f32 %v2533, 1.442695
    %v2539 = vpow.pop %v2538
    %v2540 = vmul.f32 %v2534, 1.442695
    %v2541 = vpow.pop %v2540
    %v2542 = vmul.f32 %v2535, 1.442695
    %v2543 = vpow.pop %v2542
    %v2544 = vadd.f32 %v2537, 1.0
    %v2545 = vadd.f32 %v2539, 1.0
    %v2546 = vadd.f32 %v2541, 1.0
    %v2547 = vadd.f32 %v2543, 1.0
    %v2548 = vrcp.pop %v2544
    %v2549 = vmul.f32 1.0, %v2548
    %v2550 = vrcp.pop %v2545
    %v2551 = vmul.f32 1.0, %v2550
    %v2552 = vrcp.pop %v2546
    %v2553 = vmul.f32 1.0, %v2552
    %v2554 = vrcp.pop %v2547
    %v2555 = vmul.f32 1.0, %v2554
    %v2556 = vtanh.pop %v2528
    %v2557 = vtanh.pop %v2529
    %v2558 = vtanh.pop %v2530
    %v2559 = vtanh.pop %v2531
    %v2561 = vrot.slane %v2341, 7
    %v2562 = vrot.slane %v2341, 1
    %v2563 = vrot.slane %v2341, 2
    %2564 = vrot.lane.b32.xlu0 %v2561, 32
    %v2565 = vpop.permute.xlu0 %2564
    %2566 = vrot.lane.b32.xlu0 %v2341, 32
    %v2567 = vpop.permute.xlu0 %2566
    %2568 = vrot.lane.b32.xlu0 %v2562, 32
    %v2569 = vpop.permute.xlu0 %2568
    %2570 = vrot.lane.b32.xlu0 %v2563, 32
    %v2571 = vpop.permute.xlu0 %2570
    %v2576 = vmul.f32 %v2549, %v2565
    %v2577 = vmul.f32 %v2551, %v2567
    %v2578 = vmul.f32 %v2553, %v2569
    %v2579 = vmul.f32 %v2555, %v2571
    %2584 = vrot.lane.b32.xlu0 %v2556, 32
    %v2585 = vpop.permute.xlu0 %2584
    %2586 = vrot.lane.b32.xlu0 %v2557, 32
    %v2587 = vpop.permute.xlu0 %2586
    %2588 = vrot.lane.b32.xlu0 %v2558, 32
    %v2589 = vpop.permute.xlu0 %2588
    %2590 = vrot.lane.b32.xlu0 %v2559, 32
    %v2591 = vpop.permute.xlu0 %2590
    %v2596 = vmul.f32 %v2549, %v2585
    %v2597 = vmul.f32 %v2551, %v2587
    %v2598 = vmul.f32 %v2553, %v2589
    %v2599 = vmul.f32 %v2555, %v2591
    %2604 = vrot.lane.b32.xlu0 %v2596, 32
    %v2605 = vpop.permute.xlu0 %2604
    %2606 = vrot.lane.b32.xlu0 %v2597, 32
    %v2607 = vpop.permute.xlu0 %2606
    %2608 = vrot.lane.b32.xlu0 %v2598, 32
    %v2609 = vpop.permute.xlu0 %2608
    %2610 = vrot.lane.b32.xlu0 %v2599, 32
    %v2611 = vpop.permute.xlu0 %2610
    %v2616 = vadd.f32 %v2576, %v2605
    %v2617 = vadd.f32 %v2577, %v2607
    %v2618 = vadd.f32 %v2578, %v2609
    %v2619 = vadd.f32 %v2579, %v2611
    %v2620 = vtanh.pop %v2616
    %v2621 = vtanh.pop %v2617
    %v2622 = vtanh.pop %v2618
    %v2623 = vtanh.pop %v2619
    %2628 = vrot.lane.b32.xlu0 %v2620, 32
    %v2629 = vpop.permute.xlu0 %2628
    %2630 = vrot.lane.b32.xlu0 %v2621, 32
    %v2631 = vpop.permute.xlu0 %2630
    %2632 = vrot.lane.b32.xlu0 %v2622, 32
    %v2633 = vpop.permute.xlu0 %2632
    %2634 = vrot.lane.b32.xlu0 %v2623, 32
    %v2635 = vpop.permute.xlu0 %2634
    %v2640 = vmul.f32 %v2549, %v2629
    %v2641 = vmul.f32 %v2551, %v2631
    %v2642 = vmul.f32 %v2553, %v2633
    %v2643 = vmul.f32 %v2555, %v2635
    %v2648 = vrot.slane %v2516, 6
    %v2649 = vrot.slane %v2517, 5
    %v2650 = vsel %vm460, %v2649, %v2648
    %v2651 = vrot.slane %v2518, 4
    %v2652 = vsel %vm463, %v2651, %v2650
    %v2653 = vrot.slane %v2519, 3
    %v2654 = vsel %vm466, %v2653, %v2652
    %2655 = vrot.lane.b32.xlu0 %v2654, 64
    %v2656 = vpop.permute.xlu0 %2655
    %v2658 = vsel %vm855, %v2656, %v2298
    %v2663 = vrot.slane %v2492, 6
    %v2664 = vrot.slane %v2493, 5
    %v2665 = vsel %vm460, %v2664, %v2663
    %v2666 = vrot.slane %v2494, 4
    %v2667 = vsel %vm463, %v2666, %v2665
    %v2668 = vrot.slane %v2495, 3
    %v2669 = vsel %vm466, %v2668, %v2667
    %2670 = vrot.lane.b32.xlu0 %v2669, 96
    %v2671 = vpop.permute.xlu0 %2670
    %v2673 = vsel %vm855, %v2671, %v2313
    %v2678 = vrot.slane %v2640, 1
    %v2679 = vsel %vm460, %v2641, %v2678
    %v2680 = vrot.slane %v2642, 7
    %v2681 = vsel %vm463, %v2680, %v2679
    %v2682 = vrot.slane %v2643, 6
    %v2683 = vsel %vm466, %v2682, %v2681
    %2684 = vrot.lane.b32.xlu0 %v2683, 64
    %v2685 = vpop.permute.xlu0 %2684
    %v2687 = vsel %vm823, %v2685, %v2327
    %v2692 = vrot.slane %v2616, 1
    %v2693 = vsel %vm460, %v2617, %v2692
    %v2694 = vrot.slane %v2618, 7
    %v2695 = vsel %vm463, %v2694, %v2693
    %v2696 = vrot.slane %v2619, 6
    %v2697 = vsel %vm466, %v2696, %v2695
    %2698 = vrot.lane.b32.xlu0 %v2697, 96
    %v2699 = vpop.permute.xlu0 %2698
    %v2701 = vsel %vm823, %v2699, %v2341
    %v2702 = vsel %vm855, %v2656, 0.0
    %v2703 = vsel %vm823, %v2685, 0.0
    %2705 = vrot.lane.b32.xlu0 %v2687, 32
    %v2706 = vpop.permute.xlu0 %2705
    %v2708 = vsel %vm96, %v2658, %v2706
    %v2709 = vpack.c.bf16 %v2708, %v2708
    %v2711 = vsel %vm188, %v2709, 0
    %2713 = vmatprep.subr.bf16.mxu0 %v173
    %2714 = vmatpush1.bf16.msra.mxu0 %v172
    %2715 = vmatprep.subr.bf16.mxu0 %v175
    %2716 = vmatpush1.bf16.msra.mxu0 %v174
    %2717 = vmatprep.subr.bf16.mxu0 %v177
    %2718 = vmatpush1.bf16.msra.mxu0 %v176
    %2719 = vmatprep.subr.bf16.mxu0 %v179
    %2720 = vmatpush1.bf16.msra.mxu0 %v178
    %2721 = vmatprep.subr.bf16.mxu0 0
    %2722 = vmatpush1.bf16.msra.mxu0 0
    %2723 = vmatprep.subr.bf16.mxu0 0
    %2724 = vmatpush1.bf16.msra.mxu0 0
    %2725 = vmatprep.subr.bf16.mxu0 0
    %2726 = vmatpush1.bf16.msra.mxu0 0
    %2727 = vmatprep.subr.bf16.mxu0 0
    %2728 = vmatpush1.bf16.msra.mxu0 0
    %2729 = vmatprep.subr.bf16.mxu0 0
    %2730 = vmatpush1.bf16.msra.mxu0 0
    %2731 = vmatprep.subr.bf16.mxu0 0
    %2732 = vmatpush1.bf16.msra.mxu0 0
    %2733 = vmatprep.subr.bf16.mxu0 0
    %2734 = vmatpush1.bf16.msra.mxu0 0
    %2735 = vmatprep.subr.bf16.mxu0 0
    %2736 = vmatpush1.bf16.msra.mxu0 0
    %2737 = vmatprep.subr.bf16.mxu0 0
    %2738 = vmatpush1.bf16.msra.mxu0 0
    %2739 = vmatprep.subr.bf16.mxu0 0
    %2740 = vmatpush1.bf16.msra.mxu0 0
    %2741 = vmatprep.subr.bf16.mxu0 0
    %2742 = vmatpush1.bf16.msra.mxu0 0
    %2743 = vmatprep.subr.bf16.mxu0 0
    %2744 = vmatpush1.bf16.msra.mxu0 0
    %2745 = vmatprep.mubr.bf16.mxu0 0
    %2746 = vmatmul.mubr.bf16.gmra.mrb[0].mxu0 %v2711
    %v2747 = vpop.f32.mrb[0].mxu0
    %v2748 = vadd.f32 0.0, %v2747
    %v2749 = vpop.f32.mrb[0].mxu0
    %v2750 = vadd.f32 0.0, %v2749
    %v2751 = vpop.f32.mrb[0].mxu0
    %v2752 = vpop.f32.mrb[0].mxu0
    %2753 = vdwg.mxu0
    %v2755 = vrot.slane %v2748, 1
    %v2756 = vrot.slane %v2748, 2
    %v2757 = vrot.slane %v2748, 3
    %v2758 = vrot.slane %v2748, 4
    %v2763 = vadd.f32 %v138, %v2755
    %v2764 = vadd.f32 %v142, %v2756
    %v2765 = vadd.f32 %v148, %v2757
    %v2766 = vadd.f32 %v152, %v2758
    %v2767 = vxor.u32 %v2763, 2147483648
    %v2768 = vxor.u32 %v2764, 2147483648
    %v2769 = vxor.u32 %v2765, 2147483648
    %v2770 = vxor.u32 %v2766, 2147483648
    %v2771 = vmul.f32 %v2767, 1.442695
    %v2772 = vpow.pop %v2771
    %v2773 = vmul.f32 %v2768, 1.442695
    %v2774 = vpow.pop %v2773
    %v2775 = vmul.f32 %v2769, 1.442695
    %v2776 = vpow.pop %v2775
    %v2777 = vmul.f32 %v2770, 1.442695
    %v2778 = vpow.pop %v2777
    %v2779 = vadd.f32 %v2772, 1.0
    %v2780 = vadd.f32 %v2774, 1.0
    %v2781 = vadd.f32 %v2776, 1.0
    %v2782 = vadd.f32 %v2778, 1.0
    %v2783 = vrcp.pop %v2779
    %v2784 = vmul.f32 1.0, %v2783
    %v2785 = vrcp.pop %v2780
    %v2786 = vmul.f32 1.0, %v2785
    %v2787 = vrcp.pop %v2781
    %v2788 = vmul.f32 1.0, %v2787
    %v2789 = vrcp.pop %v2782
    %v2790 = vmul.f32 1.0, %v2789
    %v2791 = vtanh.pop %v2763
    %v2792 = vtanh.pop %v2764
    %v2793 = vtanh.pop %v2765
    %v2794 = vtanh.pop %v2766
    %v2796 = vrot.slane %v2673, 1
    %v2797 = vrot.slane %v2673, 2
    %v2798 = vrot.slane %v2673, 3
    %v2799 = vrot.slane %v2673, 4
    %2800 = vrot.lane.b32.xlu0 %v2796, 32
    %v2801 = vpop.permute.xlu0 %2800
    %2802 = vrot.lane.b32.xlu0 %v2797, 32
    %v2803 = vpop.permute.xlu0 %2802
    %2804 = vrot.lane.b32.xlu0 %v2798, 32
    %v2805 = vpop.permute.xlu0 %2804
    %2806 = vrot.lane.b32.xlu0 %v2799, 32
    %v2807 = vpop.permute.xlu0 %2806
    %v2812 = vmul.f32 %v2784, %v2801
    %v2813 = vmul.f32 %v2786, %v2803
    %v2814 = vmul.f32 %v2788, %v2805
    %v2815 = vmul.f32 %v2790, %v2807
    %2820 = vrot.lane.b32.xlu0 %v2791, 32
    %v2821 = vpop.permute.xlu0 %2820
    %2822 = vrot.lane.b32.xlu0 %v2792, 32
    %v2823 = vpop.permute.xlu0 %2822
    %2824 = vrot.lane.b32.xlu0 %v2793, 32
    %v2825 = vpop.permute.xlu0 %2824
    %2826 = vrot.lane.b32.xlu0 %v2794, 32
    %v2827 = vpop.permute.xlu0 %2826
    %v2832 = vmul.f32 %v2784, %v2821
    %v2833 = vmul.f32 %v2786, %v2823
    %v2834 = vmul.f32 %v2788, %v2825
    %v2835 = vmul.f32 %v2790, %v2827
    %2840 = vrot.lane.b32.xlu0 %v2832, 32
    %v2841 = vpop.permute.xlu0 %2840
    %2842 = vrot.lane.b32.xlu0 %v2833, 32
    %v2843 = vpop.permute.xlu0 %2842
    %2844 = vrot.lane.b32.xlu0 %v2834, 32
    %v2845 = vpop.permute.xlu0 %2844
    %2846 = vrot.lane.b32.xlu0 %v2835, 32
    %v2847 = vpop.permute.xlu0 %2846
    %v2852 = vadd.f32 %v2812, %v2841
    %v2853 = vadd.f32 %v2813, %v2843
    %v2854 = vadd.f32 %v2814, %v2845
    %v2855 = vadd.f32 %v2815, %v2847
    %v2856 = vtanh.pop %v2852
    %v2857 = vtanh.pop %v2853
    %v2858 = vtanh.pop %v2854
    %v2859 = vtanh.pop %v2855
    %2864 = vrot.lane.b32.xlu0 %v2856, 32
    %v2865 = vpop.permute.xlu0 %2864
    %2866 = vrot.lane.b32.xlu0 %v2857, 32
    %v2867 = vpop.permute.xlu0 %2866
    %2868 = vrot.lane.b32.xlu0 %v2858, 32
    %v2869 = vpop.permute.xlu0 %2868
    %2870 = vrot.lane.b32.xlu0 %v2859, 32
    %v2871 = vpop.permute.xlu0 %2870
    %v2876 = vmul.f32 %v2784, %v2865
    %v2877 = vmul.f32 %v2786, %v2867
    %v2878 = vmul.f32 %v2788, %v2869
    %v2879 = vmul.f32 %v2790, %v2871
    %v2881 = vrot.slane %v2750, 1
    %v2882 = vrot.slane %v2750, 2
    %v2883 = vrot.slane %v2750, 3
    %v2888 = vadd.f32 %v140, %v2750
    %v2889 = vadd.f32 %v144, %v2881
    %v2890 = vadd.f32 %v150, %v2882
    %v2891 = vadd.f32 %v154, %v2883
    %v2892 = vxor.u32 %v2888, 2147483648
    %v2893 = vxor.u32 %v2889, 2147483648
    %v2894 = vxor.u32 %v2890, 2147483648
    %v2895 = vxor.u32 %v2891, 2147483648
    %v2896 = vmul.f32 %v2892, 1.442695
    %v2897 = vpow.pop %v2896
    %v2898 = vmul.f32 %v2893, 1.442695
    %v2899 = vpow.pop %v2898
    %v2900 = vmul.f32 %v2894, 1.442695
    %v2901 = vpow.pop %v2900
    %v2902 = vmul.f32 %v2895, 1.442695
    %v2903 = vpow.pop %v2902
    %v2904 = vadd.f32 %v2897, 1.0
    %v2905 = vadd.f32 %v2899, 1.0
    %v2906 = vadd.f32 %v2901, 1.0
    %v2907 = vadd.f32 %v2903, 1.0
    %v2908 = vrcp.pop %v2904
    %v2909 = vmul.f32 1.0, %v2908
    %v2910 = vrcp.pop %v2905
    %v2911 = vmul.f32 1.0, %v2910
    %v2912 = vrcp.pop %v2906
    %v2913 = vmul.f32 1.0, %v2912
    %v2914 = vrcp.pop %v2907
    %v2915 = vmul.f32 1.0, %v2914
    %v2916 = vtanh.pop %v2888
    %v2917 = vtanh.pop %v2889
    %v2918 = vtanh.pop %v2890
    %v2919 = vtanh.pop %v2891
    %v2921 = vrot.slane %v2701, 1
    %v2922 = vrot.slane %v2701, 2
    %v2923 = vrot.slane %v2701, 3
    %2924 = vrot.lane.b32.xlu0 %v2701, 32
    %v2925 = vpop.permute.xlu0 %2924
    %2926 = vrot.lane.b32.xlu0 %v2921, 32
    %v2927 = vpop.permute.xlu0 %2926
    %2928 = vrot.lane.b32.xlu0 %v2922, 32
    %v2929 = vpop.permute.xlu0 %2928
    %2930 = vrot.lane.b32.xlu0 %v2923, 32
    %v2931 = vpop.permute.xlu0 %2930
    %v2936 = vmul.f32 %v2909, %v2925
    %v2937 = vmul.f32 %v2911, %v2927
    %v2938 = vmul.f32 %v2913, %v2929
    %v2939 = vmul.f32 %v2915, %v2931
    %2944 = vrot.lane.b32.xlu0 %v2916, 32
    %v2945 = vpop.permute.xlu0 %2944
    %2946 = vrot.lane.b32.xlu0 %v2917, 32
    %v2947 = vpop.permute.xlu0 %2946
    %2948 = vrot.lane.b32.xlu0 %v2918, 32
    %v2949 = vpop.permute.xlu0 %2948
    %2950 = vrot.lane.b32.xlu0 %v2919, 32
    %v2951 = vpop.permute.xlu0 %2950
    %v2956 = vmul.f32 %v2909, %v2945
    %v2957 = vmul.f32 %v2911, %v2947
    %v2958 = vmul.f32 %v2913, %v2949
    %v2959 = vmul.f32 %v2915, %v2951
    %2964 = vrot.lane.b32.xlu0 %v2956, 32
    %v2965 = vpop.permute.xlu0 %2964
    %2966 = vrot.lane.b32.xlu0 %v2957, 32
    %v2967 = vpop.permute.xlu0 %2966
    %2968 = vrot.lane.b32.xlu0 %v2958, 32
    %v2969 = vpop.permute.xlu0 %2968
    %2970 = vrot.lane.b32.xlu0 %v2959, 32
    %v2971 = vpop.permute.xlu0 %2970
    %v2976 = vadd.f32 %v2936, %v2965
    %v2977 = vadd.f32 %v2937, %v2967
    %v2978 = vadd.f32 %v2938, %v2969
    %v2979 = vadd.f32 %v2939, %v2971
    %v2980 = vtanh.pop %v2976
    %v2981 = vtanh.pop %v2977
    %v2982 = vtanh.pop %v2978
    %v2983 = vtanh.pop %v2979
    %2988 = vrot.lane.b32.xlu0 %v2980, 32
    %v2989 = vpop.permute.xlu0 %2988
    %2990 = vrot.lane.b32.xlu0 %v2981, 32
    %v2991 = vpop.permute.xlu0 %2990
    %2992 = vrot.lane.b32.xlu0 %v2982, 32
    %v2993 = vpop.permute.xlu0 %2992
    %2994 = vrot.lane.b32.xlu0 %v2983, 32
    %v2995 = vpop.permute.xlu0 %2994
    %v3000 = vmul.f32 %v2909, %v2989
    %v3001 = vmul.f32 %v2911, %v2991
    %v3002 = vmul.f32 %v2913, %v2993
    %v3003 = vmul.f32 %v2915, %v2995
    %v3008 = vrot.slane %v2876, 7
    %v3009 = vrot.slane %v2877, 6
    %v3010 = vsel %vm460, %v3009, %v3008
    %v3011 = vrot.slane %v2878, 5
    %v3012 = vsel %vm463, %v3011, %v3010
    %v3013 = vrot.slane %v2879, 4
    %v3014 = vsel %vm466, %v3013, %v3012
    %3015 = vrot.lane.b32.xlu0 %v3014, 64
    %v3016 = vpop.permute.xlu0 %3015
    %v3018 = vsel %vm489, %v3016, 0.0
    %v3023 = vrot.slane %v3001, 7
    %v3024 = vsel %vm460, %v3023, %v3000
    %v3025 = vrot.slane %v3002, 6
    %v3026 = vsel %vm463, %v3025, %v3024
    %v3027 = vrot.slane %v3003, 5
    %v3028 = vsel %vm466, %v3027, %v3026
    %3029 = vrot.lane.b32.xlu0 %v3028, 64
    %v3030 = vpop.permute.xlu0 %3029
    %v3032 = vsel %vm454, %v3030, 0.0
    %3034 = vrot.lane.b32.xlu0 %v3032, 32
    %v3035 = vpop.permute.xlu0 %3034
    %v3037 = vsel %vm96, %v471, %v3035
    %3039 = vrot.lane.b32.xlu0 %v2703, 32
    %v3040 = vpop.permute.xlu0 %3039
    %v3042 = vsel %vm96, %v886, %v3040
    %3044 = vrot.lane.b32.xlu0 %v2343, 32
    %v3045 = vpop.permute.xlu0 %3044
    %v3047 = vsel %vm96, %v1254, %v3045
    %3049 = vrot.lane.b32.xlu0 %v1983, 32
    %v3050 = vpop.permute.xlu0 %3049
    %v3052 = vsel %vm96, %v1622, %v3050
    %3054 = vrot.lane.b32.xlu0 %v1623, 32
    %v3055 = vpop.permute.xlu0 %3054
    %v3057 = vsel %vm96, %v1982, %v3055
    %3059 = vrot.lane.b32.xlu0 %v1255, 32
    %v3060 = vpop.permute.xlu0 %3059
    %v3062 = vsel %vm96, %v2342, %v3060
    %3064 = vrot.lane.b32.xlu0 %v887, 32
    %v3065 = vpop.permute.xlu0 %3064
    %v3067 = vsel %vm96, %v2702, %v3065
    %v3068 = vsel %vm96, %v3018, %v522
    %v3071 = vunpack.c.l.s4 1966171168
    %v3072 = vunpack.c.0.s8 %v3071
    %v3073 = vlaneseq
    %v3074 = vshrl.u32 %v3073, 7
    %v3075 = vsub.s32 %v3072, %v3074
    %v3076 = vrot.slane %v3037, %v3075
    %v3077 = vcombine.high %v3076, %v3076
    %v3079 = vunpack.c.l.s4 1966171168
    %v3080 = vunpack.c.0.s8 %v3079
    %v3081 = vlaneseq
    %v3082 = vshrl.u32 %v3081, 7
    %v3083 = vsub.s32 %v3080, %v3082
    %v3084 = vrot.slane %v3076, %v3083
    %v3086 = vunpack.c.l.s4 1966171168
    %v3087 = vunpack.c.0.s8 %v3086
    %v3088 = vlaneseq
    %v3089 = vshrl.u32 %v3088, 7
    %v3090 = vsub.s32 %v3087, %v3089
    %v3091 = vrot.slane %v3077, %v3090
    %v3092 = vcombine.high %v3084, %v3084
    %v3093 = vcombine.high %v3091, %v3091
    %v3100 = vunpack.c.l.s4 1966171168
    %v3101 = vunpack.c.0.s8 %v3100
    %v3102 = vlaneseq
    %v3103 = vshrl.u32 %v3102, 7
    %v3104 = vsub.s32 %v3101, %v3103
    %v3105 = vrot.slane %v3042, %v3104
    %v3106 = vcombine.high %v3105, %v3105
    %v3108 = vunpack.c.l.s4 1966171168
    %v3109 = vunpack.c.0.s8 %v3108
    %v3110 = vlaneseq
    %v3111 = vshrl.u32 %v3110, 7
    %v3112 = vsub.s32 %v3109, %v3111
    %v3113 = vrot.slane %v3105, %v3112
    %v3115 = vunpack.c.l.s4 1966171168
    %v3116 = vunpack.c.0.s8 %v3115
    %v3117 = vlaneseq
    %v3118 = vshrl.u32 %v3117, 7
    %v3119 = vsub.s32 %v3116, %v3118
    %v3120 = vrot.slane %v3106, %v3119
    %v3121 = vcombine.high %v3113, %v3113
    %v3122 = vcombine.high %v3120, %v3120
    %v3125 = vunpack.c.l.s4 1966171168
    %v3126 = vunpack.c.0.s8 %v3125
    %v3127 = vlaneseq
    %v3128 = vshrl.u32 %v3127, 7
    %v3129 = vsub.s32 %v3126, %v3128
    %v3130 = vrot.slane %v3047, %v3129
    %v3131 = vcombine.high %v3130, %v3130
    %v3133 = vunpack.c.l.s4 1966171168
    %v3134 = vunpack.c.0.s8 %v3133
    %v3135 = vlaneseq
    %v3136 = vshrl.u32 %v3135, 7
    %v3137 = vsub.s32 %v3134, %v3136
    %v3138 = vrot.slane %v3130, %v3137
    %v3140 = vunpack.c.l.s4 1966171168
    %v3141 = vunpack.c.0.s8 %v3140
    %v3142 = vlaneseq
    %v3143 = vshrl.u32 %v3142, 7
    %v3144 = vsub.s32 %v3141, %v3143
    %v3145 = vrot.slane %v3131, %v3144
    %v3146 = vcombine.high %v3138, %v3138
    %v3147 = vcombine.high %v3145, %v3145
    %v3150 = vunpack.c.l.s4 1966171168
    %v3151 = vunpack.c.0.s8 %v3150
    %v3152 = vlaneseq
    %v3153 = vshrl.u32 %v3152, 7
    %v3154 = vsub.s32 %v3151, %v3153
    %v3155 = vrot.slane %v3052, %v3154
    %v3156 = vcombine.high %v3155, %v3155
    %v3158 = vunpack.c.l.s4 1966171168
    %v3159 = vunpack.c.0.s8 %v3158
    %v3160 = vlaneseq
    %v3161 = vshrl.u32 %v3160, 7
    %v3162 = vsub.s32 %v3159, %v3161
    %v3163 = vrot.slane %v3155, %v3162
    %v3165 = vunpack.c.l.s4 1966171168
    %v3166 = vunpack.c.0.s8 %v3165
    %v3167 = vlaneseq
    %v3168 = vshrl.u32 %v3167, 7
    %v3169 = vsub.s32 %v3166, %v3168
    %v3170 = vrot.slane %v3156, %v3169
    %v3171 = vcombine.high %v3163, %v3163
    %v3172 = vcombine.high %v3170, %v3170
    %v3175 = vunpack.c.l.s4 1966171168
    %v3176 = vunpack.c.0.s8 %v3175
    %v3177 = vlaneseq
    %v3178 = vshrl.u32 %v3177, 7
    %v3179 = vsub.s32 %v3176, %v3178
    %v3180 = vrot.slane %v3057, %v3179
    %v3181 = vcombine.high %v3180, %v3180
    %v3183 = vunpack.c.l.s4 1966171168
    %v3184 = vunpack.c.0.s8 %v3183
    %v3185 = vlaneseq
    %v3186 = vshrl.u32 %v3185, 7
    %v3187 = vsub.s32 %v3184, %v3186
    %v3188 = vrot.slane %v3180, %v3187
    %v3190 = vunpack.c.l.s4 1966171168
    %v3191 = vunpack.c.0.s8 %v3190
    %v3192 = vlaneseq
    %v3193 = vshrl.u32 %v3192, 7
    %v3194 = vsub.s32 %v3191, %v3193
    %v3195 = vrot.slane %v3181, %v3194
    %v3196 = vcombine.high %v3188, %v3188
    %v3197 = vcombine.high %v3195, %v3195
    %v3200 = vunpack.c.l.s4 1966171168
    %v3201 = vunpack.c.0.s8 %v3200
    %v3202 = vlaneseq
    %v3203 = vshrl.u32 %v3202, 7
    %v3204 = vsub.s32 %v3201, %v3203
    %v3205 = vrot.slane %v3062, %v3204
    %v3206 = vcombine.high %v3205, %v3205
    %v3208 = vunpack.c.l.s4 1966171168
    %v3209 = vunpack.c.0.s8 %v3208
    %v3210 = vlaneseq
    %v3211 = vshrl.u32 %v3210, 7
    %v3212 = vsub.s32 %v3209, %v3211
    %v3213 = vrot.slane %v3205, %v3212
    %v3215 = vunpack.c.l.s4 1966171168
    %v3216 = vunpack.c.0.s8 %v3215
    %v3217 = vlaneseq
    %v3218 = vshrl.u32 %v3217, 7
    %v3219 = vsub.s32 %v3216, %v3218
    %v3220 = vrot.slane %v3206, %v3219
    %v3221 = vcombine.high %v3213, %v3213
    %v3222 = vcombine.high %v3220, %v3220
    %v3225 = vunpack.c.l.s4 1966171168
    %v3226 = vunpack.c.0.s8 %v3225
    %v3227 = vlaneseq
    %v3228 = vshrl.u32 %v3227, 7
    %v3229 = vsub.s32 %v3226, %v3228
    %v3230 = vrot.slane %v3067, %v3229
    %v3231 = vcombine.high %v3230, %v3230
    %v3233 = vunpack.c.l.s4 1966171168
    %v3234 = vunpack.c.0.s8 %v3233
    %v3235 = vlaneseq
    %v3236 = vshrl.u32 %v3235, 7
    %v3237 = vsub.s32 %v3234, %v3236
    %v3238 = vrot.slane %v3230, %v3237
    %v3240 = vunpack.c.l.s4 1966171168
    %v3241 = vunpack.c.0.s8 %v3240
    %v3242 = vlaneseq
    %v3243 = vshrl.u32 %v3242, 7
    %v3244 = vsub.s32 %v3241, %v3243
    %v3245 = vrot.slane %v3231, %v3244
    %v3246 = vcombine.high %v3238, %v3238
    %v3247 = vcombine.high %v3245, %v3245
    %v3250 = vunpack.c.l.s4 1966171168
    %v3251 = vunpack.c.0.s8 %v3250
    %v3252 = vlaneseq
    %v3253 = vshrl.u32 %v3252, 7
    %v3254 = vsub.s32 %v3251, %v3253
    %v3255 = vrot.slane %v3068, %v3254
    %v3256 = vcombine.high %v3255, %v3255
    %v3258 = vunpack.c.l.s4 1966171168
    %v3259 = vunpack.c.0.s8 %v3258
    %v3260 = vlaneseq
    %v3261 = vshrl.u32 %v3260, 7
    %v3262 = vsub.s32 %v3259, %v3261
    %v3263 = vrot.slane %v3255, %v3262
    %v3265 = vunpack.c.l.s4 1966171168
    %v3266 = vunpack.c.0.s8 %v3265
    %v3267 = vlaneseq
    %v3268 = vshrl.u32 %v3267, 7
    %v3269 = vsub.s32 %v3266, %v3268
    %v3270 = vrot.slane %v3256, %v3269
    %v3271 = vcombine.high %v3263, %v3263
    %v3272 = vcombine.high %v3270, %v3270
    %v3273 = vlaneseq
    %v3274 = vshrl.u32 %v3273, 7
    %v3275 = vsub.s32 0, %v3274
    %v3276 = vrot.slane %v3113, %v3275
    %v3277 = vlaneseq
    %v3278 = vshrl.u32 %v3277, 7
    %v3279 = vsub.s32 0, %v3278
    %v3280 = vrot.slane %v3120, %v3279
    %v3281 = vlaneseq
    %v3282 = vshrl.u32 %v3281, 7
    %v3283 = vsub.s32 0, %v3282
    %v3284 = vrot.slane %v3121, %v3283
    %v3285 = vlaneseq
    %v3286 = vshrl.u32 %v3285, 7
    %v3287 = vsub.s32 0, %v3286
    %v3288 = vrot.slane %v3122, %v3287
    %v3293 = vlaneseq
    %v3294 = vshrl.u32 %v3293, 7
    %v3295 = vsub.s32 0, %v3294
    %v3296 = vrot.slane %v3138, %v3295
    %v3297 = vlaneseq
    %v3298 = vshrl.u32 %v3297, 7
    %v3299 = vsub.s32 0, %v3298
    %v3300 = vrot.slane %v3145, %v3299
    %v3301 = vlaneseq
    %v3302 = vshrl.u32 %v3301, 7
    %v3303 = vsub.s32 0, %v3302
    %v3304 = vrot.slane %v3146, %v3303
    %v3305 = vlaneseq
    %v3306 = vshrl.u32 %v3305, 7
    %v3307 = vsub.s32 0, %v3306
    %v3308 = vrot.slane %v3147, %v3307
    %v3313 = vlaneseq
    %v3314 = vshrl.u32 %v3313, 7
    %v3315 = vsub.s32 0, %v3314
    %v3316 = vrot.slane %v3163, %v3315
    %v3317 = vlaneseq
    %v3318 = vshrl.u32 %v3317, 7
    %v3319 = vsub.s32 0, %v3318
    %v3320 = vrot.slane %v3170, %v3319
    %v3321 = vlaneseq
    %v3322 = vshrl.u32 %v3321, 7
    %v3323 = vsub.s32 0, %v3322
    %v3324 = vrot.slane %v3171, %v3323
    %v3325 = vlaneseq
    %v3326 = vshrl.u32 %v3325, 7
    %v3327 = vsub.s32 0, %v3326
    %v3328 = vrot.slane %v3172, %v3327
    %v3333 = vlaneseq
    %v3334 = vshrl.u32 %v3333, 7
    %v3335 = vsub.s32 0, %v3334
    %v3336 = vrot.slane %v3188, %v3335
    %v3337 = vlaneseq
    %v3338 = vshrl.u32 %v3337, 7
    %v3339 = vsub.s32 0, %v3338
    %v3340 = vrot.slane %v3195, %v3339
    %v3341 = vlaneseq
    %v3342 = vshrl.u32 %v3341, 7
    %v3343 = vsub.s32 0, %v3342
    %v3344 = vrot.slane %v3196, %v3343
    %v3345 = vlaneseq
    %v3346 = vshrl.u32 %v3345, 7
    %v3347 = vsub.s32 0, %v3346
    %v3348 = vrot.slane %v3197, %v3347
    %v3353 = vlaneseq
    %v3354 = vshrl.u32 %v3353, 7
    %v3355 = vsub.s32 0, %v3354
    %v3356 = vrot.slane %v3213, %v3355
    %v3357 = vlaneseq
    %v3358 = vshrl.u32 %v3357, 7
    %v3359 = vsub.s32 0, %v3358
    %v3360 = vrot.slane %v3220, %v3359
    %v3361 = vlaneseq
    %v3362 = vshrl.u32 %v3361, 7
    %v3363 = vsub.s32 0, %v3362
    %v3364 = vrot.slane %v3221, %v3363
    %v3365 = vlaneseq
    %v3366 = vshrl.u32 %v3365, 7
    %v3367 = vsub.s32 0, %v3366
    %v3368 = vrot.slane %v3222, %v3367
    %v3373 = vlaneseq
    %v3374 = vshrl.u32 %v3373, 7
    %v3375 = vsub.s32 0, %v3374
    %v3376 = vrot.slane %v3238, %v3375
    %v3377 = vlaneseq
    %v3378 = vshrl.u32 %v3377, 7
    %v3379 = vsub.s32 0, %v3378
    %v3380 = vrot.slane %v3245, %v3379
    %v3381 = vlaneseq
    %v3382 = vshrl.u32 %v3381, 7
    %v3383 = vsub.s32 0, %v3382
    %v3384 = vrot.slane %v3246, %v3383
    %v3385 = vlaneseq
    %v3386 = vshrl.u32 %v3385, 7
    %v3387 = vsub.s32 0, %v3386
    %v3388 = vrot.slane %v3247, %v3387
    %v3393 = vlaneseq
    %v3394 = vshrl.u32 %v3393, 7
    %v3395 = vsub.s32 0, %v3394
    %v3396 = vrot.slane %v3263, %v3395
    %v3397 = vlaneseq
    %v3398 = vshrl.u32 %v3397, 7
    %v3399 = vsub.s32 0, %v3398
    %v3400 = vrot.slane %v3270, %v3399
    %v3401 = vlaneseq
    %v3402 = vshrl.u32 %v3401, 7
    %v3403 = vsub.s32 0, %v3402
    %v3404 = vrot.slane %v3271, %v3403
    %v3405 = vlaneseq
    %v3406 = vshrl.u32 %v3405, 7
    %v3407 = vsub.s32 0, %v3406
    %v3408 = vrot.slane %v3272, %v3407
    %vm3413 = vcmask 1040384
    %v3414 = vsel %vm3413, %v3084, %v3276
    %v3415 = vsel %vm3413, %v3091, %v3280
    %v3416 = vsel %vm3413, %v3092, %v3284
    %v3417 = vsel %vm3413, %v3093, %v3288
    %vm3418 = vcmask 1041408
    %v3419 = vsel %vm3418, %v3414, %v3296
    %v3420 = vsel %vm3418, %v3415, %v3300
    %v3421 = vsel %vm3418, %v3416, %v3304
    %v3422 = vsel %vm3418, %v3417, %v3308
    %vm3423 = vcmask 1042432
    %v3424 = vsel %vm3423, %v3419, %v3316
    %v3425 = vsel %vm3423, %v3420, %v3320
    %v3426 = vsel %vm3423, %v3421, %v3324
    %v3427 = vsel %vm3423, %v3422, %v3328
    %vm3428 = vcmask 1043456
    %v3429 = vsel %vm3428, %v3424, %v3336
    %v3430 = vsel %vm3428, %v3425, %v3340
    %v3431 = vsel %vm3428, %v3426, %v3344
    %v3432 = vsel %vm3428, %v3427, %v3348
    %vm3433 = vcmask 1044480
    %v3434 = vsel %vm3433, %v3429, %v3356
    %v3435 = vsel %vm3433, %v3430, %v3360
    %v3436 = vsel %vm3433, %v3431, %v3364
    %v3437 = vsel %vm3433, %v3432, %v3368
    %vm3438 = vcmask 1045504
    %v3439 = vsel %vm3438, %v3434, %v3376
    %v3440 = vsel %vm3438, %v3435, %v3380
    %v3441 = vsel %vm3438, %v3436, %v3384
    %v3442 = vsel %vm3438, %v3437, %v3388
    %vm3443 = vcmask 1046528
    %v3444 = vsel %vm3443, %v3439, %v3396
    %v3445 = vsel %vm3443, %v3440, %v3400
    %v3446 = vsel %vm3443, %v3441, %v3404
    %v3447 = vsel %vm3443, %v3442, %v3408
    %v3448 = vld [vmem:[%s5] sm:$0xff]
    %v3449 = vld [vmem:[%s5 + $0x8] sm:$0xff]
    %v3450 = vld [vmem:[%s5 + $0x10] sm:$0xff]
    %v3451 = vld [vmem:[%s5 + $0x18] sm:$0xff]
    %v3452 = vld [vmem:[%s5 + $0x20] sm:$0xff]
    %v3453 = vld [vmem:[%s5 + $0x28] sm:$0xff]
    %v3454 = vld [vmem:[%s5 + $0x30] sm:$0xff]
    %v3455 = vld [vmem:[%s5 + $0x38] sm:$0xff]
    %v3456 = vpack.c.bf16 %v3445, %v3444
    %v3457 = vpack.c.bf16 %v3447, %v3446
    %v3458 = vpack.c.bf16 %v3449, %v3448
    %v3459 = vpack.c.bf16 %v3451, %v3450
    %v3460 = vpack.c.bf16 %v3453, %v3452
    %v3461 = vpack.c.bf16 %v3455, %v3454
    %v3462 = vld [vmem:[%s6] sm:$0x1]
    %v3464 = vlaneseq
    %v3465 = vshrl.u32 %v3464, 7
    %v3466 = vsub.s32 0, %v3465
    %v3467 = vrot.slane %v3462, %v3466
    %v3470 = vsel %vm188, %v3456, 0
    %v3473 = vsel %vm188, %v3457, 0
    %3475 = vmatprep.subr.bf16.mxu0 0
    %3476 = vmatpush1.bf16.msra.mxu0 %v3458
    %3477 = vmatprep.subr.bf16.mxu0 0
    %3478 = vmatpush1.bf16.msra.mxu0 %v3459
    %3479 = vmatprep.subr.bf16.mxu0 0
    %3480 = vmatpush1.bf16.msra.mxu0 %v3460
    %3481 = vmatprep.subr.bf16.mxu0 0
    %3482 = vmatpush1.bf16.msra.mxu0 %v3461
    %3483 = vmatprep.subr.bf16.mxu0 0
    %3484 = vmatpush1.bf16.msra.mxu0 0
    %3485 = vmatprep.subr.bf16.mxu0 0
    %3486 = vmatpush1.bf16.msra.mxu0 0
    %3487 = vmatprep.subr.bf16.mxu0 0
    %3488 = vmatpush1.bf16.msra.mxu0 0
    %3489 = vmatprep.subr.bf16.mxu0 0
    %3490 = vmatpush1.bf16.msra.mxu0 0
    %3491 = vmatprep.subr.bf16.mxu0 0
    %3492 = vmatpush1.bf16.msra.mxu0 0
    %3493 = vmatprep.subr.bf16.mxu0 0
    %3494 = vmatpush1.bf16.msra.mxu0 0
    %3495 = vmatprep.subr.bf16.mxu0 0
    %3496 = vmatpush1.bf16.msra.mxu0 0
    %3497 = vmatprep.subr.bf16.mxu0 0
    %3498 = vmatpush1.bf16.msra.mxu0 0
    %3499 = vmatprep.subr.bf16.mxu0 0
    %3500 = vmatpush1.bf16.msra.mxu0 0
    %3501 = vmatprep.subr.bf16.mxu0 0
    %3502 = vmatpush1.bf16.msra.mxu0 0
    %3503 = vmatprep.subr.bf16.mxu0 0
    %3504 = vmatpush1.bf16.msra.mxu0 0
    %3505 = vmatprep.subr.bf16.mxu0 0
    %3506 = vmatpush1.bf16.msra.mxu0 0
    %3507 = vmatprep.mubr.bf16.mxu0 0
    %3508 = vmatmul.mubr.bf16.gmra.mrb[0].mxu0 %v3470
    %v3509 = vpop.f32.mrb[0].mxu0
    %v3510 = vadd.f32 %v3467, %v3509
    %v3511 = vpop.f32.mrb[0].mxu0
    %v3512 = vpop.f32.mrb[0].mxu0
    %v3513 = vadd.f32 %v3467, %v3512
    %v3514 = vpop.f32.mrb[0].mxu0
    %3515 = vmatprep.mubr.bf16.mxu0 0
    %3516 = vmatmul.mubr.bf16.gmra.mrb[0].mxu0 %v3473
    %v3517 = vpop.f32.mrb[0].mxu0
    %v3518 = vadd.f32 %v3467, %v3517
    %v3519 = vpop.f32.mrb[0].mxu0
    %v3520 = vpop.f32.mrb[0].mxu0
    %v3521 = vadd.f32 %v3467, %v3520
    %v3522 = vpop.f32.mrb[0].mxu0
    %3523 = vdwg.mxu0
    %v3524 = vsel %vm188, %v3444, 0.0
    %v3525 = vrot.slane %v3524, 4
    %v3526 = vadd.f32 %v3524, %v3525
    %v3527 = vrot.slane %v3526, 2
    %v3528 = vadd.f32 %v3526, %v3527
    %v3529 = vrot.slane %v3528, 1
    %v3530 = vadd.f32 %v3528, %v3529
    %v3531 = vsel %vm188, %v3445, 0.0
    %v3532 = vrot.slane %v3531, 4
    %v3533 = vadd.f32 %v3531, %v3532
    %v3534 = vrot.slane %v3533, 2
    %v3535 = vadd.f32 %v3533, %v3534
    %v3536 = vrot.slane %v3535, 1
    %v3537 = vadd.f32 %v3535, %v3536
    %v3538 = vsel %vm188, %v3446, 0.0
    %v3539 = vrot.slane %v3538, 4
    %v3540 = vadd.f32 %v3538, %v3539
    %v3541 = vrot.slane %v3540, 2
    %v3542 = vadd.f32 %v3540, %v3541
    %v3543 = vrot.slane %v3542, 1
    %v3544 = vadd.f32 %v3542, %v3543
    %v3545 = vsel %vm188, %v3447, 0.0
    %v3546 = vrot.slane %v3545, 4
    %v3547 = vadd.f32 %v3545, %v3546
    %v3548 = vrot.slane %v3547, 2
    %v3549 = vadd.f32 %v3547, %v3548
    %v3550 = vrot.slane %v3549, 1
    %v3551 = vadd.f32 %v3549, %v3550
    %v3552 = vrcp.pop 8.0
    %v3553 = vmul.f32 %v3530, %v3552
    %v3554 = vmul.f32 %v3537, %v3552
    %v3555 = vmul.f32 %v3544, %v3552
    %v3556 = vmul.f32 %v3551, %v3552
    %v3557 = vld [vmem:[%s7] sm:$0xff]
    %v3558 = vld [vmem:[%s7 + $0x8] sm:$0xff]
    %v3559 = vld [vmem:[%s7 + $0x10] sm:$0xff]
    %v3560 = vld [vmem:[%s7 + $0x18] sm:$0xff]
    %v3561 = vld [vmem:[%s7 + $0x20] sm:$0xff]
    %v3562 = vld [vmem:[%s7 + $0x28] sm:$0xff]
    %v3563 = vld [vmem:[%s7 + $0x30] sm:$0xff]
    %v3564 = vld [vmem:[%s7 + $0x38] sm:$0xff]
    %v3565 = vpack.c.bf16 %v3553, %v3553
    %v3566 = vpack.c.bf16 %v3554, %v3554
    %v3567 = vpack.c.bf16 %v3555, %v3555
    %v3568 = vpack.c.bf16 %v3556, %v3556
    %v3569 = vpack.c.bf16 %v3558, %v3557
    %v3570 = vpack.c.bf16 %v3560, %v3559
    %v3571 = vpack.c.bf16 %v3562, %v3561
    %v3572 = vpack.c.bf16 %v3564, %v3563
    %v3573 = vld [vmem:[%s8] sm:$0x1]
    %v3575 = vlaneseq
    %v3576 = vshrl.u32 %v3575, 7
    %v3577 = vsub.s32 0, %v3576
    %v3578 = vrot.slane %v3573, %v3577
    %v3584 = vunpack.c.l.b16 %v3565
    %v3585 = vunpack.c.l.b16 %v3566
    %v3586 = vunpack.c.l.b16 %v3567
    %v3587 = vunpack.c.l.b16 %v3568
    %v3588 = vsel %vm460, %v3585, %v3584
    %v3589 = vsel %vm463, %v3586, %v3588
    %v3590 = vsel %vm466, %v3587, %v3589
    %v3591 = vpack.c.b16 %v3590, %v3590
    %v3593 = vsel %vm188, %v3591, 0
    %3595 = vmatprep.subr.bf16.mxu0 0
    %3596 = vmatpush1.bf16.msra.mxu0 %v3569
    %3597 = vmatprep.subr.bf16.mxu0 0
    %3598 = vmatpush1.bf16.msra.mxu0 %v3570
    %3599 = vmatprep.subr.bf16.mxu0 0
    %3600 = vmatpush1.bf16.msra.mxu0 %v3571
    %3601 = vmatprep.subr.bf16.mxu0 0
    %3602 = vmatpush1.bf16.msra.mxu0 %v3572
    %3603 = vmatprep.subr.bf16.mxu0 0
    %3604 = vmatpush1.bf16.msra.mxu0 0
    %3605 = vmatprep.subr.bf16.mxu0 0
    %3606 = vmatpush1.bf16.msra.mxu0 0
    %3607 = vmatprep.subr.bf16.mxu0 0
    %3608 = vmatpush1.bf16.msra.mxu0 0
    %3609 = vmatprep.subr.bf16.mxu0 0
    %3610 = vmatpush1.bf16.msra.mxu0 0
    %3611 = vmatprep.subr.bf16.mxu0 0
    %3612 = vmatpush1.bf16.msra.mxu0 0
    %3613 = vmatprep.subr.bf16.mxu0 0
    %3614 = vmatpush1.bf16.msra.mxu0 0
    %3615 = vmatprep.subr.bf16.mxu0 0
    %3616 = vmatpush1.bf16.msra.mxu0 0
    %3617 = vmatprep.subr.bf16.mxu0 0
    %3618 = vmatpush1.bf16.msra.mxu0 0
    %3619 = vmatprep.subr.bf16.mxu0 0
    %3620 = vmatpush1.bf16.msra.mxu0 0
    %3621 = vmatprep.subr.bf16.mxu0 0
    %3622 = vmatpush1.bf16.msra.mxu0 0
    %3623 = vmatprep.subr.bf16.mxu0 0
    %3624 = vmatpush1.bf16.msra.mxu0 0
    %3625 = vmatprep.subr.bf16.mxu0 0
    %3626 = vmatpush1.bf16.msra.mxu0 0
    %3627 = vmatprep.mubr.bf16.mxu0 0
    %3628 = vmatmul.mubr.bf16.gmra.mrb[0].mxu0 %v3593
    %v3629 = vpop.f32.mrb[0].mxu0
    %v3630 = vadd.f32 %v3578, %v3629
    %v3631 = vpop.f32.mrb[0].mxu0
    %v3632 = vpop.f32.mrb[0].mxu0
    %v3633 = vpop.f32.mrb[0].mxu0
    %3634 = vdwg.mxu0
    %v3637 = vunpack.c.l.s4 1966171168
    %v3638 = vunpack.c.0.s8 %v3637
    %v3639 = vlaneseq
    %v3640 = vshrl.u32 %v3639, 7
    %v3641 = vsub.s32 %v3638, %v3640
    %v3642 = vrot.slane %v3630, %v3641
    %v3643 = vcombine.high %v3642, %v3642
    %v3645 = vunpack.c.l.s4 1966171168
    %v3646 = vunpack.c.0.s8 %v3645
    %v3647 = vlaneseq
    %v3648 = vshrl.u32 %v3647, 7
    %v3649 = vsub.s32 %v3646, %v3648
    %v3650 = vrot.slane %v3642, %v3649
    %v3652 = vunpack.c.l.s4 1966171168
    %v3653 = vunpack.c.0.s8 %v3652
    %v3654 = vlaneseq
    %v3655 = vshrl.u32 %v3654, 7
    %v3656 = vsub.s32 %v3653, %v3655
    %v3657 = vrot.slane %v3643, %v3656
    %v3658 = vcombine.high %v3650, %v3650
    %v3659 = vcombine.high %v3657, %v3657
    %v3660 = vlaneseq
    %v3661 = vshrl.u32 %v3660, 7
    %v3662 = vsub.s32 0, %v3661
    %v3663 = vrot.slane %v3650, %v3662
    %v3664 = vlaneseq
    %v3665 = vshrl.u32 %v3664, 7
    %v3666 = vsub.s32 0, %v3665
    %v3667 = vrot.slane %v3657, %v3666
    %v3668 = vlaneseq
    %v3669 = vshrl.u32 %v3668, 7
    %v3670 = vsub.s32 0, %v3669
    %v3671 = vrot.slane %v3658, %v3670
    %v3672 = vlaneseq
    %v3673 = vshrl.u32 %v3672, 7
    %v3674 = vsub.s32 0, %v3673
    %v3675 = vrot.slane %v3659, %v3674
    %v3680 = vadd.f32 %v3510, %v3663
    %v3681 = vadd.f32 %v3513, %v3667
    %v3682 = vadd.f32 %v3518, %v3671
    %v3683 = vadd.f32 %v3521, %v3675
    %v3684 = vtanh.pop %v3680
    %v3685 = vtanh.pop %v3681
    %v3686 = vtanh.pop %v3682
    %v3687 = vtanh.pop %v3683
    %v3688 = vld [vmem:[%s9] sm:$0x1]
    %v3690 = vlaneseq
    %v3691 = vshrl.u32 %v3690, 7
    %v3692 = vsub.s32 0, %v3691
    %v3693 = vrot.slane %v3688, %v3692
    %v3695 = vmul.f32 %v3684, %v3693
    %v3696 = vmul.f32 %v3685, %v3693
    %v3697 = vmul.f32 %v3686, %v3693
    %v3698 = vmul.f32 %v3687, %v3693
    %v3699 = vsel %vm188, %v3695, 0.0
    %3700 = vadd.xlane.f32.xlu0 %v3699
    %v3701 = vpop.xlane.xlu0 %3700
    %v3702 = vsel %vm188, %v3696, 0.0
    %3703 = vadd.xlane.f32.xlu0 %v3702
    %v3704 = vpop.xlane.xlu0 %3703
    %v3705 = vsel %vm188, %v3697, 0.0
    %3706 = vadd.xlane.f32.xlu0 %v3705
    %v3707 = vpop.xlane.xlu0 %3706
    %v3708 = vsel %vm188, %v3698, 0.0
    %3709 = vadd.xlane.f32.xlu0 %v3708
    %v3710 = vpop.xlane.xlu0 %3709
    %v3711 = vld [vmem:[#allocation2] sm:$0x1]
    %v3713 = vlaneseq
    %v3714 = vshrl.u32 %v3713, 7
    %v3715 = vsub.s32 0, %v3714
    %v3716 = vrot.slane %v3711, %v3715
    %3717 = vset.pattern.permute.xlu0 0
    %3718 = vperm.xlu0 %3717, %v3716
    %v3719 = vpop.permute.xlu0 %3718
    %v3721 = vadd.f32 %v3701, %v3719
    %v3722 = vadd.f32 %v3704, %v3719
    %v3723 = vadd.f32 %v3707, %v3719
    %v3724 = vadd.f32 %v3710, %v3719
    %v3729 = vlaneseq
    %v3730 = vshrl.u32 %v3729, 7
    %v3731 = vsub.s32 %v181, %v3730
    %v3732 = vrot.slane %v3721, %v3731
    %v3733 = vlaneseq
    %v3734 = vshrl.u32 %v3733, 7
    %v3735 = vsub.s32 %v181, %v3734
    %v3736 = vrot.slane %v3722, %v3735
    %v3737 = vlaneseq
    %v3738 = vshrl.u32 %v3737, 7
    %v3739 = vsub.s32 %v181, %v3738
    %v3740 = vrot.slane %v3723, %v3739
    %v3741 = vlaneseq
    %v3742 = vshrl.u32 %v3741, 7
    %v3743 = vsub.s32 %v181, %v3742
    %v3744 = vrot.slane %v3724, %v3743
    %v3745 = vsel %vm460, %v3736, %v3732
    %v3746 = vsel %vm463, %v3740, %v3745
    %v3747 = vsel %vm466, %v3744, %v3746
    %vm3749 = vcmask 60416
    %v3750 = vsel %vm3749, %v3747, -inf
    %3751 = vmax.xlane.f32.xlu0 %v3750
    %v3752 = vpop.xlane.xlu0 %3751
    %v3754 = vlaneseq
    %v3755 = vshrl.u32 %v3754, 7
    %v3756 = vsub.s32 0, %v3755
    %v3757 = vrot.slane %v3752, %v3756
    %v3758 = vlaneseq
    %v3759 = vshrl.u32 %v3758, 7
    %v3760 = vsub.s32 1, %v3759
    %v3761 = vrot.slane %v3752, %v3760
    %v3762 = vlaneseq
    %v3763 = vshrl.u32 %v3762, 7
    %v3764 = vsub.s32 2, %v3763
    %v3765 = vrot.slane %v3752, %v3764
    %v3766 = vlaneseq
    %v3767 = vshrl.u32 %v3766, 7
    %v3768 = vsub.s32 3, %v3767
    %v3769 = vrot.slane %v3752, %v3768
    %v3774 = vsub.f32 %v3721, %v3757
    %v3775 = vsub.f32 %v3722, %v3761
    %v3776 = vsub.f32 %v3723, %v3765
    %v3777 = vsub.f32 %v3724, %v3769
    %v3778 = vmul.f32 %v3774, 1.442695
    %v3779 = vpow.pop %v3778
    %v3780 = vmul.f32 %v3775, 1.442695
    %v3781 = vpow.pop %v3780
    %v3782 = vmul.f32 %v3776, 1.442695
    %v3783 = vpow.pop %v3782
    %v3784 = vmul.f32 %v3777, 1.442695
    %v3785 = vpow.pop %v3784
    %3790 = vset.pattern.permute.xlu0 0
    %3791 = vperm.xlu0 %3790, %v3779
    %v3792 = vpop.permute.xlu0 %3791
    %3793 = vset.pattern.permute.xlu0 0
    %3794 = vperm.xlu0 %3793, %v3781
    %v3795 = vpop.permute.xlu0 %3794
    %3796 = vset.pattern.permute.xlu0 0
    %3797 = vperm.xlu0 %3796, %v3783
    %v3798 = vpop.permute.xlu0 %3797
    %3799 = vset.pattern.permute.xlu0 0
    %3800 = vperm.xlu0 %3799, %v3785
    %v3801 = vpop.permute.xlu0 %3800
    %v3802 = vlaneseq
    %v3803 = vshrl.u32 %v3802, 7
    %v3804 = vsub.s32 %v181, %v3803
    %v3805 = vrot.slane %v3792, %v3804
    %v3806 = vlaneseq
    %v3807 = vshrl.u32 %v3806, 7
    %v3808 = vsub.s32 %v181, %v3807
    %v3809 = vrot.slane %v3795, %v3808
    %v3810 = vlaneseq
    %v3811 = vshrl.u32 %v3810, 7
    %v3812 = vsub.s32 %v181, %v3811
    %v3813 = vrot.slane %v3798, %v3812
    %v3814 = vlaneseq
    %v3815 = vshrl.u32 %v3814, 7
    %v3816 = vsub.s32 %v181, %v3815
    %v3817 = vrot.slane %v3801, %v3816
    %v3818 = vsel %vm460, %v3809, %v3805
    %v3819 = vsel %vm463, %v3813, %v3818
    %v3820 = vsel %vm466, %v3817, %v3819
    %v3822 = vsel %vm3749, %v3820, 0.0
    %3823 = vadd.xlane.f32.xlu0 %v3822
    %v3824 = vpop.xlane.xlu0 %3823
    %v3826 = vlaneseq
    %v3827 = vshrl.u32 %v3826, 7
    %v3828 = vsub.s32 0, %v3827
    %v3829 = vrot.slane %v3824, %v3828
    %v3830 = vlaneseq
    %v3831 = vshrl.u32 %v3830, 7
    %v3832 = vsub.s32 1, %v3831
    %v3833 = vrot.slane %v3824, %v3832
    %v3834 = vlaneseq
    %v3835 = vshrl.u32 %v3834, 7
    %v3836 = vsub.s32 2, %v3835
    %v3837 = vrot.slane %v3824, %v3836
    %v3838 = vlaneseq
    %v3839 = vshrl.u32 %v3838, 7
    %v3840 = vsub.s32 3, %v3839
    %v3841 = vrot.slane %v3824, %v3840
    %v3846 = vrcp.pop %v3829
    %v3847 = vmul.f32 %v3779, %v3846
    %v3848 = vrcp.pop %v3833
    %v3849 = vmul.f32 %v3781, %v3848
    %v3850 = vrcp.pop %v3837
    %v3851 = vmul.f32 %v3783, %v3850
    %v3852 = vrcp.pop %v3841
    %v3853 = vmul.f32 %v3785, %v3852
    %3855 = vset.pattern.permute.xlu0 0
    %3856 = vperm.xlu0 %3855, %v3847
    %v3857 = vpop.permute.xlu0 %3856
    %3860 = vset.pattern.permute.xlu0 0
    %3861 = vperm.xlu0 %3860, %v3849
    %v3862 = vpop.permute.xlu0 %3861
    %3865 = vset.pattern.permute.xlu0 0
    %3866 = vperm.xlu0 %3865, %v3851
    %v3867 = vpop.permute.xlu0 %3866
    %3870 = vset.pattern.permute.xlu0 0
    %3871 = vperm.xlu0 %3870, %v3853
    %v3872 = vpop.permute.xlu0 %3871
    %v3874 = vmul.f32 %v3857, %v3684
    %v3875 = vmul.f32 %v3862, %v3685
    %v3876 = vmul.f32 %v3867, %v3686
    %v3877 = vmul.f32 %v3872, %v3687
    %v3878 = vsel %vm188, %v3874, 0.0
    %v3879 = vrot.slane %v3878, 4
    %v3880 = vadd.f32 %v3878, %v3879
    %v3881 = vrot.slane %v3880, 2
    %v3882 = vadd.f32 %v3880, %v3881
    %v3883 = vrot.slane %v3882, 1
    %v3884 = vadd.f32 %v3882, %v3883
    %v3885 = vsel %vm188, %v3875, 0.0
    %v3886 = vrot.slane %v3885, 4
    %v3887 = vadd.f32 %v3885, %v3886
    %v3888 = vrot.slane %v3887, 2
    %v3889 = vadd.f32 %v3887, %v3888
    %v3890 = vrot.slane %v3889, 1
    %v3891 = vadd.f32 %v3889, %v3890
    %v3892 = vsel %vm188, %v3876, 0.0
    %v3893 = vrot.slane %v3892, 4
    %v3894 = vadd.f32 %v3892, %v3893
    %v3895 = vrot.slane %v3894, 2
    %v3896 = vadd.f32 %v3894, %v3895
    %v3897 = vrot.slane %v3896, 1
    %v3898 = vadd.f32 %v3896, %v3897
    %v3899 = vsel %vm188, %v3877, 0.0
    %v3900 = vrot.slane %v3899, 4
    %v3901 = vadd.f32 %v3899, %v3900
    %v3902 = vrot.slane %v3901, 2
    %v3903 = vadd.f32 %v3901, %v3902
    %v3904 = vrot.slane %v3903, 1
    %v3905 = vadd.f32 %v3903, %v3904
    %v3906 = vmul.f32 %v3884, %v3898
    %v3907 = vmul.f32 %v3891, %v3905
    %v3908 = vsub.f32 %v3884, %v3898
    %v3909 = vsub.f32 %v3891, %v3905
    %v3912 = vsel %vm460, %v3891, %v3884
    %v3916 = vsel %vm460, %v3907, %v3906
    %3917 = vrot.lane.b32.xlu0 %v3916, 64
    %v3918 = vpop.permute.xlu0 %3917
    %v3922 = vsel %vm460, %v3909, %v3908
    %v3926 = vsel %vm460, %v3905, %v3898
    %3927 = vrot.lane.b32.xlu0 %v3926, 64
    %v3928 = vpop.permute.xlu0 %3927
    %v3930 = vsel %vm188, %v3912, %v3918
    %v3931 = vsel %vm188, %v3922, %v3928
    %v3932 = vld [vmem:[%s17] sm:$0x7]
    %v3933 = vld [vmem:[%s18] sm:$0x7]
    %v3934 = vld [vmem:[%s11] sm:$0xff]
    %v3935 = vld [vmem:[%s11 + $0x8] sm:$0xff]
    %v3936 = vld [vmem:[%s11 + $0x10] sm:$0xff]
    %v3937 = vld [vmem:[%s11 + $0x18] sm:$0xff]
    %v3938 = vld [vmem:[%s11 + $0x20] sm:$0xff]
    %v3939 = vld [vmem:[%s11 + $0x28] sm:$0xff]
    %v3940 = vld [vmem:[%s11 + $0x30] sm:$0xff]
    %v3941 = vld [vmem:[%s11 + $0x38] sm:$0xff]
    %v3942 = vld [vmem:[%s11 + $0x40] sm:$0xff]
    %v3943 = vld [vmem:[%s11 + $0x48] sm:$0xff]
    %v3944 = vld [vmem:[%s11 + $0x50] sm:$0xff]
    %v3945 = vld [vmem:[%s11 + $0x58] sm:$0xff]
    %v3946 = vld [vmem:[%s11 + $0x60] sm:$0xff]
    %v3947 = vld [vmem:[%s11 + $0x68] sm:$0xff]
    %v3948 = vld [vmem:[%s11 + $0x70] sm:$0xff]
    %v3949 = vld [vmem:[%s11 + $0x78] sm:$0xff]
    %v3950 = vld [vmem:[%s11 + $0x80] sm:$0xff]
    %v3951 = vld [vmem:[%s11 + $0x88] sm:$0xff]
    %v3952 = vld [vmem:[%s11 + $0x90] sm:$0xff]
    %v3953 = vld [vmem:[%s11 + $0x98] sm:$0xff]
    %v3954 = vld [vmem:[%s11 + $0xa0] sm:$0xff]
    %v3955 = vld [vmem:[%s11 + $0xa8] sm:$0xff]
    %v3956 = vld [vmem:[%s11 + $0xb0] sm:$0xff]
    %v3957 = vld [vmem:[%s11 + $0xb8] sm:$0xff]
    %v3958 = vld [vmem:[%s11 + $0xc0] sm:$0xff]
    %v3959 = vld [vmem:[%s11 + $0xc8] sm:$0xff]
    %v3960 = vld [vmem:[%s11 + $0xd0] sm:$0xff]
    %v3961 = vld [vmem:[%s11 + $0xd8] sm:$0xff]
    %v3962 = vld [vmem:[%s11 + $0xe0] sm:$0xff]
    %v3963 = vld [vmem:[%s11 + $0xe8] sm:$0xff]
    %v3964 = vld [vmem:[%s11 + $0xf0] sm:$0xff]
    %v3965 = vld [vmem:[%s11 + $0xf8] sm:$0xff]
    %v3966 = vld [vmem:[%s11 + $0x100] sm:$0xff]
    %v3967 = vld [vmem:[%s11 + $0x108] sm:$0xff]
    %v3968 = vld [vmem:[%s11 + $0x110] sm:$0xff]
    %v3969 = vld [vmem:[%s11 + $0x118] sm:$0xff]
    %v3970 = vld [vmem:[%s11 + $0x120] sm:$0xff]
    %v3971 = vld [vmem:[%s11 + $0x128] sm:$0xff]
    %v3972 = vld [vmem:[%s11 + $0x130] sm:$0xff]
    %v3973 = vld [vmem:[%s11 + $0x138] sm:$0xff]
    %v3974 = vld [vmem:[%s11 + $0x140] sm:$0xff]
    %v3975 = vld [vmem:[%s11 + $0x148] sm:$0xff]
    %v3976 = vld [vmem:[%s11 + $0x150] sm:$0xff]
    %v3977 = vld [vmem:[%s11 + $0x158] sm:$0xff]
    %v3978 = vld [vmem:[%s11 + $0x160] sm:$0xff]
    %v3979 = vld [vmem:[%s11 + $0x168] sm:$0xff]
    %v3980 = vld [vmem:[%s11 + $0x170] sm:$0xff]
    %v3981 = vld [vmem:[%s11 + $0x178] sm:$0xff]
    %v3982 = vld [vmem:[%s11 + $0x180] sm:$0xff]
    %v3983 = vld [vmem:[%s11 + $0x188] sm:$0xff]
    %v3984 = vld [vmem:[%s11 + $0x190] sm:$0xff]
    %v3985 = vld [vmem:[%s11 + $0x198] sm:$0xff]
    %v3986 = vld [vmem:[%s11 + $0x1a0] sm:$0xff]
    %v3987 = vld [vmem:[%s11 + $0x1a8] sm:$0xff]
    %v3988 = vld [vmem:[%s11 + $0x1b0] sm:$0xff]
    %v3989 = vld [vmem:[%s11 + $0x1b8] sm:$0xff]
    %v3990 = vld [vmem:[%s11 + $0x1c0] sm:$0xff]
    %v3991 = vld [vmem:[%s11 + $0x1c8] sm:$0xff]
    %v3992 = vld [vmem:[%s11 + $0x1d0] sm:$0xff]
    %v3993 = vld [vmem:[%s11 + $0x1d8] sm:$0xff]
    %v3994 = vld [vmem:[%s11 + $0x1e0] sm:$0xff]
    %v3995 = vld [vmem:[%s11 + $0x1e8] sm:$0xff]
    %v3996 = vld [vmem:[%s11 + $0x1f0] sm:$0xff]
    %v3997 = vld [vmem:[%s11 + $0x1f8] sm:$0xff]
    %v3998 = vld [vmem:[%s11 + $0x200] sm:$0xff]
    %v3999 = vld [vmem:[%s11 + $0x208] sm:$0xff]
    %v4000 = vld [vmem:[%s11 + $0x210] sm:$0xff]
    %v4001 = vld [vmem:[%s11 + $0x218] sm:$0xff]
    %v4002 = vld [vmem:[%s11 + $0x220] sm:$0xff]
    %v4003 = vld [vmem:[%s11 + $0x228] sm:$0xff]
    %v4004 = vld [vmem:[%s11 + $0x230] sm:$0xff]
    %v4005 = vld [vmem:[%s11 + $0x238] sm:$0xff]
    %v4006 = vld [vmem:[%s11 + $0x240] sm:$0xff]
    %v4007 = vld [vmem:[%s11 + $0x248] sm:$0xff]
    %v4008 = vld [vmem:[%s11 + $0x250] sm:$0xff]
    %v4009 = vld [vmem:[%s11 + $0x258] sm:$0xff]
    %v4010 = vld [vmem:[%s11 + $0x260] sm:$0xff]
    %v4011 = vld [vmem:[%s11 + $0x268] sm:$0xff]
    %v4012 = vld [vmem:[%s11 + $0x270] sm:$0xff]
    %v4013 = vld [vmem:[%s11 + $0x278] sm:$0xff]
    %v4014 = vld [vmem:[%s11 + $0x280] sm:$0xff]
    %v4015 = vld [vmem:[%s11 + $0x288] sm:$0xff]
    %v4016 = vld [vmem:[%s11 + $0x290] sm:$0xff]
    %v4017 = vld [vmem:[%s11 + $0x298] sm:$0xff]
    %v4018 = vld [vmem:[%s11 + $0x2a0] sm:$0xff]
    %v4019 = vld [vmem:[%s11 + $0x2a8] sm:$0xff]
    %v4020 = vld [vmem:[%s11 + $0x2b0] sm:$0xff]
    %v4021 = vld [vmem:[%s11 + $0x2b8] sm:$0xff]
    %v4022 = vld [vmem:[%s11 + $0x2c0] sm:$0xff]
    %v4023 = vld [vmem:[%s11 + $0x2c8] sm:$0xff]
    %v4024 = vld [vmem:[%s11 + $0x2d0] sm:$0xff]
    %v4025 = vld [vmem:[%s11 + $0x2d8] sm:$0xff]
    %v4026 = vld [vmem:[%s11 + $0x2e0] sm:$0xff]
    %v4027 = vld [vmem:[%s11 + $0x2e8] sm:$0xff]
    %v4028 = vld [vmem:[%s11 + $0x2f0] sm:$0xff]
    %v4029 = vld [vmem:[%s11 + $0x2f8] sm:$0xff]
    %v4030 = vpack.c.bf16 %v3930, %v3930
    %v4031 = vpack.c.bf16 %v3931, %v3931
    %v4032 = vpack.c.bf16 %v3937, %v3934
    %v4033 = vpack.c.bf16 %v3938, %v3935
    %v4034 = vpack.c.bf16 %v3939, %v3936
    %v4035 = vpack.c.bf16 %v3943, %v3940
    %v4036 = vpack.c.bf16 %v3944, %v3941
    %v4037 = vpack.c.bf16 %v3945, %v3942
    %v4038 = vpack.c.bf16 %v3949, %v3946
    %v4039 = vpack.c.bf16 %v3950, %v3947
    %v4040 = vpack.c.bf16 %v3951, %v3948
    %v4041 = vpack.c.bf16 %v3955, %v3952
    %v4042 = vpack.c.bf16 %v3956, %v3953
    %v4043 = vpack.c.bf16 %v3957, %v3954
    %v4044 = vpack.c.bf16 %v3961, %v3958
    %v4045 = vpack.c.bf16 %v3962, %v3959
    %v4046 = vpack.c.bf16 %v3963, %v3960
    %v4047 = vpack.c.bf16 %v3967, %v3964
    %v4048 = vpack.c.bf16 %v3968, %v3965
    %v4049 = vpack.c.bf16 %v3969, %v3966
    %v4050 = vpack.c.bf16 %v3973, %v3970
    %v4051 = vpack.c.bf16 %v3974, %v3971
    %v4052 = vpack.c.bf16 %v3975, %v3972
    %v4053 = vpack.c.bf16 %v3979, %v3976
    %v4054 = vpack.c.bf16 %v3980, %v3977
    %v4055 = vpack.c.bf16 %v3981, %v3978
    %v4056 = vpack.c.bf16 %v3985, %v3982
    %v4057 = vpack.c.bf16 %v3986, %v3983
    %v4058 = vpack.c.bf16 %v3987, %v3984
    %v4059 = vpack.c.bf16 %v3991, %v3988
    %v4060 = vpack.c.bf16 %v3992, %v3989
    %v4061 = vpack.c.bf16 %v3993, %v3990
    %v4062 = vpack.c.bf16 %v3997, %v3994
    %v4063 = vpack.c.bf16 %v3998, %v3995
    %v4064 = vpack.c.bf16 %v3999, %v3996
    %v4065 = vpack.c.bf16 %v4003, %v4000
    %v4066 = vpack.c.bf16 %v4004, %v4001
    %v4067 = vpack.c.bf16 %v4005, %v4002
    %v4068 = vpack.c.bf16 %v4009, %v4006
    %v4069 = vpack.c.bf16 %v4010, %v4007
    %v4070 = vpack.c.bf16 %v4011, %v4008
    %v4071 = vpack.c.bf16 %v4015, %v4012
    %v4072 = vpack.c.bf16 %v4016, %v4013
    %v4073 = vpack.c.bf16 %v4017, %v4014
    %v4074 = vpack.c.bf16 %v4021, %v4018
    %v4075 = vpack.c.bf16 %v4022, %v4019
    %v4076 = vpack.c.bf16 %v4023, %v4020
    %v4077 = vpack.c.bf16 %v4027, %v4024
    %v4078 = vpack.c.bf16 %v4028, %v4025
    %v4079 = vpack.c.bf16 %v4029, %v4026
    %v4080 = vld [vmem:[%s12] sm:$0x7]
    %v4082 = vlaneseq
    %v4083 = vshrl.u32 %v4082, 7
    %v4084 = vsub.s32 0, %v4083
    %v4085 = vrot.slane %v4080, %v4084
    %v4086 = vlaneseq
    %v4087 = vshrl.u32 %v4086, 7
    %v4088 = vsub.s32 1, %v4087
    %v4089 = vrot.slane %v4080, %v4088
    %v4090 = vlaneseq
    %v4091 = vshrl.u32 %v4090, 7
    %v4092 = vsub.s32 2, %v4091
    %v4093 = vrot.slane %v4080, %v4092
    %4097 = vmatprep.subr.bf16.mxu0 %v4033
    %4098 = vmatpush1.bf16.msra.mxu0 %v4032
    %4099 = vmatprep.subr.bf16.mxu0 %v4036
    %4100 = vmatpush1.bf16.msra.mxu0 %v4035
    %4101 = vmatprep.subr.bf16.mxu0 %v4039
    %4102 = vmatpush1.bf16.msra.mxu0 %v4038
    %4103 = vmatprep.subr.bf16.mxu0 %v4042
    %4104 = vmatpush1.bf16.msra.mxu0 %v4041
    %4105 = vmatprep.subr.bf16.mxu0 %v4045
    %4106 = vmatpush1.bf16.msra.mxu0 %v4044
    %4107 = vmatprep.subr.bf16.mxu0 %v4048
    %4108 = vmatpush1.bf16.msra.mxu0 %v4047
    %4109 = vmatprep.subr.bf16.mxu0 %v4051
    %4110 = vmatpush1.bf16.msra.mxu0 %v4050
    %4111 = vmatprep.subr.bf16.mxu0 %v4054
    %4112 = vmatpush1.bf16.msra.mxu0 %v4053
    %4113 = vmatprep.subr.bf16.mxu0 %v4057
    %4114 = vmatpush1.bf16.msra.mxu0 %v4056
    %4115 = vmatprep.subr.bf16.mxu0 %v4060
    %4116 = vmatpush1.bf16.msra.mxu0 %v4059
    %4117 = vmatprep.subr.bf16.mxu0 %v4063
    %4118 = vmatpush1.bf16.msra.mxu0 %v4062
    %4119 = vmatprep.subr.bf16.mxu0 %v4066
    %4120 = vmatpush1.bf16.msra.mxu0 %v4065
    %4121 = vmatprep.subr.bf16.mxu0 %v4069
    %4122 = vmatpush1.bf16.msra.mxu0 %v4068
    %4123 = vmatprep.subr.bf16.mxu0 %v4072
    %4124 = vmatpush1.bf16.msra.mxu0 %v4071
    %4125 = vmatprep.subr.bf16.mxu0 %v4075
    %4126 = vmatpush1.bf16.msra.mxu0 %v4074
    %4127 = vmatprep.subr.bf16.mxu0 %v4078
    %4128 = vmatpush1.bf16.msra.mxu0 %v4077
    %4129 = vmatprep.mubr.bf16.mxu0 %v4031
    %4130 = vmatmul.mubr.bf16.gmra.mrb[0].mxu0 %v4030
    %v4131 = vpop.f32.mrb[0].mxu0
    %v4132 = vadd.f32 %v4085, %v4131
    %v4133 = vpop.f32.mrb[0].mxu0
    %v4134 = vadd.f32 %v4089, %v4133
    %v4135 = vpop.f32.mrb[0].mxu0
    %v4136 = vpop.f32.mrb[0].mxu0
    %4137 = vdwg.mxu0
    %4138 = vmatprep.subr.bf16.mxu0 0
    %4139 = vmatpush1.bf16.msra.mxu0 %v4034
    %4140 = vmatprep.subr.bf16.mxu0 0
    %4141 = vmatpush1.bf16.msra.mxu0 %v4037
    %4142 = vmatprep.subr.bf16.mxu0 0
    %4143 = vmatpush1.bf16.msra.mxu0 %v4040
    %4144 = vmatprep.subr.bf16.mxu0 0
    %4145 = vmatpush1.bf16.msra.mxu0 %v4043
    %4146 = vmatprep.subr.bf16.mxu0 0
    %4147 = vmatpush1.bf16.msra.mxu0 %v4046
    %4148 = vmatprep.subr.bf16.mxu0 0
    %4149 = vmatpush1.bf16.msra.mxu0 %v4049
    %4150 = vmatprep.subr.bf16.mxu0 0
    %4151 = vmatpush1.bf16.msra.mxu0 %v4052
    %4152 = vmatprep.subr.bf16.mxu0 0
    %4153 = vmatpush1.bf16.msra.mxu0 %v4055
    %4154 = vmatprep.subr.bf16.mxu0 0
    %4155 = vmatpush1.bf16.msra.mxu0 %v4058
    %4156 = vmatprep.subr.bf16.mxu0 0
    %4157 = vmatpush1.bf16.msra.mxu0 %v4061
    %4158 = vmatprep.subr.bf16.mxu0 0
    %4159 = vmatpush1.bf16.msra.mxu0 %v4064
    %4160 = vmatprep.subr.bf16.mxu0 0
    %4161 = vmatpush1.bf16.msra.mxu0 %v4067
    %4162 = vmatprep.subr.bf16.mxu0 0
    %4163 = vmatpush1.bf16.msra.mxu0 %v4070
    %4164 = vmatprep.subr.bf16.mxu0 0
    %4165 = vmatpush1.bf16.msra.mxu0 %v4073
    %4166 = vmatprep.subr.bf16.mxu0 0
    %4167 = vmatpush1.bf16.msra.mxu0 %v4076
    %4168 = vmatprep.subr.bf16.mxu0 0
    %4169 = vmatpush1.bf16.msra.mxu0 %v4079
    %4170 = vmatprep.mubr.bf16.mxu0 %v4031
    %4171 = vmatmul.mubr.bf16.gmra.mrb[0].mxu0 %v4030
    %v4172 = vpop.f32.mrb[0].mxu0
    %v4173 = vadd.f32 %v4093, %v4172
    %v4174 = vpop.f32.mrb[0].mxu0
    %v4175 = vpop.f32.mrb[0].mxu0
    %v4176 = vpop.f32.mrb[0].mxu0
    %4177 = vdwg.mxu0
    %v4178 = vtanh.pop %v4132
    %v4179 = vtanh.pop %v4134
    %v4180 = vtanh.pop %v4173
    %v4181 = vsel %vm3418, %v4178, 0.0
    %v4182 = vsel %vm3418, %v4179, 0.0
    %v4183 = vadd.f32 %v4181, %v4182
    %vm4184 = vcmask 353280
    %v4185 = vsel %vm4184, %v4180, 0.0
    %v4186 = vadd.f32 %v4183, %v4185
    %4187 = vadd.xlane.f32.xlu0 %v4186
    %v4188 = vpop.xlane.xlu0 %4187
    %v4189 = vrcp.pop 300.0
    %v4190 = vmul.f32 %v4188, %v4189
    %v4191 = vsub.f32 %v4178, %v4190
    %v4192 = vsub.f32 %v4179, %v4190
    %v4193 = vsub.f32 %v4180, %v4190
    %v4194 = vmul.f32 %v4191, %v4191
    %v4195 = vmul.f32 %v4192, %v4192
    %v4196 = vmul.f32 %v4193, %v4193
    %v4197 = vsel %vm3418, %v4194, 0.0
    %v4198 = vsel %vm3418, %v4195, 0.0
    %v4199 = vadd.f32 %v4197, %v4198
    %v4200 = vsel %vm4184, %v4196, 0.0
    %v4201 = vadd.f32 %v4199, %v4200
    %4202 = vadd.xlane.f32.xlu0 %v4201
    %v4203 = vpop.xlane.xlu0 %4202
    %v4204 = vmul.f32 %v4203, %v4189
    %v4205 = vadd.f32 %v4204, 1e-05
    %v4206 = vrsqrt.pop %v4205
    %v4207 = vmul.f32 %v4191, %v4206
    %v4208 = vmul.f32 %v4192, %v4206
    %v4209 = vmul.f32 %v4193, %v4206
    %v4211 = vlaneseq
    %v4212 = vshrl.u32 %v4211, 7
    %v4213 = vsub.s32 0, %v4212
    %v4214 = vrot.slane %v3932, %v4213
    %v4215 = vlaneseq
    %v4216 = vshrl.u32 %v4215, 7
    %v4217 = vsub.s32 1, %v4216
    %v4218 = vrot.slane %v3932, %v4217
    %v4219 = vlaneseq
    %v4220 = vshrl.u32 %v4219, 7
    %v4221 = vsub.s32 2, %v4220
    %v4222 = vrot.slane %v3932, %v4221
    %v4226 = vmul.f32 %v4207, %v4214
    %v4227 = vmul.f32 %v4208, %v4218
    %v4228 = vmul.f32 %v4209, %v4222
    %v4230 = vlaneseq
    %v4231 = vshrl.u32 %v4230, 7
    %v4232 = vsub.s32 0, %v4231
    %v4233 = vrot.slane %v3933, %v4232
    %v4234 = vlaneseq
    %v4235 = vshrl.u32 %v4234, 7
    %v4236 = vsub.s32 1, %v4235
    %v4237 = vrot.slane %v3933, %v4236
    %v4238 = vlaneseq
    %v4239 = vshrl.u32 %v4238, 7
    %v4240 = vsub.s32 2, %v4239
    %v4241 = vrot.slane %v3933, %v4240
    %v4245 = vadd.f32 %v4226, %v4233
    %v4246 = vadd.f32 %v4227, %v4237
    %v4247 = vadd.f32 %v4228, %v4241
    %v4248 = vld [vmem:[%s13] sm:$0xff]
    %v4249 = vld [vmem:[%s13 + $0x8] sm:$0xff]
    %v4250 = vld [vmem:[%s13 + $0x10] sm:$0xff]
    %v4251 = vld [vmem:[%s13 + $0x18] sm:$0xff]
    %v4252 = vld [vmem:[%s13 + $0x20] sm:$0xff]
    %v4253 = vld [vmem:[%s13 + $0x28] sm:$0xff]
    %v4254 = vld [vmem:[%s13 + $0x30] sm:$0xff]
    %v4255 = vld [vmem:[%s13 + $0x38] sm:$0xff]
    %v4256 = vld [vmem:[%s13 + $0x40] sm:$0xff]
    %v4257 = vld [vmem:[%s13 + $0x48] sm:$0xff]
    %v4258 = vld [vmem:[%s13 + $0x50] sm:$0xff]
    %v4259 = vld [vmem:[%s13 + $0x58] sm:$0xff]
    %v4260 = vld [vmem:[%s13 + $0x60] sm:$0xff]
    %v4261 = vld [vmem:[%s13 + $0x68] sm:$0xff]
    %v4262 = vld [vmem:[%s13 + $0x70] sm:$0xff]
    %v4263 = vld [vmem:[%s13 + $0x78] sm:$0xff]
    %v4264 = vld [vmem:[%s13 + $0x80] sm:$0xff]
    %v4265 = vld [vmem:[%s13 + $0x88] sm:$0xff]
    %v4266 = vld [vmem:[%s13 + $0x90] sm:$0xff]
    %v4267 = vld [vmem:[%s13 + $0x98] sm:$0xff]
    %v4268 = vld [vmem:[%s13 + $0xa0] sm:$0xff]
    %v4269 = vld [vmem:[%s13 + $0xa8] sm:$0xff]
    %v4270 = vld [vmem:[%s13 + $0xb0] sm:$0xff]
    %v4271 = vld [vmem:[%s13 + $0xb8] sm:$0xff]
    %v4272 = vld [vmem:[%s13 + $0xc0] sm:$0xff]
    %v4273 = vld [vmem:[%s13 + $0xc8] sm:$0xff]
    %v4274 = vld [vmem:[%s13 + $0xd0] sm:$0xff]
    %v4275 = vld [vmem:[%s13 + $0xd8] sm:$0xff]
    %v4276 = vld [vmem:[%s13 + $0xe0] sm:$0xff]
    %v4277 = vld [vmem:[%s13 + $0xe8] sm:$0xff]
    %v4278 = vld [vmem:[%s13 + $0xf0] sm:$0xff]
    %v4279 = vld [vmem:[%s13 + $0xf8] sm:$0xff]
    %v4280 = vld [vmem:[%s13 + $0x100] sm:$0xff]
    %v4281 = vld [vmem:[%s13 + $0x108] sm:$0xff]
    %v4282 = vld [vmem:[%s13 + $0x110] sm:$0xff]
    %v4283 = vld [vmem:[%s13 + $0x118] sm:$0xff]
    %v4284 = vld [vmem:[%s13 + $0x120] sm:$0xff]
    %v4285 = vld [vmem:[%s13 + $0x128] sm:$0xff]
    %v4286 = vld [vmem:[%s13 + $0x130] sm:$0xff]
    %v4287 = vld [vmem:[%s13 + $0x138] sm:$0xff]
    %v4288 = vld [vmem:[%s13 + $0x140] sm:$0xff]
    %v4289 = vld [vmem:[%s13 + $0x148] sm:$0xff]
    %v4290 = vld [vmem:[%s13 + $0x150] sm:$0xff]
    %v4291 = vld [vmem:[%s13 + $0x158] sm:$0xff]
    %v4292 = vld [vmem:[%s13 + $0x160] sm:$0xff]
    %v4293 = vld [vmem:[%s13 + $0x168] sm:$0xff]
    %v4294 = vld [vmem:[%s13 + $0x170] sm:$0xff]
    %v4295 = vld [vmem:[%s13 + $0x178] sm:$0xff]
    %v4296 = vld [vmem:[%s13 + $0x180] sm:$0xff]
    %v4297 = vld [vmem:[%s13 + $0x188] sm:$0xff]
    %v4298 = vld [vmem:[%s13 + $0x190] sm:$0xff]
    %v4299 = vld [vmem:[%s13 + $0x198] sm:$0xff]
    %v4300 = vld [vmem:[%s13 + $0x1a0] sm:$0xff]
    %v4301 = vld [vmem:[%s13 + $0x1a8] sm:$0xff]
    %v4302 = vld [vmem:[%s13 + $0x1b0] sm:$0xff]
    %v4303 = vld [vmem:[%s13 + $0x1b8] sm:$0xff]
    %v4304 = vld [vmem:[%s13 + $0x1c0] sm:$0xff]
    %v4305 = vld [vmem:[%s13 + $0x1c8] sm:$0xff]
    %v4306 = vld [vmem:[%s13 + $0x1d0] sm:$0xff]
    %v4307 = vld [vmem:[%s13 + $0x1d8] sm:$0xff]
    %v4308 = vld [vmem:[%s13 + $0x1e0] sm:$0xff]
    %v4309 = vld [vmem:[%s13 + $0x1e8] sm:$0xff]
    %v4310 = vld [vmem:[%s13 + $0x1f0] sm:$0xff]
    %v4311 = vld [vmem:[%s13 + $0x1f8] sm:$0xff]
    %v4312 = vld [vmem:[%s13 + $0x200] sm:$0xff]
    %v4313 = vld [vmem:[%s13 + $0x208] sm:$0xff]
    %v4314 = vld [vmem:[%s13 + $0x210] sm:$0xff]
    %v4315 = vld [vmem:[%s13 + $0x218] sm:$0xff]
    %v4316 = vld [vmem:[%s13 + $0x220] sm:$0xff]
    %v4317 = vld [vmem:[%s13 + $0x228] sm:$0xff]
    %v4318 = vld [vmem:[%s13 + $0x230] sm:$0xff]
    %v4319 = vld [vmem:[%s13 + $0x238] sm:$0xff]
    %v4320 = vld [vmem:[%s13 + $0x240] sm:$0xff]
    %v4321 = vld [vmem:[%s13 + $0x248] sm:$0xff]
    %v4322 = vld [vmem:[%s13 + $0x250] sm:$0xff]
    %v4323 = vld [vmem:[%s13 + $0x258] sm:$0xff]
    %v4324 = vld [vmem:[%s13 + $0x260] sm:$0xff]
    %v4325 = vld [vmem:[%s13 + $0x268] sm:$0xff]
    %v4326 = vld [vmem:[%s13 + $0x270] sm:$0xff]
    %v4327 = vld [vmem:[%s13 + $0x278] sm:$0xff]
    %v4328 = vld [vmem:[%s13 + $0x280] sm:$0xff]
    %v4329 = vld [vmem:[%s13 + $0x288] sm:$0xff]
    %v4330 = vld [vmem:[%s13 + $0x290] sm:$0xff]
    %v4331 = vld [vmem:[%s13 + $0x298] sm:$0xff]
    %v4332 = vld [vmem:[%s13 + $0x2a0] sm:$0xff]
    %v4333 = vld [vmem:[%s13 + $0x2a8] sm:$0xff]
    %v4334 = vld [vmem:[%s13 + $0x2b0] sm:$0xff]
    %v4335 = vld [vmem:[%s13 + $0x2b8] sm:$0xff]
    %v4336 = vld [vmem:[%s13 + $0x2c0] sm:$0xff]
    %v4337 = vld [vmem:[%s13 + $0x2c8] sm:$0xff]
    %v4338 = vld [vmem:[%s13 + $0x2d0] sm:$0xff]
    %v4339 = vld [vmem:[%s13 + $0x2d8] sm:$0xff]
    %v4340 = vld [vmem:[%s13 + $0x2e0] sm:$0xff]
    %v4341 = vld [vmem:[%s13 + $0x2e8] sm:$0xff]
    %v4342 = vld [vmem:[%s13 + $0x2f0] sm:$0xff]
    %v4343 = vld [vmem:[%s13 + $0x2f8] sm:$0xff]
    %v4344 = vld [vmem:[%s13 + $0x300] sm:$0xff]
    %v4345 = vld [vmem:[%s13 + $0x308] sm:$0xff]
    %v4346 = vld [vmem:[%s13 + $0x310] sm:$0xff]
    %v4347 = vld [vmem:[%s13 + $0x318] sm:$0xff]
    %v4348 = vld [vmem:[%s13 + $0x320] sm:$0xff]
    %v4349 = vld [vmem:[%s13 + $0x328] sm:$0xff]
    %v4350 = vld [vmem:[%s13 + $0x330] sm:$0xff]
    %v4351 = vld [vmem:[%s13 + $0x338] sm:$0xff]
    %v4352 = vld [vmem:[%s13 + $0x340] sm:$0xff]
    %v4353 = vld [vmem:[%s13 + $0x348] sm:$0xff]
    %v4354 = vld [vmem:[%s13 + $0x350] sm:$0xff]
    %v4355 = vld [vmem:[%s13 + $0x358] sm:$0xff]
    %v4356 = vld [vmem:[%s13 + $0x360] sm:$0xff]
    %v4357 = vld [vmem:[%s13 + $0x368] sm:$0xff]
    %v4358 = vld [vmem:[%s13 + $0x370] sm:$0xff]
    %v4359 = vld [vmem:[%s13 + $0x378] sm:$0xf]
    %v4360 = vld [vmem:[%s13 + $0x380] sm:$0xf]
    %v4361 = vld [vmem:[%s13 + $0x388] sm:$0xf]
    %v4362 = vpack.c.bf16 %v4245, %v4245
    %v4363 = vpack.c.bf16 %v4246, %v4246
    %v4364 = vpack.c.bf16 %v4247, %v4247
    %v4365 = vpack.c.bf16 %v4251, %v4248
    %v4366 = vpack.c.bf16 %v4252, %v4249
    %v4367 = vpack.c.bf16 %v4253, %v4250
    %v4368 = vpack.c.bf16 %v4257, %v4254
    %v4369 = vpack.c.bf16 %v4258, %v4255
    %v4370 = vpack.c.bf16 %v4259, %v4256
    %v4371 = vpack.c.bf16 %v4263, %v4260
    %v4372 = vpack.c.bf16 %v4264, %v4261
    %v4373 = vpack.c.bf16 %v4265, %v4262
    %v4374 = vpack.c.bf16 %v4269, %v4266
    %v4375 = vpack.c.bf16 %v4270, %v4267
    %v4376 = vpack.c.bf16 %v4271, %v4268
    %v4377 = vpack.c.bf16 %v4275, %v4272
    %v4378 = vpack.c.bf16 %v4276, %v4273
    %v4379 = vpack.c.bf16 %v4277, %v4274
    %v4380 = vpack.c.bf16 %v4281, %v4278
    %v4381 = vpack.c.bf16 %v4282, %v4279
    %v4382 = vpack.c.bf16 %v4283, %v4280
    %v4383 = vpack.c.bf16 %v4287, %v4284
    %v4384 = vpack.c.bf16 %v4288, %v4285
    %v4385 = vpack.c.bf16 %v4289, %v4286
    %v4386 = vpack.c.bf16 %v4293, %v4290
    %v4387 = vpack.c.bf16 %v4294, %v4291
    %v4388 = vpack.c.bf16 %v4295, %v4292
    %v4389 = vpack.c.bf16 %v4299, %v4296
    %v4390 = vpack.c.bf16 %v4300, %v4297
    %v4391 = vpack.c.bf16 %v4301, %v4298
    %v4392 = vpack.c.bf16 %v4305, %v4302
    %v4393 = vpack.c.bf16 %v4306, %v4303
    %v4394 = vpack.c.bf16 %v4307, %v4304
    %v4395 = vpack.c.bf16 %v4311, %v4308
    %v4396 = vpack.c.bf16 %v4312, %v4309
    %v4397 = vpack.c.bf16 %v4313, %v4310
    %v4398 = vpack.c.bf16 %v4317, %v4314
    %v4399 = vpack.c.bf16 %v4318, %v4315
    %v4400 = vpack.c.bf16 %v4319, %v4316
    %v4401 = vpack.c.bf16 %v4323, %v4320
    %v4402 = vpack.c.bf16 %v4324, %v4321
    %v4403 = vpack.c.bf16 %v4325, %v4322
    %v4404 = vpack.c.bf16 %v4329, %v4326
    %v4405 = vpack.c.bf16 %v4330, %v4327
    %v4406 = vpack.c.bf16 %v4331, %v4328
    %v4407 = vpack.c.bf16 %v4335, %v4332
    %v4408 = vpack.c.bf16 %v4336, %v4333
    %v4409 = vpack.c.bf16 %v4337, %v4334
    %v4410 = vpack.c.bf16 %v4341, %v4338
    %v4411 = vpack.c.bf16 %v4342, %v4339
    %v4412 = vpack.c.bf16 %v4343, %v4340
    %v4413 = vpack.c.bf16 %v4347, %v4344
    %v4414 = vpack.c.bf16 %v4348, %v4345
    %v4415 = vpack.c.bf16 %v4349, %v4346
    %v4416 = vpack.c.bf16 %v4353, %v4350
    %v4417 = vpack.c.bf16 %v4354, %v4351
    %v4418 = vpack.c.bf16 %v4355, %v4352
    %v4419 = vpack.c.bf16 %v4359, %v4356
    %v4420 = vpack.c.bf16 %v4360, %v4357
    %v4421 = vpack.c.bf16 %v4361, %v4358
    %v4422 = vld [vmem:[%s14] sm:$0x7]
    %v4424 = vlaneseq
    %v4425 = vshrl.u32 %v4424, 7
    %v4426 = vsub.s32 0, %v4425
    %v4427 = vrot.slane %v4422, %v4426
    %v4428 = vlaneseq
    %v4429 = vshrl.u32 %v4428, 7
    %v4430 = vsub.s32 1, %v4429
    %v4431 = vrot.slane %v4422, %v4430
    %v4432 = vlaneseq
    %v4433 = vshrl.u32 %v4432, 7
    %v4434 = vsub.s32 2, %v4433
    %v4435 = vrot.slane %v4422, %v4434
    %vm4439 = vcmask 359424
    %v4441 = vsel %vm4439, %v4364, 0
    %v4444 = vsel %vm3438, %v4419, 0
    %v4447 = vsel %vm3438, %v4420, 0
    %v4450 = vsel %vm3438, %v4421, 0
    %4452 = vmatprep.subr.bf16.mxu0 %v4366
    %4453 = vmatpush1.bf16.msra.mxu0 %v4365
    %4454 = vmatprep.subr.bf16.mxu0 %v4369
    %4455 = vmatpush1.bf16.msra.mxu0 %v4368
    %4456 = vmatprep.subr.bf16.mxu0 %v4372
    %4457 = vmatpush1.bf16.msra.mxu0 %v4371
    %4458 = vmatprep.subr.bf16.mxu0 %v4375
    %4459 = vmatpush1.bf16.msra.mxu0 %v4374
    %4460 = vmatprep.subr.bf16.mxu0 %v4378
    %4461 = vmatpush1.bf16.msra.mxu0 %v4377
    %4462 = vmatprep.subr.bf16.mxu0 %v4381
    %4463 = vmatpush1.bf16.msra.mxu0 %v4380
    %4464 = vmatprep.subr.bf16.mxu0 %v4384
    %4465 = vmatpush1.bf16.msra.mxu0 %v4383
    %4466 = vmatprep.subr.bf16.mxu0 %v4387
    %4467 = vmatpush1.bf16.msra.mxu0 %v4386
    %4468 = vmatprep.subr.bf16.mxu0 %v4390
    %4469 = vmatpush1.bf16.msra.mxu0 %v4389
    %4470 = vmatprep.subr.bf16.mxu0 %v4393
    %4471 = vmatpush1.bf16.msra.mxu0 %v4392
    %4472 = vmatprep.subr.bf16.mxu0 %v4396
    %4473 = vmatpush1.bf16.msra.mxu0 %v4395
    %4474 = vmatprep.subr.bf16.mxu0 %v4399
    %4475 = vmatpush1.bf16.msra.mxu0 %v4398
    %4476 = vmatprep.subr.bf16.mxu0 %v4402
    %4477 = vmatpush1.bf16.msra.mxu0 %v4401
    %4478 = vmatprep.subr.bf16.mxu0 %v4405
    %4479 = vmatpush1.bf16.msra.mxu0 %v4404
    %4480 = vmatprep.subr.bf16.mxu0 %v4408
    %4481 = vmatpush1.bf16.msra.mxu0 %v4407
    %4482 = vmatprep.subr.bf16.mxu0 %v4411
    %4483 = vmatpush1.bf16.msra.mxu0 %v4410
    %4484 = vmatprep.mubr.bf16.mxu0 %v4363
    %4485 = vmatmul.mubr.bf16.gmra.mrb[0].mxu0 %v4362
    %v4486 = vpop.f32.mrb[0].mxu0
    %v4487 = vadd.f32 %v4427, %v4486
    %v4488 = vpop.f32.mrb[0].mxu0
    %v4489 = vadd.f32 %v4431, %v4488
    %v4490 = vpop.f32.mrb[0].mxu0
    %v4491 = vpop.f32.mrb[0].mxu0
    %4492 = vdwg.mxu0
    %4493 = vmatprep.subr.bf16.mxu0 %v4414
    %4494 = vmatpush1.bf16.msra.mxu0 %v4413
    %4495 = vmatprep.subr.bf16.mxu0 %v4417
    %4496 = vmatpush1.bf16.msra.mxu0 %v4416
    %4497 = vmatprep.subr.bf16.mxu0 %v4447
    %4498 = vmatpush1.bf16.msra.mxu0 %v4444
    %4499 = vmatprep.subr.bf16.mxu0 0
    %4500 = vmatpush1.bf16.msra.mxu0 0
    %4501 = vmatprep.subr.bf16.mxu0 0
    %4502 = vmatpush1.bf16.msra.mxu0 0
    %4503 = vmatprep.subr.bf16.mxu0 0
    %4504 = vmatpush1.bf16.msra.mxu0 0
    %4505 = vmatprep.subr.bf16.mxu0 0
    %4506 = vmatpush1.bf16.msra.mxu0 0
    %4507 = vmatprep.subr.bf16.mxu0 0
    %4508 = vmatpush1.bf16.msra.mxu0 0
    %4509 = vmatprep.subr.bf16.mxu0 0
    %4510 = vmatpush1.bf16.msra.mxu0 0
    %4511 = vmatprep.subr.bf16.mxu0 0
    %4512 = vmatpush1.bf16.msra.mxu0 0
    %4513 = vmatprep.subr.bf16.mxu0 0
    %4514 = vmatpush1.bf16.msra.mxu0 0
    %4515 = vmatprep.subr.bf16.mxu0 0
    %4516 = vmatpush1.bf16.msra.mxu0 0
    %4517 = vmatprep.subr.bf16.mxu0 0
    %4518 = vmatpush1.bf16.msra.mxu0 0
    %4519 = vmatprep.subr.bf16.mxu0 0
    %4520 = vmatpush1.bf16.msra.mxu0 0
    %4521 = vmatprep.subr.bf16.mxu0 0
    %4522 = vmatpush1.bf16.msra.mxu0 0
    %4523 = vmatprep.subr.bf16.mxu0 0
    %4524 = vmatpush1.bf16.msra.mxu0 0
    %4525 = vmatprep.mubr.bf16.mxu0 0
    %4526 = vmatmul.mubr.bf16.gmra.mrb[0].mxu0 %v4441
    %v4527 = vpop.f32.mrb[0].mxu0
    %v4528 = vadd.f32 %v4487, %v4527
    %v4529 = vpop.f32.mrb[0].mxu0
    %v4530 = vadd.f32 %v4489, %v4529
    %v4531 = vpop.f32.mrb[0].mxu0
    %v4532 = vpop.f32.mrb[0].mxu0
    %4533 = vdwg.mxu0
    %4534 = vmatprep.subr.bf16.mxu0 0
    %4535 = vmatpush1.bf16.msra.mxu0 %v4367
    %4536 = vmatprep.subr.bf16.mxu0 0
    %4537 = vmatpush1.bf16.msra.mxu0 %v4370
    %4538 = vmatprep.subr.bf16.mxu0 0
    %4539 = vmatpush1.bf16.msra.mxu0 %v4373
    %4540 = vmatprep.subr.bf16.mxu0 0
    %4541 = vmatpush1.bf16.msra.mxu0 %v4376
    %4542 = vmatprep.subr.bf16.mxu0 0
    %4543 = vmatpush1.bf16.msra.mxu0 %v4379
    %4544 = vmatprep.subr.bf16.mxu0 0
    %4545 = vmatpush1.bf16.msra.mxu0 %v4382
    %4546 = vmatprep.subr.bf16.mxu0 0
    %4547 = vmatpush1.bf16.msra.mxu0 %v4385
    %4548 = vmatprep.subr.bf16.mxu0 0
    %4549 = vmatpush1.bf16.msra.mxu0 %v4388
    %4550 = vmatprep.subr.bf16.mxu0 0
    %4551 = vmatpush1.bf16.msra.mxu0 %v4391
    %4552 = vmatprep.subr.bf16.mxu0 0
    %4553 = vmatpush1.bf16.msra.mxu0 %v4394
    %4554 = vmatprep.subr.bf16.mxu0 0
    %4555 = vmatpush1.bf16.msra.mxu0 %v4397
    %4556 = vmatprep.subr.bf16.mxu0 0
    %4557 = vmatpush1.bf16.msra.mxu0 %v4400
    %4558 = vmatprep.subr.bf16.mxu0 0
    %4559 = vmatpush1.bf16.msra.mxu0 %v4403
    %4560 = vmatprep.subr.bf16.mxu0 0
    %4561 = vmatpush1.bf16.msra.mxu0 %v4406
    %4562 = vmatprep.subr.bf16.mxu0 0
    %4563 = vmatpush1.bf16.msra.mxu0 %v4409
    %4564 = vmatprep.subr.bf16.mxu0 0
    %4565 = vmatpush1.bf16.msra.mxu0 %v4412
    %4566 = vmatprep.mubr.bf16.mxu0 %v4363
    %4567 = vmatmul.mubr.bf16.gmra.mrb[0].mxu0 %v4362
    %v4568 = vpop.f32.mrb[0].mxu0
    %v4569 = vadd.f32 %v4435, %v4568
    %v4570 = vpop.f32.mrb[0].mxu0
    %v4571 = vpop.f32.mrb[0].mxu0
    %v4572 = vpop.f32.mrb[0].mxu0
    %4573 = vdwg.mxu0
    %4574 = vmatprep.subr.bf16.mxu0 0
    %4575 = vmatpush1.bf16.msra.mxu0 %v4415
    %4576 = vmatprep.subr.bf16.mxu0 0
    %4577 = vmatpush1.bf16.msra.mxu0 %v4418
    %4578 = vmatprep.subr.bf16.mxu0 0
    %4579 = vmatpush1.bf16.msra.mxu0 %v4450
    %4580 = vmatprep.subr.bf16.mxu0 0
    %4581 = vmatpush1.bf16.msra.mxu0 0
    %4582 = vmatprep.subr.bf16.mxu0 0
    %4583 = vmatpush1.bf16.msra.mxu0 0
    %4584 = vmatprep.subr.bf16.mxu0 0
    %4585 = vmatpush1.bf16.msra.mxu0 0
    %4586 = vmatprep.subr.bf16.mxu0 0
    %4587 = vmatpush1.bf16.msra.mxu0 0
    %4588 = vmatprep.subr.bf16.mxu0 0
    %4589 = vmatpush1.bf16.msra.mxu0 0
    %4590 = vmatprep.subr.bf16.mxu0 0
    %4591 = vmatpush1.bf16.msra.mxu0 0
    %4592 = vmatprep.subr.bf16.mxu0 0
    %4593 = vmatpush1.bf16.msra.mxu0 0
    %4594 = vmatprep.subr.bf16.mxu0 0
    %4595 = vmatpush1.bf16.msra.mxu0 0
    %4596 = vmatprep.subr.bf16.mxu0 0
    %4597 = vmatpush1.bf16.msra.mxu0 0
    %4598 = vmatprep.subr.bf16.mxu0 0
    %4599 = vmatpush1.bf16.msra.mxu0 0
    %4600 = vmatprep.subr.bf16.mxu0 0
    %4601 = vmatpush1.bf16.msra.mxu0 0
    %4602 = vmatprep.subr.bf16.mxu0 0
    %4603 = vmatpush1.bf16.msra.mxu0 0
    %4604 = vmatprep.subr.bf16.mxu0 0
    %4605 = vmatpush1.bf16.msra.mxu0 0
    %4606 = vmatprep.mubr.bf16.mxu0 0
    %4607 = vmatmul.mubr.bf16.gmra.mrb[0].mxu0 %v4441
    %v4608 = vpop.f32.mrb[0].mxu0
    %v4609 = vadd.f32 %v4569, %v4608
    %v4610 = vpop.f32.mrb[0].mxu0
    %v4611 = vpop.f32.mrb[0].mxu0
    %v4612 = vpop.f32.mrb[0].mxu0
    %4613 = vdwg.mxu0
    %v4614 = vtanh.pop %v4528
    %v4615 = vtanh.pop %v4530
    %v4616 = vtanh.pop %v4609
    %v4617 = vsel %vm3418, %v4614, 0.0
    %v4618 = vsel %vm3418, %v4615, 0.0
    %v4619 = vadd.f32 %v4617, %v4618
    %v4620 = vsel %vm4184, %v4616, 0.0
    %v4621 = vadd.f32 %v4619, %v4620
    %4622 = vadd.xlane.f32.xlu0 %v4621
    %v4623 = vpop.xlane.xlu0 %4622
    %v4624 = vmul.f32 %v4623, %v4189
    %v4625 = vsub.f32 %v4614, %v4624
    %v4626 = vsub.f32 %v4615, %v4624
    %v4627 = vsub.f32 %v4616, %v4624
    %v4628 = vmul.f32 %v4625, %v4625
    %v4629 = vmul.f32 %v4626, %v4626
    %v4630 = vmul.f32 %v4627, %v4627
    %v4631 = vsel %vm3418, %v4628, 0.0
    %v4632 = vsel %vm3418, %v4629, 0.0
    %v4633 = vadd.f32 %v4631, %v4632
    %v4634 = vsel %vm4184, %v4630, 0.0
    %v4635 = vadd.f32 %v4633, %v4634
    %4636 = vadd.xlane.f32.xlu0 %v4635
    %v4637 = vpop.xlane.xlu0 %4636
    %v4638 = vmul.f32 %v4637, %v4189
    %v4639 = vadd.f32 %v4638, 1e-05
    %v4640 = vrsqrt.pop %v4639
    %v4641 = vmul.f32 %v4625, %v4640
    %v4642 = vmul.f32 %v4626, %v4640
    %v4643 = vmul.f32 %v4627, %v4640
    %v4644 = vmul.f32 %v4641, %v4214
    %v4645 = vmul.f32 %v4642, %v4218
    %v4646 = vmul.f32 %v4643, %v4222
    %v4647 = vadd.f32 %v4644, %v4233
    %v4648 = vadd.f32 %v4645, %v4237
    %v4649 = vadd.f32 %v4646, %v4241
    %v4650 = vld [vmem:[%s15] sm:$0xff]
    %v4651 = vld [vmem:[%s15 + $0x8] sm:$0xff]
    %v4652 = vld [vmem:[%s15 + $0x10] sm:$0xff]
    %v4653 = vld [vmem:[%s15 + $0x18] sm:$0xff]
    %v4654 = vld [vmem:[%s15 + $0x20] sm:$0xff]
    %v4655 = vld [vmem:[%s15 + $0x28] sm:$0xff]
    %v4656 = vld [vmem:[%s15 + $0x30] sm:$0xff]
    %v4657 = vld [vmem:[%s15 + $0x38] sm:$0xff]
    %v4658 = vld [vmem:[%s15 + $0x40] sm:$0xff]
    %v4659 = vld [vmem:[%s15 + $0x48] sm:$0xff]
    %v4660 = vld [vmem:[%s15 + $0x50] sm:$0xff]
    %v4661 = vld [vmem:[%s15 + $0x58] sm:$0xff]
    %v4662 = vld [vmem:[%s15 + $0x60] sm:$0xff]
    %v4663 = vld [vmem:[%s15 + $0x68] sm:$0xff]
    %v4664 = vld [vmem:[%s15 + $0x70] sm:$0xff]
    %v4665 = vld [vmem:[%s15 + $0x78] sm:$0xff]
    %v4666 = vld [vmem:[%s15 + $0x80] sm:$0xff]
    %v4667 = vld [vmem:[%s15 + $0x88] sm:$0xff]
    %v4668 = vld [vmem:[%s15 + $0x90] sm:$0xff]
    %v4669 = vld [vmem:[%s15 + $0x98] sm:$0xff]
    %v4670 = vld [vmem:[%s15 + $0xa0] sm:$0xff]
    %v4671 = vld [vmem:[%s15 + $0xa8] sm:$0xff]
    %v4672 = vld [vmem:[%s15 + $0xb0] sm:$0xff]
    %v4673 = vld [vmem:[%s15 + $0xb8] sm:$0xff]
    %v4674 = vld [vmem:[%s15 + $0xc0] sm:$0xff]
    %v4675 = vld [vmem:[%s15 + $0xc8] sm:$0xff]
    %v4676 = vld [vmem:[%s15 + $0xd0] sm:$0xff]
    %v4677 = vld [vmem:[%s15 + $0xd8] sm:$0xff]
    %v4678 = vld [vmem:[%s15 + $0xe0] sm:$0xff]
    %v4679 = vld [vmem:[%s15 + $0xe8] sm:$0xff]
    %v4680 = vld [vmem:[%s15 + $0xf0] sm:$0xff]
    %v4681 = vld [vmem:[%s15 + $0xf8] sm:$0xff]
    %v4682 = vld [vmem:[%s15 + $0x100] sm:$0xff]
    %v4683 = vld [vmem:[%s15 + $0x108] sm:$0xff]
    %v4684 = vld [vmem:[%s15 + $0x110] sm:$0xff]
    %v4685 = vld [vmem:[%s15 + $0x118] sm:$0xff]
    %v4686 = vld [vmem:[%s15 + $0x120] sm:$0xff]
    %v4687 = vld [vmem:[%s15 + $0x128] sm:$0xf]
    %v4688 = vpack.c.bf16 %v4647, %v4647
    %v4689 = vpack.c.bf16 %v4648, %v4648
    %v4690 = vpack.c.bf16 %v4649, %v4649
    %v4691 = vpack.c.bf16 %v4651, %v4650
    %v4692 = vpack.c.bf16 %v4653, %v4652
    %v4693 = vpack.c.bf16 %v4655, %v4654
    %v4694 = vpack.c.bf16 %v4657, %v4656
    %v4695 = vpack.c.bf16 %v4659, %v4658
    %v4696 = vpack.c.bf16 %v4661, %v4660
    %v4697 = vpack.c.bf16 %v4663, %v4662
    %v4698 = vpack.c.bf16 %v4665, %v4664
    %v4699 = vpack.c.bf16 %v4667, %v4666
    %v4700 = vpack.c.bf16 %v4669, %v4668
    %v4701 = vpack.c.bf16 %v4671, %v4670
    %v4702 = vpack.c.bf16 %v4673, %v4672
    %v4703 = vpack.c.bf16 %v4675, %v4674
    %v4704 = vpack.c.bf16 %v4677, %v4676
    %v4705 = vpack.c.bf16 %v4679, %v4678
    %v4706 = vpack.c.bf16 %v4681, %v4680
    %v4707 = vpack.c.bf16 %v4683, %v4682
    %v4708 = vpack.c.bf16 %v4685, %v4684
    %v4709 = vpack.c.bf16 %v4687, %v4686
    %v4710 = vld [vmem:[%s16] sm:$0x1]
    %v4712 = vlaneseq
    %v4713 = vshrl.u32 %v4712, 7
    %v4714 = vsub.s32 0, %v4713
    %v4715 = vrot.slane %v4710, %v4714
    %v4718 = vsel %vm4439, %v4690, 0
    %v4721 = vsel %vm3438, %v4709, 0
    %4723 = vmatprep.subr.bf16.mxu0 0
    %4724 = vmatpush1.bf16.msra.mxu0 %v4691
    %4725 = vmatprep.subr.bf16.mxu0 0
    %4726 = vmatpush1.bf16.msra.mxu0 %v4692
    %4727 = vmatprep.subr.bf16.mxu0 0
    %4728 = vmatpush1.bf16.msra.mxu0 %v4693
    %4729 = vmatprep.subr.bf16.mxu0 0
    %4730 = vmatpush1.bf16.msra.mxu0 %v4694
    %4731 = vmatprep.subr.bf16.mxu0 0
    %4732 = vmatpush1.bf16.msra.mxu0 %v4695
    %4733 = vmatprep.subr.bf16.mxu0 0
    %4734 = vmatpush1.bf16.msra.mxu0 %v4696
    %4735 = vmatprep.subr.bf16.mxu0 0
    %4736 = vmatpush1.bf16.msra.mxu0 %v4697
    %4737 = vmatprep.subr.bf16.mxu0 0
    %4738 = vmatpush1.bf16.msra.mxu0 %v4698
    %4739 = vmatprep.subr.bf16.mxu0 0
    %4740 = vmatpush1.bf16.msra.mxu0 %v4699
    %4741 = vmatprep.subr.bf16.mxu0 0
    %4742 = vmatpush1.bf16.msra.mxu0 %v4700
    %4743 = vmatprep.subr.bf16.mxu0 0
    %4744 = vmatpush1.bf16.msra.mxu0 %v4701
    %4745 = vmatprep.subr.bf16.mxu0 0
    %4746 = vmatpush1.bf16.msra.mxu0 %v4702
    %4747 = vmatprep.subr.bf16.mxu0 0
    %4748 = vmatpush1.bf16.msra.mxu0 %v4703
    %4749 = vmatprep.subr.bf16.mxu0 0
    %4750 = vmatpush1.bf16.msra.mxu0 %v4704
    %4751 = vmatprep.subr.bf16.mxu0 0
    %4752 = vmatpush1.bf16.msra.mxu0 %v4705
    %4753 = vmatprep.subr.bf16.mxu0 0
    %4754 = vmatpush1.bf16.msra.mxu0 %v4706
    %4755 = vmatprep.mubr.bf16.mxu0 %v4689
    %4756 = vmatmul.mubr.bf16.gmra.mrb[0].mxu0 %v4688
    %v4757 = vpop.f32.mrb[0].mxu0
    %v4758 = vadd.f32 %v4715, %v4757
    %v4759 = vpop.f32.mrb[0].mxu0
    %v4760 = vpop.f32.mrb[0].mxu0
    %v4761 = vpop.f32.mrb[0].mxu0
    %4762 = vdwg.mxu0
    %4763 = vmatprep.subr.bf16.mxu0 0
    %4764 = vmatpush1.bf16.msra.mxu0 %v4707
    %4765 = vmatprep.subr.bf16.mxu0 0
    %4766 = vmatpush1.bf16.msra.mxu0 %v4708
    %4767 = vmatprep.subr.bf16.mxu0 0
    %4768 = vmatpush1.bf16.msra.mxu0 %v4721
    %4769 = vmatprep.subr.bf16.mxu0 0
    %4770 = vmatpush1.bf16.msra.mxu0 0
    %4771 = vmatprep.subr.bf16.mxu0 0
    %4772 = vmatpush1.bf16.msra.mxu0 0
    %4773 = vmatprep.subr.bf16.mxu0 0
    %4774 = vmatpush1.bf16.msra.mxu0 0
    %4775 = vmatprep.subr.bf16.mxu0 0
    %4776 = vmatpush1.bf16.msra.mxu0 0
    %4777 = vmatprep.subr.bf16.mxu0 0
    %4778 = vmatpush1.bf16.msra.mxu0 0
    %4779 = vmatprep.subr.bf16.mxu0 0
    %4780 = vmatpush1.bf16.msra.mxu0 0
    %4781 = vmatprep.subr.bf16.mxu0 0
    %4782 = vmatpush1.bf16.msra.mxu0 0
    %4783 = vmatprep.subr.bf16.mxu0 0
    %4784 = vmatpush1.bf16.msra.mxu0 0
    %4785 = vmatprep.subr.bf16.mxu0 0
    %4786 = vmatpush1.bf16.msra.mxu0 0
    %4787 = vmatprep.subr.bf16.mxu0 0
    %4788 = vmatpush1.bf16.msra.mxu0 0
    %4789 = vmatprep.subr.bf16.mxu0 0
    %4790 = vmatpush1.bf16.msra.mxu0 0
    %4791 = vmatprep.subr.bf16.mxu0 0
    %4792 = vmatpush1.bf16.msra.mxu0 0
    %4793 = vmatprep.subr.bf16.mxu0 0
    %4794 = vmatpush1.bf16.msra.mxu0 0
    %4795 = vmatprep.mubr.bf16.mxu0 0
    %4796 = vmatmul.mubr.bf16.gmra.mrb[0].mxu0 %v4718
    %v4797 = vpop.f32.mrb[0].mxu0
    %v4798 = vadd.f32 %v4758, %v4797
    %v4799 = vpop.f32.mrb[0].mxu0
    %v4800 = vpop.f32.mrb[0].mxu0
    %v4801 = vpop.f32.mrb[0].mxu0
    %4802 = vdwg.mxu0
    %vm4803 = vcmask 17408
    %4804 = vst.msk [vmem:[#allocation3] sm:$0x3] %vm4803, %v4798
    // Predicated region
    $region78: #{inner_attention_forward.1} parent=1 // pred_check
      _
    $region79: #{inner_attention_forward.1} parent=1 // pred_check_branch
      %4806 = sbr.rel (0) target = $region81
    $region80: #{inner_attention_forward.1} parent=1 // pred_region
      %s4808 = ssub.s32 32, 32
      %4809 = vsyncadd [#allocation4], %s4808
      %s4811 = sshll.u32 [#allocation3], 4
      %s4812 = int_to_ptr.vmem [resolvable:$true] %s4811
      %4814 = dma.vmem_to_hbm [thread:$0]  %s4812, 32, %s19, [#allocation4]
    $region81: #{inner_attention_forward.1} parent=1 // pred_fallthru
      _
    // Predicated region
    $region82: #{inner_attention_forward.1} parent=1 // pred_check
      _
    $region83: #{inner_attention_forward.1} parent=1 // pred_check_branch
      %4816 = sbr.rel (0) target = $region85
    $region84: #{inner_attention_forward.1} parent=1 // pred_region
      %4817 = dma.done [#allocation4], 32
    $region85: #{inner_attention_forward.1} parent=1 // pred_fallthru
      _
    %4818 = vsyncpa [#allocation4], 1

</llo_original>
